<compile_context>
chip_gen: v7x
topology: tpu7x:2x2x1
jax: 0.10.0
libtpu: 0.0.40
codegen_flags: <defaults>
</compile_context>

<pallas_src>
import functools
import math

import jax
import jax.numpy as jnp
from jax import lax
from jax.experimental import pallas as pl
from jax.experimental.pallas import tpu as pltpu

D_MODEL = 256          # sam_hidden_dim default
N_HEAD = 8
HEAD_DIM = D_MODEL // N_HEAD
D_FF = 4 * D_MODEL
SEQ = 3
HEAD_PAD = 128         # lane-dense class-head width (true number of classes is 2)
LN_EPS = 1e-5
_SCALE = 1.0 / math.sqrt(HEAD_DIM)


def _layer_norm(x, gamma, beta):
    mu = jnp.mean(x, axis=-1, keepdims=True)
    xc = x - mu
    var = jnp.mean(xc * xc, axis=-1, keepdims=True)
    return xc * lax.rsqrt(var + LN_EPS) * gamma + beta


# --------------------------------------------------------------------------------------
# Kernel: one grid step == one tile of `tb` batch rows.
# z_ref holds [obj_ptr_zero tile ; obj_ptr_two tile] stacked -> (2*tb, D).
# --------------------------------------------------------------------------------------
def cme_kernel(z_ref, tok_ref, s0_ref, v0h_ref, selhd_ref,
               ws_ref, cs_ref, wv_ref, bv_ref,
               wo_ref, bo_ref, g1_ref, bn1_ref,
               w1_ref, bf1_ref, w2_ref, bf2_ref,
               g2_ref, bn2_ref, wh_ref, bh_ref,
               out_ref, *, tb: int, approx_recip: bool):
    z = z_ref[...]                                              # (2*tb, D), stream dtype

    # ---- fused value + q0-folded score matmuls for both object-pointer rows --------
    v_all = jnp.dot(z.astype(wv_ref.dtype), wv_ref[...],
                    preferred_element_type=jnp.float32) + bv_ref[...]       # (2tb, D)
    s_all = jnp.dot(z.astype(ws_ref.dtype), ws_ref[...],
                    preferred_element_type=jnp.float32) + cs_ref[...]       # (2tb, H)

    s1, s2 = s_all[:tb], s_all[tb:]                             # (tb, H) each
    v1, v2 = v_all[:tb], v_all[tb:]                             # (tb, D) each
    s0 = s0_ref[...]                                            # (1, H) constant row

    # ---- softmax over the 3 keys (f32 VPU; exp + reciprocal on the EUP) ------------
    m = jnp.maximum(jnp.maximum(s1, s2), s0)
    e0 = jnp.exp(s0 - m)
    e1 = jnp.exp(s1 - m)
    e2 = jnp.exp(s2 - m)
    inv = pl.reciprocal(e0 + e1 + e2, approx=approx_recip)
    p0, p1, p2 = e0 * inv, e1 * inv, e2 * inv                   # (tb, H)

    # ---- weighted value combine: broadcast head probs to their 32 lanes ------------
    # p0 term is fully folded into V0_head = sel_hd * v_tok (no elementwise multiply).
    sel_hd = selhd_ref[...]                                     # (H, D) 0/1 selector
    ctx = (jnp.dot(p0, v0h_ref[...], preferred_element_type=jnp.float32)
           + jnp.dot(p1, sel_hd, preferred_element_type=jnp.float32) * v1
           + jnp.dot(p2, sel_hd, preferred_element_type=jnp.float32) * v2)  # (tb, D)

    # ---- output projection + post-norm (decision-token row only) -------------------
    attn = jnp.dot(ctx.astype(wo_ref.dtype), wo_ref[...],
                   preferred_element_type=jnp.float32) + bo_ref[...]
    h1 = _layer_norm(tok_ref[...] + attn, g1_ref[...], bn1_ref[...])        # (tb, D)

    # ---- feed-forward ---------------------------------------------------------------
    ff = jnp.dot(h1.astype(w1_ref.dtype), w1_ref[...],
                 preferred_element_type=jnp.float32) + bf1_ref[...]
    ff = jnp.maximum(ff, 0.0)
    ff = jnp.dot(ff.astype(w2_ref.dtype), w2_ref[...],
                 preferred_element_type=jnp.float32) + bf2_ref[...]
    h2 = _layer_norm(h1 + ff, g2_ref[...], bn2_ref[...])

    # ---- lane-dense decision class head (true logits live in lanes [:2]) -----------
    logits = jnp.dot(h2.astype(wh_ref.dtype), wh_ref[...],
                     preferred_element_type=jnp.float32) + bh_ref[...]      # (tb, 128)
    out_ref[...] = logits.astype(out_ref.dtype)


# --------------------------------------------------------------------------------------
# Parameters
# --------------------------------------------------------------------------------------
MXU_WEIGHTS = ("wkv", "wo", "w1", "w2", "wh")


def init_params(key):
    ks = jax.random.split(key, 16)

    def w(k, shape, fan_in):
        return jax.random.normal(k, shape, jnp.float32) / math.sqrt(fan_in)

    def b(k, n):
        return 0.01 * jax.random.normal(k, (1, n), jnp.float32)

    return {
        "decision_token": 0.02 * jax.random.normal(ks[0], (1, D_MODEL), jnp.float32),
        "wq": w(ks[1], (D_MODEL, D_MODEL), D_MODEL),
        "bq": b(ks[2], D_MODEL),
        "wkv": w(ks[3], (D_MODEL, 2 * D_MODEL), D_MODEL),
        "bkv": b(ks[4], 2 * D_MODEL),
        "wo": w(ks[5], (D_MODEL, D_MODEL), D_MODEL),
        "bo": b(ks[6], D_MODEL),
        "g1": jnp.ones((1, D_MODEL), jnp.float32),
        "bn1": jnp.zeros((1, D_MODEL), jnp.float32),
        "w1": w(ks[7], (D_MODEL, D_FF), D_MODEL),
        "bf1": b(ks[8], D_FF),
        "w2": w(ks[9], (D_FF, D_MODEL), D_FF),
        "bf2": b(ks[10], D_MODEL),
        "g2": jnp.ones((1, D_MODEL), jnp.float32),
        "bn2": jnp.zeros((1, D_MODEL), jnp.float32),
        "wh": w(ks[11], (D_MODEL, 2), D_MODEL),
        "bh": b(ks[12], 2),
    }


def cast_matmul_weights(params, dtype=jnp.bfloat16):
    """Cast the large matmul weights to the MXU dtype; biases / LN stay f32."""
    out = dict(params)
    for name in MXU_WEIGHTS:
        out[name] = params[name].astype(dtype)
    return out


# --------------------------------------------------------------------------------------
# Wrapper
# --------------------------------------------------------------------------------------
def _round_up(x, m):
    return (x + m - 1) // m * m


def _choose_tile(batch, block_b):
    """Batch tile: multiple of 16 (bf16 sublane packing), capped at block_b, sized to
    minimize padding, and keeping >=2 grid steps for large batches (v7x: 2 TCs)."""
    n_tiles = max(1, -(-batch // block_b))
    if batch > 16 and n_tiles < 2:
        n_tiles = 2
    tb = _round_up(-(-batch // n_tiles), 16)
    return tb, n_tiles * tb


def _precompute_constants(params, mxu_dtype):
    """Per-call-invariant constants, hoisted out of the sequential grid loop."""
    f32 = jnp.float32
    hp = lax.Precision.HIGHEST

    tok = params["decision_token"].astype(f32)                              # (1, D)
    wq, bq = params["wq"].astype(f32), params["bq"].astype(f32)
    wkv, bkv = params["wkv"].astype(f32), params["bkv"].astype(f32)

    q0 = jnp.dot(tok, wq, precision=hp) + bq                                # (1, D)
    tok_kv = jnp.dot(tok, wkv, precision=hp) + bkv                          # (1, 2D)
    k_tok, v_tok = tok_kv[:, :D_MODEL], tok_kv[:, D_MODEL:]

    head_of_lane = jnp.arange(D_MODEL, dtype=jnp.int32) // HEAD_DIM
    sel_dh = (head_of_lane[:, None] ==
              jnp.arange(N_HEAD, dtype=jnp.int32)[None, :]).astype(f32)     # (D, H)
    sel_hd = sel_dh.T                                                       # (H, D)

    wk, bk = wkv[:, :D_MODEL], bkv[:, :D_MODEL]
    w_s = jnp.dot(_SCALE * (wk * q0), sel_dh, precision=hp)                 # (D, H)
    c_s = jnp.dot(_SCALE * (bk * q0), sel_dh, precision=hp)                 # (1, H)
    s0 = jnp.dot(_SCALE * (k_tok * q0), sel_dh, precision=hp)               # (1, H)
    v0_head = sel_hd * v_tok                                                # (H, D)

    wh, bh = params["wh"], params["bh"].astype(f32)
    wh_pad = jnp.zeros((D_MODEL, HEAD_PAD), wh.dtype).at[:, :2].set(wh)
    bh_pad = jnp.zeros((1, HEAD_PAD), f32).at[:, :2].set(bh)

    return {
        "tok": tok, "s0": s0, "v0h": v0_head, "sel_hd": sel_hd,
        "ws": w_s.astype(mxu_dtype), "cs": c_s,
        "wv": params["wkv"][:, D_MODEL:],                                   # MXU dtype
        "bv": params["bkv"][:, D_MODEL:].astype(f32),
        "wo": params["wo"], "bo": params["bo"].astype(f32),
        "g1": params["g1"], "bn1": params["bn1"],
        "w1": params["w1"], "bf1": params["bf1"].astype(f32),
        "w2": params["w2"], "bf2": params["bf2"].astype(f32),
        "g2": params["g2"], "bn2": params["bn2"],
        "wh": wh_pad, "bh": bh_pad,
    }


_CONST_ORDER = ("tok", "s0", "v0h", "sel_hd", "ws", "cs", "wv", "bv",
                "wo", "bo", "g1", "bn1", "w1", "bf1", "w2", "bf2",
                "g2", "bn2", "wh", "bh")


def conditional_memory_encoder(obj_ptr_zero, obj_ptr_two, params, *,
                               block_b=512, approx_softmax=True):
    """ConditionalMemoryEncoder forward; returns (B, 2) class logits."""
    B = obj_ptr_zero.shape[0]
    tb, b_pad = _choose_tile(B, block_b)
    n_tiles = b_pad // tb

    mxu_dt = params["wkv"].dtype
    # Stream the pointer tiles in bf16 only when the matmul weights are bf16
    # (numerically identical to the in-kernel cast); otherwise keep f32.
    stream_dt = jnp.bfloat16 if mxu_dt == jnp.bfloat16 else jnp.float32

    # Stack [z0 tile ; z2 tile] per batch tile -> one fused K/V-style matmul per tile.
    def prep(z):
        z = z.astype(stream_dt)
        if b_pad != B:
            z = jnp.pad(z, ((0, b_pad - B), (0, 0)))
        return z.reshape(n_tiles, tb, D_MODEL)

    z_cat = jnp.concatenate([prep(obj_ptr_zero), prep(obj_ptr_two)], axis=1)
    z_cat = z_cat.reshape(n_tiles * 2 * tb, D_MODEL)

    consts = _precompute_constants(params, mxu_dt)
    const_vals = [consts[name] for name in _CONST_ORDER]

    in_specs = [pl.BlockSpec((2 * tb, D_MODEL), lambda b: (b, 0))]           # streamed
    in_specs += [pl.BlockSpec(v.shape, lambda b: (0, 0)) for v in const_vals]  # resident

    weight_bytes = sum(int(v.size) * v.dtype.itemsize for v in const_vals)
    cost = pl.CostEstimate(
        flops=int(2 * b_pad * D_MODEL
                  * (2 * D_MODEL + 2 * N_HEAD + D_MODEL + 2 * D_FF + HEAD_PAD)),
        transcendentals=int(3 * N_HEAD * b_pad),
        bytes_accessed=int(z_cat.size * z_cat.dtype.itemsize
                           + b_pad * HEAD_PAD * 4 + weight_bytes),
    )

    out = pl.pallas_call(
        functools.partial(cme_kernel, tb=tb, approx_recip=approx_softmax),
        out_shape=jax.ShapeDtypeStruct((b_pad, HEAD_PAD), jnp.float32),
        grid=(n_tiles,),
        in_specs=in_specs,
        out_specs=pl.BlockSpec((tb, HEAD_PAD), lambda b: (b, 0)),
        compiler_params=pltpu.CompilerParams(
            dimension_semantics=("parallel",)),                  # 2-TC sharding on v7x
        cost_estimate=cost,
    )(z_cat, *const_vals)

    return out[:B, :2]


# --------------------------------------------------------------------------------------
# Pure-JAX reference (matmul inputs cast to each weight's dtype, so f32 params give the
# PyTorch-faithful forward and bf16-cast params give a precision-matched model).
# --------------------------------------------------------------------------------------
def reference(obj_ptr_zero, obj_ptr_two, p):
    hp = lax.Precision.HIGHEST

    def mm(a, wt):
        return jnp.dot(a.astype(wt.dtype), wt,
                       preferred_element_type=jnp.float32, precision=hp)

    B = obj_ptr_zero.shape[0]
    tok = jnp.broadcast_to(p["decision_token"].astype(jnp.float32), (B, D_MODEL))
    x = jnp.stack([tok,
                   obj_ptr_zero.astype(jnp.float32),
                   obj_ptr_two.astype(jnp.float32)], axis=1)     # (B, SEQ, D)
    xf = x.reshape(B * SEQ, D_MODEL)

    q = mm(xf, p["wq"]) + p["bq"]
    kv = mm(xf, p["wkv"]) + p["bkv"]
    k, v = kv[:, :D_MODEL], kv[:, D_MODEL:]
    q = q.reshape(B, SEQ, N_HEAD, HEAD_DIM)
    k = k.reshape(B, SEQ, N_HEAD, HEAD_DIM)
    v = v.reshape(B, SEQ, N_HEAD, HEAD_DIM)
    s = jnp.einsum("bihd,bjhd->bhij", q, k,
                   preferred_element_type=jnp.float32, precision=hp) * _SCALE
    a = jax.nn.softmax(s, axis=-1)
    ctx = jnp.einsum("bhij,bjhd->bihd", a, v,
                     preferred_element_type=jnp.float32, precision=hp)
    ctx = ctx.reshape(B * SEQ, D_MODEL)
    attn = mm(ctx, p["wo"]) + p["bo"]
    h1 = _layer_norm(xf + attn, p["g1"], p["bn1"])
    ff = jnp.maximum(mm(h1, p["w1"]) + p["bf1"], 0.0)
    ff = mm(ff, p["w2"]) + p["bf2"]
    h2 = _layer_norm(h1 + ff, p["g2"], p["bn2"]).reshape(B, SEQ, D_MODEL)
    return mm(h2[:, 0, :], p["wh"]) + p["bh"]


if __name__ == "__main__":
    key = jax.random.PRNGKey(0)
    kp, k0, k2 = jax.random.split(key, 3)
    params = init_params(kp)                      # f32 master weights
    mxu_params = cast_matmul_weights(params)      # bf16 copies of the big matmul weights

    B = 8
    obj_ptr_zero = jax.random.normal(k0, (B, D_MODEL), jnp.float32)
    obj_ptr_two = jax.random.normal(k2, (B, D_MODEL), jnp.float32)

    # --- precision-matched check (exact softmax, bf16 weights in both paths) ---------
    out_exact = jax.block_until_ready(
        conditional_memory_encoder(obj_ptr_zero, obj_ptr_two, mxu_params,
                                   approx_softmax=False))
    ref_match = jax.block_until_ready(reference(obj_ptr_zero, obj_ptr_two, mxu_params))
    assert out_exact.shape == (B, 2), out_exact.shape
    tight = float(jnp.max(jnp.abs(out_exact - ref_match)))
    assert tight < 2e-2, f"precision-matched mismatch: {tight}"

    # --- multi-tile / padded-batch check (exercises grid > 1 and row padding) --------
    B2 = 40
    z0b = jax.random.normal(jax.random.PRNGKey(3), (B2, D_MODEL), jnp.float32)
    z2b = jax.random.normal(jax.random.PRNGKey(4), (B2, D_MODEL), jnp.float32)
    out_big = jax.block_until_ready(
        conditional_memory_encoder(z0b, z2b, mxu_params, block_b=32,
                                   approx_softmax=False))
    ref_big = jax.block_until_ready(reference(z0b, z2b, mxu_params))
    assert out_big.shape == (B2, 2), out_big.shape
    tile_err = float(jnp.max(jnp.abs(out_big - ref_big)))
    assert tile_err < 2e-2, f"multi-tile mismatch: {tile_err}"

    # --- production config (bf16 MXU + approx EUP reciprocal) vs f32 reference -------
    out = jax.block_until_ready(
        conditional_memory_encoder(obj_ptr_zero, obj_ptr_two, mxu_params))
    ref_f32 = jax.block_until_ready(reference(obj_ptr_zero, obj_ptr_two, params))
    assert out.shape == (B, 2), out.shape
    loose = float(jnp.max(jnp.abs(out - ref_f32)))
    assert loose < 6e-2, f"mismatch vs f32 reference: {loose}"

    print("KERNEL_OK")
</pallas_src>

<mosaic_0001>
module attributes {stable_mosaic.version = 11 : i64} {
  func.func @cme_kernel(%arg0: i32, %arg1: memref<32x256xbf16, #tpu.memory_space<vmem>>, %arg2: memref<1x256xf32, #tpu.memory_space<vmem>>, %arg3: memref<1x8xf32, #tpu.memory_space<vmem>>, %arg4: memref<8x256xf32, #tpu.memory_space<vmem>>, %arg5: memref<8x256xf32, #tpu.memory_space<vmem>>, %arg6: memref<256x8xbf16, #tpu.memory_space<vmem>>, %arg7: memref<1x8xf32, #tpu.memory_space<vmem>>, %arg8: memref<256x256xbf16, #tpu.memory_space<vmem>>, %arg9: memref<1x256xf32, #tpu.memory_space<vmem>>, %arg10: memref<256x256xbf16, #tpu.memory_space<vmem>>, %arg11: memref<1x256xf32, #tpu.memory_space<vmem>>, %arg12: memref<1x256xf32, #tpu.memory_space<vmem>>, %arg13: memref<1x256xf32, #tpu.memory_space<vmem>>, %arg14: memref<256x1024xbf16, #tpu.memory_space<vmem>>, %arg15: memref<1x1024xf32, #tpu.memory_space<vmem>>, %arg16: memref<1024x256xbf16, #tpu.memory_space<vmem>>, %arg17: memref<1x256xf32, #tpu.memory_space<vmem>>, %arg18: memref<1x256xf32, #tpu.memory_space<vmem>>, %arg19: memref<1x256xf32, #tpu.memory_space<vmem>>, %arg20: memref<256x128xbf16, #tpu.memory_space<vmem>>, %arg21: memref<1x128xf32, #tpu.memory_space<vmem>>, %arg22: memref<16x128xf32, #tpu.memory_space<vmem>>) attributes {dimension_semantics = [#tpu.dimension_semantics<parallel>], iteration_bounds = array<i64: 1>, scalar_prefetch = 0 : i64, scratch_operands = 0 : i64, tpu.core_type = #tpu.core_type<tc>, window_params = [{transform_indices = @transform_0, window_bounds = array<i64: 32, 256>}, {pipeline_mode = #tpu.pipeline_mode<synchronous>, transform_indices = @transform_1, window_bounds = array<i64: 1, 256>}, {pipeline_mode = #tpu.pipeline_mode<synchronous>, transform_indices = @transform_2, window_bounds = array<i64: 1, 8>}, {pipeline_mode = #tpu.pipeline_mode<synchronous>, transform_indices = @transform_3, window_bounds = array<i64: 8, 256>}, {pipeline_mode = #tpu.pipeline_mode<synchronous>, transform_indices = @transform_4, window_bounds = array<i64: 8, 256>}, {pipeline_mode = #tpu.pipeline_mode<synchronous>, transform_indices = @transform_5, window_bounds = array<i64: 256, 8>}, {pipeline_mode = #tpu.pipeline_mode<synchronous>, transform_indices = @transform_6, window_bounds = array<i64: 1, 8>}, {pipeline_mode = #tpu.pipeline_mode<synchronous>, transform_indices = @transform_7, window_bounds = array<i64: 256, 256>}, {pipeline_mode = #tpu.pipeline_mode<synchronous>, transform_indices = @transform_8, window_bounds = array<i64: 1, 256>}, {pipeline_mode = #tpu.pipeline_mode<synchronous>, transform_indices = @transform_9, window_bounds = array<i64: 256, 256>}, {pipeline_mode = #tpu.pipeline_mode<synchronous>, transform_indices = @transform_10, window_bounds = array<i64: 1, 256>}, {pipeline_mode = #tpu.pipeline_mode<synchronous>, transform_indices = @transform_11, window_bounds = array<i64: 1, 256>}, {pipeline_mode = #tpu.pipeline_mode<synchronous>, transform_indices = @transform_12, window_bounds = array<i64: 1, 256>}, {pipeline_mode = #tpu.pipeline_mode<synchronous>, transform_indices = @transform_13, window_bounds = array<i64: 256, 1024>}, {pipeline_mode = #tpu.pipeline_mode<synchronous>, transform_indices = @transform_14, window_bounds = array<i64: 1, 1024>}, {pipeline_mode = #tpu.pipeline_mode<synchronous>, transform_indices = @transform_15, window_bounds = array<i64: 1024, 256>}, {pipeline_mode = #tpu.pipeline_mode<synchronous>, transform_indices = @transform_16, window_bounds = array<i64: 1, 256>}, {pipeline_mode = #tpu.pipeline_mode<synchronous>, transform_indices = @transform_17, window_bounds = array<i64: 1, 256>}, {pipeline_mode = #tpu.pipeline_mode<synchronous>, transform_indices = @transform_18, window_bounds = array<i64: 1, 256>}, {pipeline_mode = #tpu.pipeline_mode<synchronous>, transform_indices = @transform_19, window_bounds = array<i64: 256, 128>}, {pipeline_mode = #tpu.pipeline_mode<synchronous>, transform_indices = @transform_20, window_bounds = array<i64: 1, 128>}, {transform_indices = @transform_21, window_bounds = array<i64: 16, 128>}]} {
    %c0 = arith.constant 0 : index
    %c0_0 = arith.constant 0 : index
    %0 = vector.load %arg1[%c0, %c0_0] : memref<32x256xbf16, #tpu.memory_space<vmem>>, vector<32x256xbf16>
    %c0_1 = arith.constant 0 : index
    %c0_2 = arith.constant 0 : index
    %1 = vector.load %arg8[%c0_1, %c0_2] : memref<256x256xbf16, #tpu.memory_space<vmem>>, vector<256x256xbf16>
    %cst = arith.constant dense<0.000000e+00> : vector<32x256xf32>
    %2 = tpu.matmul %0, %1, %cst {dimension_numbers = #tpu.dot_dimension_numbers<[1], [0], [0], [1], [0, 0, 1, 1], [], []>} : vector<32x256xbf16>, vector<256x256xbf16>, vector<32x256xf32> -> vector<32x256xf32>
    %c0_3 = arith.constant 0 : index
    %c0_4 = arith.constant 0 : index
    %3 = vector.load %arg9[%c0_3, %c0_4] : memref<1x256xf32, #tpu.memory_space<vmem>>, vector<1x256xf32>
    %4 = vector.broadcast %3 : vector<1x256xf32> to vector<32x256xf32>
    %5 = arith.addf %2, %4 : vector<32x256xf32>
    %c0_5 = arith.constant 0 : index
    %c0_6 = arith.constant 0 : index
    %6 = vector.load %arg6[%c0_5, %c0_6] : memref<256x8xbf16, #tpu.memory_space<vmem>>, vector<256x8xbf16>
    %cst_7 = arith.constant dense<0.000000e+00> : vector<32x8xf32>
    %7 = tpu.matmul %0, %6, %cst_7 {dimension_numbers = #tpu.dot_dimension_numbers<[1], [0], [0], [1], [0, 0, 1, 1], [], []>} : vector<32x256xbf16>, vector<256x8xbf16>, vector<32x8xf32> -> vector<32x8xf32>
    %c0_8 = arith.constant 0 : index
    %c0_9 = arith.constant 0 : index
    %8 = vector.load %arg7[%c0_8, %c0_9] : memref<1x8xf32, #tpu.memory_space<vmem>>, vector<1x8xf32>
    %9 = vector.broadcast %8 : vector<1x8xf32> to vector<32x8xf32>
    %10 = arith.addf %7, %9 : vector<32x8xf32>
    %11 = vector.extract_strided_slice %10 {offsets = [0, 0], sizes = [16, 8], strides = [1, 1]} : vector<32x8xf32> to vector<16x8xf32>
    %12 = vector.extract_strided_slice %10 {offsets = [16, 0], sizes = [16, 8], strides = [1, 1]} : vector<32x8xf32> to vector<16x8xf32>
    %13 = vector.extract_strided_slice %5 {offsets = [0, 0], sizes = [16, 256], strides = [1, 1]} : vector<32x256xf32> to vector<16x256xf32>
    %14 = vector.extract_strided_slice %5 {offsets = [16, 0], sizes = [16, 256], strides = [1, 1]} : vector<32x256xf32> to vector<16x256xf32>
    %c0_10 = arith.constant 0 : index
    %c0_11 = arith.constant 0 : index
    %15 = vector.load %arg3[%c0_10, %c0_11] : memref<1x8xf32, #tpu.memory_space<vmem>>, vector<1x8xf32>
    %16 = arith.maximumf %11, %12 : vector<16x8xf32>
    %17 = vector.broadcast %15 : vector<1x8xf32> to vector<16x8xf32>
    %18 = arith.maximumf %16, %17 : vector<16x8xf32>
    %19 = vector.broadcast %15 : vector<1x8xf32> to vector<16x8xf32>
    %20 = arith.subf %19, %18 : vector<16x8xf32>
    %21 = math.exp %20 : vector<16x8xf32>
    %22 = arith.subf %11, %18 : vector<16x8xf32>
    %23 = math.exp %22 : vector<16x8xf32>
    %24 = arith.subf %12, %18 : vector<16x8xf32>
    %25 = math.exp %24 : vector<16x8xf32>
    %26 = arith.addf %21, %23 : vector<16x8xf32>
    %27 = arith.addf %26, %25 : vector<16x8xf32>
    %28 = tpu.reciprocal %27 : vector<16x8xf32> -> vector<16x8xf32>
    %29 = arith.mulf %21, %28 : vector<16x8xf32>
    %30 = arith.mulf %23, %28 : vector<16x8xf32>
    %31 = arith.mulf %25, %28 : vector<16x8xf32>
    %c0_12 = arith.constant 0 : index
    %c0_13 = arith.constant 0 : index
    %32 = vector.load %arg5[%c0_12, %c0_13] : memref<8x256xf32, #tpu.memory_space<vmem>>, vector<8x256xf32>
    %c0_14 = arith.constant 0 : index
    %c0_15 = arith.constant 0 : index
    %33 = vector.load %arg4[%c0_14, %c0_15] : memref<8x256xf32, #tpu.memory_space<vmem>>, vector<8x256xf32>
    %cst_16 = arith.constant dense<0.000000e+00> : vector<16x256xf32>
    %34 = tpu.matmul %29, %33, %cst_16 {dimension_numbers = #tpu.dot_dimension_numbers<[1], [0], [0], [1], [0, 0, 1, 1], [], []>} : vector<16x8xf32>, vector<8x256xf32>, vector<16x256xf32> -> vector<16x256xf32>
    %cst_17 = arith.constant dense<0.000000e+00> : vector<16x256xf32>
    %35 = tpu.matmul %30, %32, %cst_17 {dimension_numbers = #tpu.dot_dimension_numbers<[1], [0], [0], [1], [0, 0, 1, 1], [], []>} : vector<16x8xf32>, vector<8x256xf32>, vector<16x256xf32> -> vector<16x256xf32>
    %36 = arith.mulf %35, %13 : vector<16x256xf32>
    %37 = arith.addf %34, %36 : vector<16x256xf32>
    %cst_18 = arith.constant dense<0.000000e+00> : vector<16x256xf32>
    %38 = tpu.matmul %31, %32, %cst_18 {dimension_numbers = #tpu.dot_dimension_numbers<[1], [0], [0], [1], [0, 0, 1, 1], [], []>} : vector<16x8xf32>, vector<8x256xf32>, vector<16x256xf32> -> vector<16x256xf32>
    %39 = arith.mulf %38, %14 : vector<16x256xf32>
    %40 = arith.addf %37, %39 : vector<16x256xf32>
    %41 = arith.truncf %40 : vector<16x256xf32> to vector<16x256xbf16>
    %c0_19 = arith.constant 0 : index
    %c0_20 = arith.constant 0 : index
    %42 = vector.load %arg10[%c0_19, %c0_20] : memref<256x256xbf16, #tpu.memory_space<vmem>>, vector<256x256xbf16>
    %cst_21 = arith.constant dense<0.000000e+00> : vector<16x256xf32>
    %43 = tpu.matmul %41, %42, %cst_21 {dimension_numbers = #tpu.dot_dimension_numbers<[1], [0], [0], [1], [0, 0, 1, 1], [], []>} : vector<16x256xbf16>, vector<256x256xbf16>, vector<16x256xf32> -> vector<16x256xf32>
    %c0_22 = arith.constant 0 : index
    %c0_23 = arith.constant 0 : index
    %44 = vector.load %arg11[%c0_22, %c0_23] : memref<1x256xf32, #tpu.memory_space<vmem>>, vector<1x256xf32>
    %45 = vector.broadcast %44 : vector<1x256xf32> to vector<16x256xf32>
    %46 = arith.addf %43, %45 : vector<16x256xf32>
    %c0_24 = arith.constant 0 : index
    %c0_25 = arith.constant 0 : index
    %47 = vector.load %arg2[%c0_24, %c0_25] : memref<1x256xf32, #tpu.memory_space<vmem>>, vector<1x256xf32>
    %48 = vector.broadcast %47 : vector<1x256xf32> to vector<16x256xf32>
    %49 = arith.addf %48, %46 : vector<16x256xf32>
    %c0_26 = arith.constant 0 : index
    %c0_27 = arith.constant 0 : index
    %50 = vector.load %arg12[%c0_26, %c0_27] : memref<1x256xf32, #tpu.memory_space<vmem>>, vector<1x256xf32>
    %c0_28 = arith.constant 0 : index
    %c0_29 = arith.constant 0 : index
    %51 = vector.load %arg13[%c0_28, %c0_29] : memref<1x256xf32, #tpu.memory_space<vmem>>, vector<1x256xf32>
    %cst_30 = arith.constant dense<0.000000e+00> : vector<16xf32>
    %52 = vector.multi_reduction <add>, %49, %cst_30 [1] : vector<16x256xf32> to vector<16xf32>
    %53 = vector.shape_cast %52 : vector<16xf32> to vector<16x1xf32>
    %cst_31 = arith.constant 2.560000e+02 : f32
    %54 = vector.broadcast %cst_31 : f32 to vector<16x1xf32>
    %55 = arith.divf %53, %54 : vector<16x1xf32>
    %56 = vector.broadcast %55 : vector<16x1xf32> to vector<16x256xf32>
    %57 = arith.subf %49, %56 : vector<16x256xf32>
    %58 = arith.mulf %57, %57 : vector<16x256xf32>
    %cst_32 = arith.constant dense<0.000000e+00> : vector<16xf32>
    %59 = vector.multi_reduction <add>, %58, %cst_32 [1] : vector<16x256xf32> to vector<16xf32>
    %60 = vector.shape_cast %59 : vector<16xf32> to vector<16x1xf32>
    %cst_33 = arith.constant 2.560000e+02 : f32
    %61 = vector.broadcast %cst_33 : f32 to vector<16x1xf32>
    %62 = arith.divf %60, %61 : vector<16x1xf32>
    %cst_34 = arith.constant 9.99999974E-6 : f32
    %63 = vector.broadcast %cst_34 : f32 to vector<16x1xf32>
    %64 = arith.addf %62, %63 : vector<16x1xf32>
    %65 = math.rsqrt %64 : vector<16x1xf32>
    %66 = vector.broadcast %65 : vector<16x1xf32> to vector<16x256xf32>
    %67 = arith.mulf %57, %66 : vector<16x256xf32>
    %68 = vector.broadcast %50 : vector<1x256xf32> to vector<16x256xf32>
    %69 = arith.mulf %67, %68 : vector<16x256xf32>
    %70 = vector.broadcast %51 : vector<1x256xf32> to vector<16x256xf32>
    %71 = arith.addf %69, %70 : vector<16x256xf32>
    %72 = arith.truncf %71 : vector<16x256xf32> to vector<16x256xbf16>
    %c0_35 = arith.constant 0 : index
    %c0_36 = arith.constant 0 : index
    %73 = vector.load %arg14[%c0_35, %c0_36] : memref<256x1024xbf16, #tpu.memory_space<vmem>>, vector<256x1024xbf16>
    %cst_37 = arith.constant dense<0.000000e+00> : vector<16x1024xf32>
    %74 = tpu.matmul %72, %73, %cst_37 {dimension_numbers = #tpu.dot_dimension_numbers<[1], [0], [0], [1], [0, 0, 1, 1], [], []>} : vector<16x256xbf16>, vector<256x1024xbf16>, vector<16x1024xf32> -> vector<16x1024xf32>
    %c0_38 = arith.constant 0 : index
    %c0_39 = arith.constant 0 : index
    %75 = vector.load %arg15[%c0_38, %c0_39] : memref<1x1024xf32, #tpu.memory_space<vmem>>, vector<1x1024xf32>
    %76 = vector.broadcast %75 : vector<1x1024xf32> to vector<16x1024xf32>
    %77 = arith.addf %74, %76 : vector<16x1024xf32>
    %cst_40 = arith.constant 0.000000e+00 : f32
    %78 = vector.broadcast %cst_40 : f32 to vector<16x1024xf32>
    %79 = arith.maximumf %77, %78 : vector<16x1024xf32>
    %80 = arith.truncf %79 : vector<16x1024xf32> to vector<16x1024xbf16>
    %c0_41 = arith.constant 0 : index
    %c0_42 = arith.constant 0 : index
    %81 = vector.load %arg16[%c0_41, %c0_42] : memref<1024x256xbf16, #tpu.memory_space<vmem>>, vector<1024x256xbf16>
    %cst_43 = arith.constant dense<0.000000e+00> : vector<16x256xf32>
    %82 = tpu.matmul %80, %81, %cst_43 {dimension_numbers = #tpu.dot_dimension_numbers<[1], [0], [0], [1], [0, 0, 1, 1], [], []>} : vector<16x1024xbf16>, vector<1024x256xbf16>, vector<16x256xf32> -> vector<16x256xf32>
    %c0_44 = arith.constant 0 : index
    %c0_45 = arith.constant 0 : index
    %83 = vector.load %arg17[%c0_44, %c0_45] : memref<1x256xf32, #tpu.memory_space<vmem>>, vector<1x256xf32>
    %84 = vector.broadcast %83 : vector<1x256xf32> to vector<16x256xf32>
    %85 = arith.addf %82, %84 : vector<16x256xf32>
    %86 = arith.addf %71, %85 : vector<16x256xf32>
    %c0_46 = arith.constant 0 : index
    %c0_47 = arith.constant 0 : index
    %87 = vector.load %arg18[%c0_46, %c0_47] : memref<1x256xf32, #tpu.memory_space<vmem>>, vector<1x256xf32>
    %c0_48 = arith.constant 0 : index
    %c0_49 = arith.constant 0 : index
    %88 = vector.load %arg19[%c0_48, %c0_49] : memref<1x256xf32, #tpu.memory_space<vmem>>, vector<1x256xf32>
    %cst_50 = arith.constant dense<0.000000e+00> : vector<16xf32>
    %89 = vector.multi_reduction <add>, %86, %cst_50 [1] : vector<16x256xf32> to vector<16xf32>
    %90 = vector.shape_cast %89 : vector<16xf32> to vector<16x1xf32>
    %cst_51 = arith.constant 2.560000e+02 : f32
    %91 = vector.broadcast %cst_51 : f32 to vector<16x1xf32>
    %92 = arith.divf %90, %91 : vector<16x1xf32>
    %93 = vector.broadcast %92 : vector<16x1xf32> to vector<16x256xf32>
    %94 = arith.subf %86, %93 : vector<16x256xf32>
    %95 = arith.mulf %94, %94 : vector<16x256xf32>
    %cst_52 = arith.constant dense<0.000000e+00> : vector<16xf32>
    %96 = vector.multi_reduction <add>, %95, %cst_52 [1] : vector<16x256xf32> to vector<16xf32>
    %97 = vector.shape_cast %96 : vector<16xf32> to vector<16x1xf32>
    %cst_53 = arith.constant 2.560000e+02 : f32
    %98 = vector.broadcast %cst_53 : f32 to vector<16x1xf32>
    %99 = arith.divf %97, %98 : vector<16x1xf32>
    %cst_54 = arith.constant 9.99999974E-6 : f32
    %100 = vector.broadcast %cst_54 : f32 to vector<16x1xf32>
    %101 = arith.addf %99, %100 : vector<16x1xf32>
    %102 = math.rsqrt %101 : vector<16x1xf32>
    %103 = vector.broadcast %102 : vector<16x1xf32> to vector<16x256xf32>
    %104 = arith.mulf %94, %103 : vector<16x256xf32>
    %105 = vector.broadcast %87 : vector<1x256xf32> to vector<16x256xf32>
    %106 = arith.mulf %104, %105 : vector<16x256xf32>
    %107 = vector.broadcast %88 : vector<1x256xf32> to vector<16x256xf32>
    %108 = arith.addf %106, %107 : vector<16x256xf32>
    %109 = arith.truncf %108 : vector<16x256xf32> to vector<16x256xbf16>
    %c0_55 = arith.constant 0 : index
    %c0_56 = arith.constant 0 : index
    %110 = vector.load %arg20[%c0_55, %c0_56] : memref<256x128xbf16, #tpu.memory_space<vmem>>, vector<256x128xbf16>
    %cst_57 = arith.constant dense<0.000000e+00> : vector<16x128xf32>
    %111 = tpu.matmul %109, %110, %cst_57 {dimension_numbers = #tpu.dot_dimension_numbers<[1], [0], [0], [1], [0, 0, 1, 1], [], []>} : vector<16x256xbf16>, vector<256x128xbf16>, vector<16x128xf32> -> vector<16x128xf32>
    %c0_58 = arith.constant 0 : index
    %c0_59 = arith.constant 0 : index
    %112 = vector.load %arg21[%c0_58, %c0_59] : memref<1x128xf32, #tpu.memory_space<vmem>>, vector<1x128xf32>
    %113 = vector.broadcast %112 : vector<1x128xf32> to vector<16x128xf32>
    %114 = arith.addf %111, %113 : vector<16x128xf32>
    %c0_60 = arith.constant 0 : index
    %c0_61 = arith.constant 0 : index
    %115 = vector.load %arg22[%c0_60, %c0_61] : memref<16x128xf32, #tpu.memory_space<vmem>>, vector<16x128xf32>
    tpu.vector_store %arg22[%c0_60, %c0_61], %114 {strides = array<i32>} : memref<16x128xf32, #tpu.memory_space<vmem>>, vector<16x128xf32>,
    return
  }
  func.func @transform_0(%arg0: i32) -> (i32, i32) {
    %c0_i32 = arith.constant 0 : i32
    %c0_i32_0 = arith.constant 0 : i32
    return %arg0, %c0_i32 : i32, i32
  }
  func.func @transform_1(%arg0: i32) -> (i32, i32) {
    %c0_i32 = arith.constant 0 : i32
    %c0_i32_0 = arith.constant 0 : i32
    %c0_i32_1 = arith.constant 0 : i32
    return %c0_i32, %c0_i32_0 : i32, i32
  }
  func.func @transform_2(%arg0: i32) -> (i32, i32) {
    %c0_i32 = arith.constant 0 : i32
    %c0_i32_0 = arith.constant 0 : i32
    %c0_i32_1 = arith.constant 0 : i32
    return %c0_i32, %c0_i32_0 : i32, i32
  }
  func.func @transform_3(%arg0: i32) -> (i32, i32) {
    %c0_i32 = arith.constant 0 : i32
    %c0_i32_0 = arith.constant 0 : i32
    %c0_i32_1 = arith.constant 0 : i32
    return %c0_i32, %c0_i32_0 : i32, i32
  }
  func.func @transform_4(%arg0: i32) -> (i32, i32) {
    %c0_i32 = arith.constant 0 : i32
    %c0_i32_0 = arith.constant 0 : i32
    %c0_i32_1 = arith.constant 0 : i32
    return %c0_i32, %c0_i32_0 : i32, i32
  }
  func.func @transform_5(%arg0: i32) -> (i32, i32) {
    %c0_i32 = arith.constant 0 : i32
    %c0_i32_0 = arith.constant 0 : i32
    %c0_i32_1 = arith.constant 0 : i32
    return %c0_i32, %c0_i32_0 : i32, i32
  }
  func.func @transform_6(%arg0: i32) -> (i32, i32) {
    %c0_i32 = arith.constant 0 : i32
    %c0_i32_0 = arith.constant 0 : i32
    %c0_i32_1 = arith.constant 0 : i32
    return %c0_i32, %c0_i32_0 : i32, i32
  }
  func.func @transform_7(%arg0: i32) -> (i32, i32) {
    %c0_i32 = arith.constant 0 : i32
    %c0_i32_0 = arith.constant 0 : i32
    %c0_i32_1 = arith.constant 0 : i32
    return %c0_i32, %c0_i32_0 : i32, i32
  }
  func.func @transform_8(%arg0: i32) -> (i32, i32) {
    %c0_i32 = arith.constant 0 : i32
    %c0_i32_0 = arith.constant 0 : i32
    %c0_i32_1 = arith.constant 0 : i32
    return %c0_i32, %c0_i32_0 : i32, i32
  }
  func.func @transform_9(%arg0: i32) -> (i32, i32) {
    %c0_i32 = arith.constant 0 : i32
    %c0_i32_0 = arith.constant 0 : i32
    %c0_i32_1 = arith.constant 0 : i32
    return %c0_i32, %c0_i32_0 : i32, i32
  }
  func.func @transform_10(%arg0: i32) -> (i32, i32) {
    %c0_i32 = arith.constant 0 : i32
    %c0_i32_0 = arith.constant 0 : i32
    %c0_i32_1 = arith.constant 0 : i32
    return %c0_i32, %c0_i32_0 : i32, i32
  }
  func.func @transform_11(%arg0: i32) -> (i32, i32) {
    %c0_i32 = arith.constant 0 : i32
    %c0_i32_0 = arith.constant 0 : i32
    %c0_i32_1 = arith.constant 0 : i32
    return %c0_i32, %c0_i32_0 : i32, i32
  }
  func.func @transform_12(%arg0: i32) -> (i32, i32) {
    %c0_i32 = arith.constant 0 : i32
    %c0_i32_0 = arith.constant 0 : i32
    %c0_i32_1 = arith.constant 0 : i32
    return %c0_i32, %c0_i32_0 : i32, i32
  }
  func.func @transform_13(%arg0: i32) -> (i32, i32) {
    %c0_i32 = arith.constant 0 : i32
    %c0_i32_0 = arith.constant 0 : i32
    %c0_i32_1 = arith.constant 0 : i32
    return %c0_i32, %c0_i32_0 : i32, i32
  }
  func.func @transform_14(%arg0: i32) -> (i32, i32) {
    %c0_i32 = arith.constant 0 : i32
    %c0_i32_0 = arith.constant 0 : i32
    %c0_i32_1 = arith.constant 0 : i32
    return %c0_i32, %c0_i32_0 : i32, i32
  }
  func.func @transform_15(%arg0: i32) -> (i32, i32) {
    %c0_i32 = arith.constant 0 : i32
    %c0_i32_0 = arith.constant 0 : i32
    %c0_i32_1 = arith.constant 0 : i32
    return %c0_i32, %c0_i32_0 : i32, i32
  }
  func.func @transform_16(%arg0: i32) -> (i32, i32) {
    %c0_i32 = arith.constant 0 : i32
    %c0_i32_0 = arith.constant 0 : i32
    %c0_i32_1 = arith.constant 0 : i32
    return %c0_i32, %c0_i32_0 : i32, i32
  }
  func.func @transform_17(%arg0: i32) -> (i32, i32) {
    %c0_i32 = arith.constant 0 : i32
    %c0_i32_0 = arith.constant 0 : i32
    %c0_i32_1 = arith.constant 0 : i32
    return %c0_i32, %c0_i32_0 : i32, i32
  }
  func.func @transform_18(%arg0: i32) -> (i32, i32) {
    %c0_i32 = arith.constant 0 : i32
    %c0_i32_0 = arith.constant 0 : i32
    %c0_i32_1 = arith.constant 0 : i32
    return %c0_i32, %c0_i32_0 : i32, i32
  }
  func.func @transform_19(%arg0: i32) -> (i32, i32) {
    %c0_i32 = arith.constant 0 : i32
    %c0_i32_0 = arith.constant 0 : i32
    %c0_i32_1 = arith.constant 0 : i32
    return %c0_i32, %c0_i32_0 : i32, i32
  }
  func.func @transform_20(%arg0: i32) -> (i32, i32) {
    %c0_i32 = arith.constant 0 : i32
    %c0_i32_0 = arith.constant 0 : i32
    %c0_i32_1 = arith.constant 0 : i32
    return %c0_i32, %c0_i32_0 : i32, i32
  }
  func.func @transform_21(%arg0: i32) -> (i32, i32) {
    %c0_i32 = arith.constant 0 : i32
    %c0_i32_0 = arith.constant 0 : i32
    return %arg0, %c0_i32 : i32, i32
  }
}

</mosaic_0001>

<llo_original>
// kernel: tpu_custom_call.1
$region0: #{tpu_custom_call.1}
  #allocation0 [shape = 'u32[]', space=smem, size = 0x4, offset = 0x4, fixed_abs, tag = 'smem constant byte address 0x4 - core index']
  #allocation1 [shape = 'u32[144,128]{1,0:T(1,128)}', space=vmem, size = 0x12000, scoped, tag = 'internal scratch']
  %s0 = inlined_call_operand.vmem [shape: bf16[32,256], index: 0, kind: input, shape index: {}]
  %s1 = inlined_call_operand.vmem [shape: f32[1,256], index: 1, kind: input, shape index: {}]
  %s2 = inlined_call_operand.vmem [shape: f32[1,8], index: 2, kind: input, shape index: {}]
  %s3 = inlined_call_operand.vmem [shape: f32[8,256], index: 3, kind: input, shape index: {}]
  %s4 = inlined_call_operand.vmem [shape: f32[8,256], index: 4, kind: input, shape index: {}]
  %s5 = inlined_call_operand.vmem [shape: bf16[256,8], index: 5, kind: input, shape index: {}]
  %s6 = inlined_call_operand.hbm [shape: f32[1,8], index: 6, kind: input, shape index: {}]
  %s7 = inlined_call_operand.hbm [shape: bf16[256,256], index: 7, kind: input, shape index: {}]
  %s8 = inlined_call_operand.vmem [shape: f32[1,256], index: 8, kind: input, shape index: {}]
  %s9 = inlined_call_operand.hbm [shape: bf16[256,256], index: 9, kind: input, shape index: {}]
  %s10 = inlined_call_operand.vmem [shape: f32[1,256], index: 10, kind: input, shape index: {}]
  %s11 = inlined_call_operand.hbm [shape: f32[1,256], index: 11, kind: input, shape index: {}]
  %s12 = inlined_call_operand.hbm [shape: f32[1,256], index: 12, kind: input, shape index: {}]
  %s13 = inlined_call_operand.hbm [shape: bf16[256,1024], index: 13, kind: input, shape index: {}]
  %s14 = inlined_call_operand.vmem [shape: f32[1,1024], index: 14, kind: input, shape index: {}]
  %s15 = inlined_call_operand.hbm [shape: bf16[1024,256], index: 15, kind: input, shape index: {}]
  %s16 = inlined_call_operand.hbm [shape: f32[1,256], index: 16, kind: input, shape index: {}]
  %s17 = inlined_call_operand.hbm [shape: f32[1,256], index: 17, kind: input, shape index: {}]
  %s18 = inlined_call_operand.hbm [shape: f32[1,256], index: 18, kind: input, shape index: {}]
  %s19 = inlined_call_operand.vmem [shape: bf16[256,128], index: 19, kind: input, shape index: {}]
  %s20 = inlined_call_operand.vmem [shape: f32[1,128], index: 20, kind: input, shape index: {}]
  %s21 = inlined_call_operand.hbm [shape: f32[16,128], index: 21, kind: output, shape index: {}]
  %s22 = sld [smem:[#allocation0]]
  $region134: #{tpu_custom_call.1} parent=0
    _
  %s24 = ssub.s32 1, %s22
  %s25 = scalar_select 0, %s24, %s22
  $region1: #{tpu_custom_call.1} parent=0
    #allocation2 [shape = 'u8[512]{0}', space=vmem, size = 0x400, scoped, tag = 'input window, operand 6, single buffered']
    #allocation3 [shape = 's32[1]{0}', space=sflag, size = 0x4, scoped, tag = 'scoped memory for tpu_custom_call.1']
    #allocation4 [shape = 's32[1]{0}', space=sflag, size = 0x4, scoped, tag = 'scoped memory for tpu_custom_call.1']
    #allocation5 [shape = 'u8[131072]{0}', space=vmem, size = 0x20000, scoped, tag = 'input window, operand 7, single buffered']
    #allocation6 [shape = 's32[1]{0}', space=sflag, size = 0x4, scoped, tag = 'scoped memory for tpu_custom_call.1']
    #allocation7 [shape = 'u8[131072]{0}', space=vmem, size = 0x20000, scoped, tag = 'input window, operand 9, single buffered']
    #allocation8 [shape = 'u8[1024]{0}', space=vmem, size = 0x400, scoped, tag = 'input window, operand 11, single buffered']
    #allocation9 [shape = 's32[1]{0}', space=sflag, size = 0x4, scoped, tag = 'scoped memory for tpu_custom_call.1']
    #allocation10 [shape = 'u8[1024]{0}', space=vmem, size = 0x400, scoped, tag = 'input window, operand 12, single buffered']
    #allocation11 [shape = 'u8[524288]{0}', space=vmem, size = 0x80000, scoped, tag = 'input window, operand 13, single buffered']
    #allocation12 [shape = 's32[1]{0}', space=sflag, size = 0x4, scoped, tag = 'scoped memory for tpu_custom_call.1']
    #allocation13 [shape = 'u8[524288]{0}', space=vmem, size = 0x80000, scoped, tag = 'input window, operand 15, single buffered']
    #allocation14 [shape = 'u8[1024]{0}', space=vmem, size = 0x400, scoped, tag = 'input window, operand 16, single buffered']
    #allocation15 [shape = 's32[1]{0}', space=sflag, size = 0x4, scoped, tag = 'scoped memory for tpu_custom_call.1']
    #allocation16 [shape = 'u8[1024]{0}', space=vmem, size = 0x400, scoped, tag = 'input window, operand 17, single buffered']
    #allocation17 [shape = 'u8[1024]{0}', space=vmem, size = 0x400, scoped, tag = 'input window, operand 18, single buffered']
    #allocation18 [shape = 's32[1]{0}', space=sflag, size = 0x4, scoped, tag = 'scoped memory for tpu_custom_call.1']
    #allocation19 [shape = 'u8[8192]{0}', space=vmem, size = 0x2000, scoped, tag = 'output window, operand 0, single buffered']
    %26 = vsyncpa [#allocation3], 0
    %27 = vsyncpa [#allocation6], 0
    %28 = vsyncpa [#allocation9], 0
    %29 = vsyncpa [#allocation12], 0
    %30 = vsyncpa [#allocation15], 0
    %31 = vsyncpa [#allocation18], 0
    %32 = vsyncpa [#allocation4], 0
    // Predicated region
    $region2: #{tpu_custom_call.1} parent=1 // pred_check
      _
    $region3: #{tpu_custom_call.1} parent=1 // pred_check_branch
      %34 = sbr.rel (0) target = $region5
    $region4: #{tpu_custom_call.1} parent=1 // pred_region
      _
    $region5: #{tpu_custom_call.1} parent=1 // pred_fallthru
      _
    // Predicated region
    $region6: #{tpu_custom_call.1} parent=1 // pred_check
      _
    $region7: #{tpu_custom_call.1} parent=1 // pred_check_branch
      %36 = sbr.rel (0) target = $region9
    $region8: #{tpu_custom_call.1} parent=1 // pred_region
      _
    $region9: #{tpu_custom_call.1} parent=1 // pred_fallthru
      _
    // Predicated region
    $region10: #{tpu_custom_call.1} parent=1 // pred_check
      _
    $region11: #{tpu_custom_call.1} parent=1 // pred_check_branch
      %38 = sbr.rel (0) target = $region13
    $region12: #{tpu_custom_call.1} parent=1 // pred_region
      _
    $region13: #{tpu_custom_call.1} parent=1 // pred_fallthru
      _
    // Predicated region
    $region14: #{tpu_custom_call.1} parent=1 // pred_check
      _
    $region15: #{tpu_custom_call.1} parent=1 // pred_check_branch
      %40 = sbr.rel (0) target = $region17
    $region16: #{tpu_custom_call.1} parent=1 // pred_region
      _
    $region17: #{tpu_custom_call.1} parent=1 // pred_fallthru
      _
    // Predicated region
    $region18: #{tpu_custom_call.1} parent=1 // pred_check
      _
    $region19: #{tpu_custom_call.1} parent=1 // pred_check_branch
      %42 = sbr.rel (0) target = $region21
    $region20: #{tpu_custom_call.1} parent=1 // pred_region
      _
    $region21: #{tpu_custom_call.1} parent=1 // pred_fallthru
      _
    // Predicated region
    $region22: #{tpu_custom_call.1} parent=1 // pred_check
      _
    $region23: #{tpu_custom_call.1} parent=1 // pred_check_branch
      %44 = sbr.rel (0) target = $region25
    $region24: #{tpu_custom_call.1} parent=1 // pred_region
      _
    $region25: #{tpu_custom_call.1} parent=1 // pred_fallthru
      _
    // Predicated region
    $region26: #{tpu_custom_call.1} parent=1 // pred_check
      _
    $region27: #{tpu_custom_call.1} parent=1 // pred_check_branch
      %46 = sbr.rel (0) target = $region29
    $region28: #{tpu_custom_call.1} parent=1 // pred_region
      %s48 = ssub.s32 16, 16
      %49 = vsyncadd [#allocation3], %s48
      %s51 = sshll.u32 [#allocation2], 4
      %s52 = int_to_ptr.vmem [resolvable:$true] %s51
      %54 = dma.hbm_to_vmem [thread:$0]  %s6, 16, %s52, [#allocation3]
    $region29: #{tpu_custom_call.1} parent=1 // pred_fallthru
      _
    // Predicated region
    $region30: #{tpu_custom_call.1} parent=1 // pred_check
      _
    $region31: #{tpu_custom_call.1} parent=1 // pred_check_branch
      %56 = sbr.rel (0) target = $region33
    $region32: #{tpu_custom_call.1} parent=1 // pred_region
      %s58 = ssub.s32 4096, 4096
      %59 = vsyncadd [#allocation6], %s58
      %s60 = sshll.u32 [#allocation5], 4
      %s61 = int_to_ptr.vmem [resolvable:$true] %s60
      %66 = dma.hbm_to_vmem [thread:$0]  %s7, 4096, %s61, [#allocation6], 128, 128, 8
    $region33: #{tpu_custom_call.1} parent=1 // pred_fallthru
      _
    // Predicated region
    $region34: #{tpu_custom_call.1} parent=1 // pred_check
      _
    $region35: #{tpu_custom_call.1} parent=1 // pred_check_branch
      %68 = sbr.rel (0) target = $region37
    $region36: #{tpu_custom_call.1} parent=1 // pred_region
      _
    $region37: #{tpu_custom_call.1} parent=1 // pred_fallthru
      _
    // Predicated region
    $region38: #{tpu_custom_call.1} parent=1 // pred_check
      _
    $region39: #{tpu_custom_call.1} parent=1 // pred_check_branch
      %70 = sbr.rel (0) target = $region41
    $region40: #{tpu_custom_call.1} parent=1 // pred_region
      %s72 = ssub.s32 4096, 4096
      %73 = vsyncadd [#allocation6], %s72
      %s74 = sshll.u32 [#allocation7], 4
      %s75 = int_to_ptr.vmem [resolvable:$true] %s74
      %80 = dma.hbm_to_vmem [thread:$0]  %s9, 4096, %s75, [#allocation6], 128, 128, 8
    $region41: #{tpu_custom_call.1} parent=1 // pred_fallthru
      _
    // Predicated region
    $region42: #{tpu_custom_call.1} parent=1 // pred_check
      _
    $region43: #{tpu_custom_call.1} parent=1 // pred_check_branch
      %82 = sbr.rel (0) target = $region45
    $region44: #{tpu_custom_call.1} parent=1 // pred_region
      _
    $region45: #{tpu_custom_call.1} parent=1 // pred_fallthru
      _
    // Predicated region
    $region46: #{tpu_custom_call.1} parent=1 // pred_check
      _
    $region47: #{tpu_custom_call.1} parent=1 // pred_check_branch
      %84 = sbr.rel (0) target = $region49
    $region48: #{tpu_custom_call.1} parent=1 // pred_region
      %s86 = ssub.s32 32, 32
      %87 = vsyncadd [#allocation9], %s86
      %s89 = sshll.u32 [#allocation8], 4
      %s90 = int_to_ptr.vmem [resolvable:$true] %s89
      %92 = dma.hbm_to_vmem [thread:$0]  %s11, 32, %s90, [#allocation9]
    $region49: #{tpu_custom_call.1} parent=1 // pred_fallthru
      _
    // Predicated region
    $region50: #{tpu_custom_call.1} parent=1 // pred_check
      _
    $region51: #{tpu_custom_call.1} parent=1 // pred_check_branch
      %94 = sbr.rel (0) target = $region53
    $region52: #{tpu_custom_call.1} parent=1 // pred_region
      %s96 = ssub.s32 32, 32
      %97 = vsyncadd [#allocation9], %s96
      %s99 = sshll.u32 [#allocation10], 4
      %s100 = int_to_ptr.vmem [resolvable:$true] %s99
      %102 = dma.hbm_to_vmem [thread:$0]  %s12, 32, %s100, [#allocation9]
    $region53: #{tpu_custom_call.1} parent=1 // pred_fallthru
      _
    // Predicated region
    $region54: #{tpu_custom_call.1} parent=1 // pred_check
      _
    $region55: #{tpu_custom_call.1} parent=1 // pred_check_branch
      %104 = sbr.rel (0) target = $region57
    $region56: #{tpu_custom_call.1} parent=1 // pred_region
      %s106 = ssub.s32 16384, 16384
      %107 = vsyncadd [#allocation12], %s106
      %s108 = sshll.u32 [#allocation11], 4
      %s109 = int_to_ptr.vmem [resolvable:$true] %s108
      %114 = dma.hbm_to_vmem [thread:$0]  %s13, 16384, %s109, [#allocation12], 512, 512, 32
    $region57: #{tpu_custom_call.1} parent=1 // pred_fallthru
      _
    // Predicated region
    $region58: #{tpu_custom_call.1} parent=1 // pred_check
      _
    $region59: #{tpu_custom_call.1} parent=1 // pred_check_branch
      %116 = sbr.rel (0) target = $region61
    $region60: #{tpu_custom_call.1} parent=1 // pred_region
      _
    $region61: #{tpu_custom_call.1} parent=1 // pred_fallthru
      _
    // Predicated region
    $region62: #{tpu_custom_call.1} parent=1 // pred_check
      _
    $region63: #{tpu_custom_call.1} parent=1 // pred_check_branch
      %118 = sbr.rel (0) target = $region65
    $region64: #{tpu_custom_call.1} parent=1 // pred_region
      %s120 = ssub.s32 16384, 16384
      %121 = vsyncadd [#allocation12], %s120
      %s122 = sshll.u32 [#allocation13], 4
      %s123 = int_to_ptr.vmem [resolvable:$true] %s122
      %128 = dma.hbm_to_vmem [thread:$0]  %s15, 16384, %s123, [#allocation12], 128, 128, 8
    $region65: #{tpu_custom_call.1} parent=1 // pred_fallthru
      _
    // Predicated region
    $region66: #{tpu_custom_call.1} parent=1 // pred_check
      _
    $region67: #{tpu_custom_call.1} parent=1 // pred_check_branch
      %130 = sbr.rel (0) target = $region69
    $region68: #{tpu_custom_call.1} parent=1 // pred_region
      %s132 = ssub.s32 32, 32
      %133 = vsyncadd [#allocation15], %s132
      %s135 = sshll.u32 [#allocation14], 4
      %s136 = int_to_ptr.vmem [resolvable:$true] %s135
      %138 = dma.hbm_to_vmem [thread:$0]  %s16, 32, %s136, [#allocation15]
    $region69: #{tpu_custom_call.1} parent=1 // pred_fallthru
      _
    // Predicated region
    $region70: #{tpu_custom_call.1} parent=1 // pred_check
      _
    $region71: #{tpu_custom_call.1} parent=1 // pred_check_branch
      %140 = sbr.rel (0) target = $region73
    $region72: #{tpu_custom_call.1} parent=1 // pred_region
      %s142 = ssub.s32 32, 32
      %143 = vsyncadd [#allocation15], %s142
      %s145 = sshll.u32 [#allocation16], 4
      %s146 = int_to_ptr.vmem [resolvable:$true] %s145
      %148 = dma.hbm_to_vmem [thread:$0]  %s17, 32, %s146, [#allocation15]
    $region73: #{tpu_custom_call.1} parent=1 // pred_fallthru
      _
    // Predicated region
    $region74: #{tpu_custom_call.1} parent=1 // pred_check
      _
    $region75: #{tpu_custom_call.1} parent=1 // pred_check_branch
      %150 = sbr.rel (0) target = $region77
    $region76: #{tpu_custom_call.1} parent=1 // pred_region
      %s152 = ssub.s32 32, 32
      %153 = vsyncadd [#allocation18], %s152
      %s155 = sshll.u32 [#allocation17], 4
      %s156 = int_to_ptr.vmem [resolvable:$true] %s155
      %158 = dma.hbm_to_vmem [thread:$0]  %s18, 32, %s156, [#allocation18]
    $region77: #{tpu_custom_call.1} parent=1 // pred_fallthru
      _
    // Predicated region
    $region78: #{tpu_custom_call.1} parent=1 // pred_check
      _
    $region79: #{tpu_custom_call.1} parent=1 // pred_check_branch
      %160 = sbr.rel (0) target = $region81
    $region80: #{tpu_custom_call.1} parent=1 // pred_region
      _
    $region81: #{tpu_custom_call.1} parent=1 // pred_fallthru
      _
    // Predicated region
    $region82: #{tpu_custom_call.1} parent=1 // pred_check
      _
    $region83: #{tpu_custom_call.1} parent=1 // pred_check_branch
      %162 = sbr.rel (0) target = $region85
    $region84: #{tpu_custom_call.1} parent=1 // pred_region
      _
    $region85: #{tpu_custom_call.1} parent=1 // pred_fallthru
      _
    // Predicated region
    $region86: #{tpu_custom_call.1} parent=1 // pred_check
      _
    $region87: #{tpu_custom_call.1} parent=1 // pred_check_branch
      %164 = sbr.rel (0) target = $region89
    $region88: #{tpu_custom_call.1} parent=1 // pred_region
      %165 = dma.done [#allocation3], 16
    $region89: #{tpu_custom_call.1} parent=1 // pred_fallthru
      _
    // Predicated region
    $region90: #{tpu_custom_call.1} parent=1 // pred_check
      _
    $region91: #{tpu_custom_call.1} parent=1 // pred_check_branch
      %167 = sbr.rel (0) target = $region93
    $region92: #{tpu_custom_call.1} parent=1 // pred_region
      %168 = dma.done [#allocation6], 4096
    $region93: #{tpu_custom_call.1} parent=1 // pred_fallthru
      _
    // Predicated region
    $region94: #{tpu_custom_call.1} parent=1 // pred_check
      _
    $region95: #{tpu_custom_call.1} parent=1 // pred_check_branch
      %170 = sbr.rel (0) target = $region97
    $region96: #{tpu_custom_call.1} parent=1 // pred_region
      %171 = dma.done [#allocation6], 4096
    $region97: #{tpu_custom_call.1} parent=1 // pred_fallthru
      _
    // Predicated region
    $region98: #{tpu_custom_call.1} parent=1 // pred_check
      _
    $region99: #{tpu_custom_call.1} parent=1 // pred_check_branch
      %173 = sbr.rel (0) target = $region101
    $region100: #{tpu_custom_call.1} parent=1 // pred_region
      %174 = dma.done [#allocation9], 32
    $region101: #{tpu_custom_call.1} parent=1 // pred_fallthru
      _
    // Predicated region
    $region102: #{tpu_custom_call.1} parent=1 // pred_check
      _
    $region103: #{tpu_custom_call.1} parent=1 // pred_check_branch
      %176 = sbr.rel (0) target = $region105
    $region104: #{tpu_custom_call.1} parent=1 // pred_region
      %177 = dma.done [#allocation9], 32
    $region105: #{tpu_custom_call.1} parent=1 // pred_fallthru
      _
    // Predicated region
    $region106: #{tpu_custom_call.1} parent=1 // pred_check
      _
    $region107: #{tpu_custom_call.1} parent=1 // pred_check_branch
      %179 = sbr.rel (0) target = $region109
    $region108: #{tpu_custom_call.1} parent=1 // pred_region
      %180 = dma.done [#allocation12], 16384
    $region109: #{tpu_custom_call.1} parent=1 // pred_fallthru
      _
    // Predicated region
    $region110: #{tpu_custom_call.1} parent=1 // pred_check
      _
    $region111: #{tpu_custom_call.1} parent=1 // pred_check_branch
      %182 = sbr.rel (0) target = $region113
    $region112: #{tpu_custom_call.1} parent=1 // pred_region
      %183 = dma.done [#allocation12], 16384
    $region113: #{tpu_custom_call.1} parent=1 // pred_fallthru
      _
    // Predicated region
    $region114: #{tpu_custom_call.1} parent=1 // pred_check
      _
    $region115: #{tpu_custom_call.1} parent=1 // pred_check_branch
      %185 = sbr.rel (0) target = $region117
    $region116: #{tpu_custom_call.1} parent=1 // pred_region
      %186 = dma.done [#allocation15], 32
    $region117: #{tpu_custom_call.1} parent=1 // pred_fallthru
      _
    // Predicated region
    $region118: #{tpu_custom_call.1} parent=1 // pred_check
      _
    $region119: #{tpu_custom_call.1} parent=1 // pred_check_branch
      %188 = sbr.rel (0) target = $region121
    $region120: #{tpu_custom_call.1} parent=1 // pred_region
      %189 = dma.done [#allocation15], 32
    $region121: #{tpu_custom_call.1} parent=1 // pred_fallthru
      _
    // Predicated region
    $region122: #{tpu_custom_call.1} parent=1 // pred_check
      _
    $region123: #{tpu_custom_call.1} parent=1 // pred_check_branch
      %191 = sbr.rel (0) target = $region125
    $region124: #{tpu_custom_call.1} parent=1 // pred_region
      %192 = dma.done [#allocation18], 32
    $region125: #{tpu_custom_call.1} parent=1 // pred_fallthru
      _
    %v194 = vld [vmem:[%s0] sm:$0xff]
    %v195 = vld [vmem:[%s0 + $0x8] sm:$0xff]
    %v196 = vld [vmem:[%s0 + $0x10] sm:$0xff]
    %v197 = vld [vmem:[%s0 + $0x18] sm:$0xff]
    %v198 = vld [vmem:[#allocation5] sm:$0xff]
    %v199 = vld [vmem:[#allocation5 + $0x8] sm:$0xff]
    %v200 = vld [vmem:[#allocation5 + $0x10] sm:$0xff]
    %v201 = vld [vmem:[#allocation5 + $0x18] sm:$0xff]
    %v202 = vld [vmem:[#allocation5 + $0x20] sm:$0xff]
    %v203 = vld [vmem:[#allocation5 + $0x28] sm:$0xff]
    %v204 = vld [vmem:[#allocation5 + $0x30] sm:$0xff]
    %v205 = vld [vmem:[#allocation5 + $0x38] sm:$0xff]
    %v206 = vld [vmem:[#allocation5 + $0x40] sm:$0xff]
    %v207 = vld [vmem:[#allocation5 + $0x48] sm:$0xff]
    %v208 = vld [vmem:[#allocation5 + $0x50] sm:$0xff]
    %v209 = vld [vmem:[#allocation5 + $0x58] sm:$0xff]
    %v210 = vld [vmem:[#allocation5 + $0x60] sm:$0xff]
    %v211 = vld [vmem:[#allocation5 + $0x68] sm:$0xff]
    %v212 = vld [vmem:[#allocation5 + $0x70] sm:$0xff]
    %v213 = vld [vmem:[#allocation5 + $0x78] sm:$0xff]
    %v214 = vld [vmem:[#allocation5 + $0x80] sm:$0xff]
    %v215 = vld [vmem:[#allocation5 + $0x88] sm:$0xff]
    %v216 = vld [vmem:[#allocation5 + $0x90] sm:$0xff]
    %v217 = vld [vmem:[#allocation5 + $0x98] sm:$0xff]
    %v218 = vld [vmem:[#allocation5 + $0xa0] sm:$0xff]
    %v219 = vld [vmem:[#allocation5 + $0xa8] sm:$0xff]
    %v220 = vld [vmem:[#allocation5 + $0xb0] sm:$0xff]
    %v221 = vld [vmem:[#allocation5 + $0xb8] sm:$0xff]
    %v222 = vld [vmem:[#allocation5 + $0xc0] sm:$0xff]
    %v223 = vld [vmem:[#allocation5 + $0xc8] sm:$0xff]
    %v224 = vld [vmem:[#allocation5 + $0xd0] sm:$0xff]
    %v225 = vld [vmem:[#allocation5 + $0xd8] sm:$0xff]
    %v226 = vld [vmem:[#allocation5 + $0xe0] sm:$0xff]
    %v227 = vld [vmem:[#allocation5 + $0xe8] sm:$0xff]
    %v228 = vld [vmem:[#allocation5 + $0xf0] sm:$0xff]
    %v229 = vld [vmem:[#allocation5 + $0xf8] sm:$0xff]
    %v230 = vld [vmem:[%s8] sm:$0x3]
    %v232 = vlaneseq
    %v233 = vshrl.u32 %v232, 7
    %v234 = vsub.s32 0, %v233
    %v235 = vrot.slane %v230, %v234
    %v236 = vlaneseq
    %v237 = vshrl.u32 %v236, 7
    %v238 = vsub.s32 1, %v237
    %v239 = vrot.slane %v230, %v238
    %v246 = vunpack.c.l.b16 %v194
    %v247 = vunpack.c.h.b16 %v194
    %v248 = vunpack.c.l.b16 %v195
    %v249 = vunpack.c.h.b16 %v195
    %v250 = vunpack.c.l.b16 %v196
    %v251 = vunpack.c.h.b16 %v196
    %v252 = vunpack.c.l.b16 %v197
    %v253 = vunpack.c.h.b16 %v197
    %v254 = vpack.c.b16 %v248, %v246
    %v255 = vpack.c.b16 %v249, %v247
    %v256 = vpack.c.b16 %v252, %v250
    %v257 = vpack.c.b16 %v253, %v251
    %v294 = vunpack.c.l.b16 %v198
    %v295 = vunpack.c.h.b16 %v198
    %v296 = vunpack.c.l.b16 %v199
    %v297 = vunpack.c.h.b16 %v199
    %v298 = vunpack.c.l.b16 %v200
    %v299 = vunpack.c.h.b16 %v200
    %v300 = vunpack.c.l.b16 %v201
    %v301 = vunpack.c.h.b16 %v201
    %v302 = vunpack.c.l.b16 %v202
    %v303 = vunpack.c.h.b16 %v202
    %v304 = vunpack.c.l.b16 %v203
    %v305 = vunpack.c.h.b16 %v203
    %v306 = vunpack.c.l.b16 %v204
    %v307 = vunpack.c.h.b16 %v204
    %v308 = vunpack.c.l.b16 %v205
    %v309 = vunpack.c.h.b16 %v205
    %v310 = vunpack.c.l.b16 %v206
    %v311 = vunpack.c.h.b16 %v206
    %v312 = vunpack.c.l.b16 %v207
    %v313 = vunpack.c.h.b16 %v207
    %v314 = vunpack.c.l.b16 %v208
    %v315 = vunpack.c.h.b16 %v208
    %v316 = vunpack.c.l.b16 %v209
    %v317 = vunpack.c.h.b16 %v209
    %v318 = vunpack.c.l.b16 %v210
    %v319 = vunpack.c.h.b16 %v210
    %v320 = vunpack.c.l.b16 %v211
    %v321 = vunpack.c.h.b16 %v211
    %v322 = vunpack.c.l.b16 %v212
    %v323 = vunpack.c.h.b16 %v212
    %v324 = vunpack.c.l.b16 %v213
    %v325 = vunpack.c.h.b16 %v213
    %v326 = vunpack.c.l.b16 %v214
    %v327 = vunpack.c.h.b16 %v214
    %v328 = vunpack.c.l.b16 %v215
    %v329 = vunpack.c.h.b16 %v215
    %v330 = vunpack.c.l.b16 %v216
    %v331 = vunpack.c.h.b16 %v216
    %v332 = vunpack.c.l.b16 %v217
    %v333 = vunpack.c.h.b16 %v217
    %v334 = vunpack.c.l.b16 %v218
    %v335 = vunpack.c.h.b16 %v218
    %v336 = vunpack.c.l.b16 %v219
    %v337 = vunpack.c.h.b16 %v219
    %v338 = vunpack.c.l.b16 %v220
    %v339 = vunpack.c.h.b16 %v220
    %v340 = vunpack.c.l.b16 %v221
    %v341 = vunpack.c.h.b16 %v221
    %v342 = vunpack.c.l.b16 %v222
    %v343 = vunpack.c.h.b16 %v222
    %v344 = vunpack.c.l.b16 %v223
    %v345 = vunpack.c.h.b16 %v223
    %v346 = vunpack.c.l.b16 %v224
    %v347 = vunpack.c.h.b16 %v224
    %v348 = vunpack.c.l.b16 %v225
    %v349 = vunpack.c.h.b16 %v225
    %v350 = vunpack.c.l.b16 %v226
    %v351 = vunpack.c.h.b16 %v226
    %v352 = vunpack.c.l.b16 %v227
    %v353 = vunpack.c.h.b16 %v227
    %v354 = vunpack.c.l.b16 %v228
    %v355 = vunpack.c.h.b16 %v228
    %v356 = vunpack.c.l.b16 %v229
    %v357 = vunpack.c.h.b16 %v229
    %v358 = vpack.c.b16 %v296, %v294
    %v359 = vpack.c.b16 %v297, %v295
    %v360 = vpack.c.b16 %v300, %v298
    %v361 = vpack.c.b16 %v301, %v299
    %v362 = vpack.c.b16 %v304, %v302
    %v363 = vpack.c.b16 %v305, %v303
    %v364 = vpack.c.b16 %v308, %v306
    %v365 = vpack.c.b16 %v309, %v307
    %v366 = vpack.c.b16 %v312, %v310
    %v367 = vpack.c.b16 %v313, %v311
    %v368 = vpack.c.b16 %v316, %v314
    %v369 = vpack.c.b16 %v317, %v315
    %v370 = vpack.c.b16 %v320, %v318
    %v371 = vpack.c.b16 %v321, %v319
    %v372 = vpack.c.b16 %v324, %v322
    %v373 = vpack.c.b16 %v325, %v323
    %v374 = vpack.c.b16 %v328, %v326
    %v375 = vpack.c.b16 %v329, %v327
    %v376 = vpack.c.b16 %v332, %v330
    %v377 = vpack.c.b16 %v333, %v331
    %v378 = vpack.c.b16 %v336, %v334
    %v379 = vpack.c.b16 %v337, %v335
    %v380 = vpack.c.b16 %v340, %v338
    %v381 = vpack.c.b16 %v341, %v339
    %v382 = vpack.c.b16 %v344, %v342
    %v383 = vpack.c.b16 %v345, %v343
    %v384 = vpack.c.b16 %v348, %v346
    %v385 = vpack.c.b16 %v349, %v347
    %v386 = vpack.c.b16 %v352, %v350
    %v387 = vpack.c.b16 %v353, %v351
    %v388 = vpack.c.b16 %v356, %v354
    %v389 = vpack.c.b16 %v357, %v355
    %422 = vmatprep.subr.bf16.mxu0 %v359
    %423 = vmatpush1.bf16.msra.mxu0 %v358
    %424 = vmatprep.subr.bf16.mxu0 %v361
    %425 = vmatpush1.bf16.msra.mxu0 %v360
    %426 = vmatprep.subr.bf16.mxu0 %v363
    %427 = vmatpush1.bf16.msra.mxu0 %v362
    %428 = vmatprep.subr.bf16.mxu0 %v365
    %429 = vmatpush1.bf16.msra.mxu0 %v364
    %430 = vmatprep.subr.bf16.mxu0 %v367
    %431 = vmatpush1.bf16.msra.mxu0 %v366
    %432 = vmatprep.subr.bf16.mxu0 %v369
    %433 = vmatpush1.bf16.msra.mxu0 %v368
    %434 = vmatprep.subr.bf16.mxu0 %v371
    %435 = vmatpush1.bf16.msra.mxu0 %v370
    %436 = vmatprep.subr.bf16.mxu0 %v373
    %437 = vmatpush1.bf16.msra.mxu0 %v372
    %438 = vmatprep.subr.bf16.mxu0 %v375
    %439 = vmatpush1.bf16.msra.mxu0 %v374
    %440 = vmatprep.subr.bf16.mxu0 %v377
    %441 = vmatpush1.bf16.msra.mxu0 %v376
    %442 = vmatprep.subr.bf16.mxu0 %v379
    %443 = vmatpush1.bf16.msra.mxu0 %v378
    %444 = vmatprep.subr.bf16.mxu0 %v381
    %445 = vmatpush1.bf16.msra.mxu0 %v380
    %446 = vmatprep.subr.bf16.mxu0 %v383
    %447 = vmatpush1.bf16.msra.mxu0 %v382
    %448 = vmatprep.subr.bf16.mxu0 %v385
    %449 = vmatpush1.bf16.msra.mxu0 %v384
    %450 = vmatprep.subr.bf16.mxu0 %v387
    %451 = vmatpush1.bf16.msra.mxu0 %v386
    %452 = vmatprep.subr.bf16.mxu0 %v389
    %453 = vmatpush1.bf16.msra.mxu0 %v388
    %454 = vmatprep.mubr.bf16.mxu0 %v255
    %455 = vmatmul.mubr.bf16.gmra.mrb[0].mxu0 %v254
    %v456 = vpop.f32.mrb[0].mxu0
    %v457 = vadd.f32 %v235, %v456
    %v458 = vpop.f32.mrb[0].mxu0
    %v459 = vadd.f32 %v239, %v458
    %v460 = vpop.f32.mrb[0].mxu0
    %v461 = vadd.f32 %v235, %v460
    %v462 = vpop.f32.mrb[0].mxu0
    %v463 = vadd.f32 %v239, %v462
    %464 = vmatprep.mubr.bf16.mxu0 %v257
    %465 = vmatmul.mubr.bf16.gmra.mrb[0].mxu0 %v256
    %v466 = vpop.f32.mrb[0].mxu0
    %v467 = vadd.f32 %v235, %v466
    %v468 = vpop.f32.mrb[0].mxu0
    %v469 = vadd.f32 %v239, %v468
    %v470 = vpop.f32.mrb[0].mxu0
    %v471 = vadd.f32 %v235, %v470
    %v472 = vpop.f32.mrb[0].mxu0
    %v473 = vadd.f32 %v239, %v472
    %474 = vdwg.mxu0
    %v475 = vld [vmem:[%s5] sm:$0xf]
    %v476 = vld [vmem:[%s5 + $0x4] sm:$0xf]
    %v477 = vld [vmem:[%s5 + $0x8] sm:$0xf]
    %v478 = vld [vmem:[%s5 + $0xc] sm:$0xf]
    %v479 = vld [vmem:[%s5 + $0x10] sm:$0xf]
    %v480 = vld [vmem:[%s5 + $0x14] sm:$0xf]
    %v481 = vld [vmem:[%s5 + $0x18] sm:$0xf]
    %v482 = vld [vmem:[%s5 + $0x1c] sm:$0xf]
    %v483 = vld [vmem:[%s5 + $0x20] sm:$0xf]
    %v484 = vld [vmem:[%s5 + $0x24] sm:$0xf]
    %v485 = vld [vmem:[%s5 + $0x28] sm:$0xf]
    %v486 = vld [vmem:[%s5 + $0x2c] sm:$0xf]
    %v487 = vld [vmem:[%s5 + $0x30] sm:$0xf]
    %v488 = vld [vmem:[%s5 + $0x34] sm:$0xf]
    %v489 = vld [vmem:[%s5 + $0x38] sm:$0xf]
    %v490 = vld [vmem:[%s5 + $0x3c] sm:$0xf]
    %v491 = vld [vmem:[%s5 + $0x40] sm:$0xf]
    %v492 = vld [vmem:[%s5 + $0x44] sm:$0xf]
    %v493 = vld [vmem:[%s5 + $0x48] sm:$0xf]
    %v494 = vld [vmem:[%s5 + $0x4c] sm:$0xf]
    %v495 = vld [vmem:[%s5 + $0x50] sm:$0xf]
    %v496 = vld [vmem:[%s5 + $0x54] sm:$0xf]
    %v497 = vld [vmem:[%s5 + $0x58] sm:$0xf]
    %v498 = vld [vmem:[%s5 + $0x5c] sm:$0xf]
    %v499 = vld [vmem:[%s5 + $0x60] sm:$0xf]
    %v500 = vld [vmem:[%s5 + $0x64] sm:$0xf]
    %v501 = vld [vmem:[%s5 + $0x68] sm:$0xf]
    %v502 = vld [vmem:[%s5 + $0x6c] sm:$0xf]
    %v503 = vld [vmem:[%s5 + $0x70] sm:$0xf]
    %v504 = vld [vmem:[%s5 + $0x74] sm:$0xf]
    %v505 = vld [vmem:[%s5 + $0x78] sm:$0xf]
    %v506 = vld [vmem:[%s5 + $0x7c] sm:$0xf]
    %v507 = vld [vmem:[#allocation2] sm:$0x1]
    %v509 = vlaneseq
    %v510 = vshrl.u32 %v509, 7
    %v511 = vsub.s32 0, %v510
    %v512 = vrot.slane %v507, %v511
    %v546 = vunpack.c.l.b16 %v475
    %v547 = vunpack.c.l.b16 %v476
    %v548 = vunpack.c.l.b16 %v477
    %v549 = vunpack.c.l.b16 %v478
    %v550 = vunpack.c.l.b16 %v479
    %v551 = vunpack.c.l.b16 %v480
    %v552 = vunpack.c.l.b16 %v481
    %v553 = vunpack.c.l.b16 %v482
    %v554 = vunpack.c.l.b16 %v483
    %v555 = vunpack.c.l.b16 %v484
    %v556 = vunpack.c.l.b16 %v485
    %v557 = vunpack.c.l.b16 %v486
    %v558 = vunpack.c.l.b16 %v487
    %v559 = vunpack.c.l.b16 %v488
    %v560 = vunpack.c.l.b16 %v489
    %v561 = vunpack.c.l.b16 %v490
    %v562 = vunpack.c.l.b16 %v491
    %v563 = vunpack.c.l.b16 %v492
    %v564 = vunpack.c.l.b16 %v493
    %v565 = vunpack.c.l.b16 %v494
    %v566 = vunpack.c.l.b16 %v495
    %v567 = vunpack.c.l.b16 %v496
    %v568 = vunpack.c.l.b16 %v497
    %v569 = vunpack.c.l.b16 %v498
    %v570 = vunpack.c.l.b16 %v499
    %v571 = vunpack.c.l.b16 %v500
    %v572 = vunpack.c.l.b16 %v501
    %v573 = vunpack.c.l.b16 %v502
    %v574 = vunpack.c.l.b16 %v503
    %v575 = vunpack.c.l.b16 %v504
    %v576 = vunpack.c.l.b16 %v505
    %v577 = vunpack.c.l.b16 %v506
    %v578 = vpack.c.b16 %v547, %v546
    %v579 = vpack.c.b16 %v549, %v548
    %v580 = vpack.c.b16 %v551, %v550
    %v581 = vpack.c.b16 %v553, %v552
    %v582 = vpack.c.b16 %v555, %v554
    %v583 = vpack.c.b16 %v557, %v556
    %v584 = vpack.c.b16 %v559, %v558
    %v585 = vpack.c.b16 %v561, %v560
    %v586 = vpack.c.b16 %v563, %v562
    %v587 = vpack.c.b16 %v565, %v564
    %v588 = vpack.c.b16 %v567, %v566
    %v589 = vpack.c.b16 %v569, %v568
    %v590 = vpack.c.b16 %v571, %v570
    %v591 = vpack.c.b16 %v573, %v572
    %v592 = vpack.c.b16 %v575, %v574
    %v593 = vpack.c.b16 %v577, %v576
    %610 = vmatprep.subr.bf16.mxu0 0
    %611 = vmatpush1.bf16.msra.mxu0 %v578
    %612 = vmatprep.subr.bf16.mxu0 0
    %613 = vmatpush1.bf16.msra.mxu0 %v579
    %614 = vmatprep.subr.bf16.mxu0 0
    %615 = vmatpush1.bf16.msra.mxu0 %v580
    %616 = vmatprep.subr.bf16.mxu0 0
    %617 = vmatpush1.bf16.msra.mxu0 %v581
    %618 = vmatprep.subr.bf16.mxu0 0
    %619 = vmatpush1.bf16.msra.mxu0 %v582
    %620 = vmatprep.subr.bf16.mxu0 0
    %621 = vmatpush1.bf16.msra.mxu0 %v583
    %622 = vmatprep.subr.bf16.mxu0 0
    %623 = vmatpush1.bf16.msra.mxu0 %v584
    %624 = vmatprep.subr.bf16.mxu0 0
    %625 = vmatpush1.bf16.msra.mxu0 %v585
    %626 = vmatprep.subr.bf16.mxu0 0
    %627 = vmatpush1.bf16.msra.mxu0 %v586
    %628 = vmatprep.subr.bf16.mxu0 0
    %629 = vmatpush1.bf16.msra.mxu0 %v587
    %630 = vmatprep.subr.bf16.mxu0 0
    %631 = vmatpush1.bf16.msra.mxu0 %v588
    %632 = vmatprep.subr.bf16.mxu0 0
    %633 = vmatpush1.bf16.msra.mxu0 %v589
    %634 = vmatprep.subr.bf16.mxu0 0
    %635 = vmatpush1.bf16.msra.mxu0 %v590
    %636 = vmatprep.subr.bf16.mxu0 0
    %637 = vmatpush1.bf16.msra.mxu0 %v591
    %638 = vmatprep.subr.bf16.mxu0 0
    %639 = vmatpush1.bf16.msra.mxu0 %v592
    %640 = vmatprep.subr.bf16.mxu0 0
    %641 = vmatpush1.bf16.msra.mxu0 %v593
    %642 = vmatprep.mubr.bf16.mxu0 %v255
    %643 = vmatmul.mubr.bf16.gmra.mrb[0].mxu0 %v254
    %v644 = vpop.f32.mrb[0].mxu0
    %v645 = vadd.f32 %v512, %v644
    %v646 = vpop.f32.mrb[0].mxu0
    %v647 = vpop.f32.mrb[0].mxu0
    %v648 = vadd.f32 %v512, %v647
    %v649 = vpop.f32.mrb[0].mxu0
    %650 = vmatprep.mubr.bf16.mxu0 %v257
    %651 = vmatmul.mubr.bf16.gmra.mrb[0].mxu0 %v256
    %v652 = vpop.f32.mrb[0].mxu0
    %v653 = vadd.f32 %v512, %v652
    %v654 = vpop.f32.mrb[0].mxu0
    %v655 = vpop.f32.mrb[0].mxu0
    %v656 = vadd.f32 %v512, %v655
    %v657 = vpop.f32.mrb[0].mxu0
    %658 = vdwg.mxu0
    %v659 = vld [vmem:[%s2] sm:$0x1]
    %v660 = vmax.f32 %v645, %v653
    %v661 = vmax.f32 %v648, %v656
    %v663 = vlaneseq
    %v664 = vshrl.u32 %v663, 7
    %v665 = vsub.s32 0, %v664
    %v666 = vrot.slane %v659, %v665
    %v668 = vmax.f32 %v660, %v666
    %v669 = vmax.f32 %v661, %v666
    %v670 = vsub.f32 %v666, %v668
    %v671 = vsub.f32 %v666, %v669
    %v672 = vmul.f32 %v670, 1.442695
    %v673 = vpow.pop %v672
    %v674 = vmul.f32 %v671, 1.442695
    %v675 = vpow.pop %v674
    %v676 = vsub.f32 %v645, %v668
    %v677 = vsub.f32 %v648, %v669
    %v678 = vmul.f32 %v676, 1.442695
    %v679 = vpow.pop %v678
    %v680 = vmul.f32 %v677, 1.442695
    %v681 = vpow.pop %v680
    %v682 = vsub.f32 %v653, %v668
    %v683 = vsub.f32 %v656, %v669
    %v684 = vmul.f32 %v682, 1.442695
    %v685 = vpow.pop %v684
    %v686 = vmul.f32 %v683, 1.442695
    %v687 = vpow.pop %v686
    %v688 = vadd.f32 %v673, %v679
    %v689 = vadd.f32 %v675, %v681
    %v690 = vadd.f32 %v688, %v685
    %v691 = vadd.f32 %v689, %v687
    %v692 = vrcp.pop %v690
    %v693 = vrcp.pop %v691
    %v694 = vmul.f32 %v673, %v692
    %v695 = vmul.f32 %v675, %v693
    %v696 = vmul.f32 %v679, %v692
    %v697 = vmul.f32 %v681, %v693
    %v698 = vmul.f32 %v685, %v692
    %v699 = vmul.f32 %v687, %v693
    %v700 = vld [vmem:[%s4] sm:$0xff]
    %v701 = vld [vmem:[%s4 + $0x8] sm:$0xff]
    %v702 = vld [vmem:[%s3] sm:$0xff]
    %v703 = vld [vmem:[%s3 + $0x8] sm:$0xff]
    %vm704 = vcmask 64512
    %v706 = vsel %vm704, %v696, 0
    %v709 = vsel %vm704, %v697, 0
    %711 = vmatprep.subr.mxu0 %v701
    %712 = vmatpush1.msra.mxu0 %v700
    %713 = vmatprep.subr.mxu0 0.0
    %714 = vmatpush1.msra.mxu0 0.0
    %715 = vmatprep.subr.mxu0 0.0
    %716 = vmatpush1.msra.mxu0 0.0
    %717 = vmatprep.subr.mxu0 0.0
    %718 = vmatpush1.msra.mxu0 0.0
    %719 = vmatprep.subr.mxu0 0.0
    %720 = vmatpush1.msra.mxu0 0.0
    %721 = vmatprep.subr.mxu0 0.0
    %722 = vmatpush1.msra.mxu0 0.0
    %723 = vmatprep.subr.mxu0 0.0
    %724 = vmatpush1.msra.mxu0 0.0
    %725 = vmatprep.subr.mxu0 0.0
    %726 = vmatpush1.msra.mxu0 0.0
    %727 = vmatprep.subr.mxu0 0.0
    %728 = vmatpush1.msra.mxu0 0.0
    %729 = vmatprep.subr.mxu0 0.0
    %730 = vmatpush1.msra.mxu0 0.0
    %731 = vmatprep.subr.mxu0 0.0
    %732 = vmatpush1.msra.mxu0 0.0
    %733 = vmatprep.subr.mxu0 0.0
    %734 = vmatpush1.msra.mxu0 0.0
    %735 = vmatprep.subr.mxu0 0.0
    %736 = vmatpush1.msra.mxu0 0.0
    %737 = vmatprep.subr.mxu0 0.0
    %738 = vmatpush1.msra.mxu0 0.0
    %739 = vmatprep.subr.mxu0 0.0
    %740 = vmatpush1.msra.mxu0 0.0
    %741 = vmatprep.subr.mxu0 0.0
    %742 = vmatpush1.msra.mxu0 0.0
    %743 = vmatprep.subr.mxu0 0.0
    %744 = vmatpush1.msra.mxu0 0.0
    %745 = vmatprep.subr.mxu0 0.0
    %746 = vmatpush1.msra.mxu0 0.0
    %747 = vmatprep.subr.mxu0 0.0
    %748 = vmatpush1.msra.mxu0 0.0
    %749 = vmatprep.subr.mxu0 0.0
    %750 = vmatpush1.msra.mxu0 0.0
    %751 = vmatprep.subr.mxu0 0.0
    %752 = vmatpush1.msra.mxu0 0.0
    %753 = vmatprep.subr.mxu0 0.0
    %754 = vmatpush1.msra.mxu0 0.0
    %755 = vmatprep.subr.mxu0 0.0
    %756 = vmatpush1.msra.mxu0 0.0
    %757 = vmatprep.subr.mxu0 0.0
    %758 = vmatpush1.msra.mxu0 0.0
    %759 = vmatprep.subr.mxu0 0.0
    %760 = vmatpush1.msra.mxu0 0.0
    %761 = vmatprep.subr.mxu0 0.0
    %762 = vmatpush1.msra.mxu0 0.0
    %763 = vmatprep.subr.mxu0 0.0
    %764 = vmatpush1.msra.mxu0 0.0
    %765 = vmatprep.subr.mxu0 0.0
    %766 = vmatpush1.msra.mxu0 0.0
    %767 = vmatprep.subr.mxu0 0.0
    %768 = vmatpush1.msra.mxu0 0.0
    %769 = vmatprep.subr.mxu0 0.0
    %770 = vmatpush1.msra.mxu0 0.0
    %771 = vmatprep.subr.mxu0 0.0
    %772 = vmatpush1.msra.mxu0 0.0
    %773 = vmatprep.subr.mxu0 0.0
    %774 = vmatpush1.msra.mxu0 0.0
    %775 = vmatprep.mubr.f32.mxu0 0.0
    %776 = vmatmul.mubr.f32.gmra.mrb[0].mxu0 %v706
    %v777 = vpop.f32.mrb[0].mxu0
    %v778 = vadd.f32 0.0, %v777
    %v779 = vpop.f32.mrb[0].mxu0
    %v780 = vadd.f32 0.0, %v779
    %781 = vmatprep.mubr.f32.mxu0 0.0
    %782 = vmatmul.mubr.f32.gmra.mrb[0].mxu0 %v709
    %v783 = vpop.f32.mrb[0].mxu0
    %v784 = vadd.f32 0.0, %v783
    %v785 = vpop.f32.mrb[0].mxu0
    %v786 = vadd.f32 0.0, %v785
    %787 = vdwg.mxu0
    %v788 = vmul.f32 %v778, %v457
    %v789 = vmul.f32 %v780, %v459
    %v790 = vmul.f32 %v784, %v461
    %v791 = vmul.f32 %v786, %v463
    %v793 = vsel %vm704, %v694, 0
    %v796 = vsel %vm704, %v695, 0
    %798 = vmatprep.subr.mxu0 %v703
    %799 = vmatpush1.msra.mxu0 %v702
    %800 = vmatprep.subr.mxu0 0.0
    %801 = vmatpush1.msra.mxu0 0.0
    %802 = vmatprep.subr.mxu0 0.0
    %803 = vmatpush1.msra.mxu0 0.0
    %804 = vmatprep.subr.mxu0 0.0
    %805 = vmatpush1.msra.mxu0 0.0
    %806 = vmatprep.subr.mxu0 0.0
    %807 = vmatpush1.msra.mxu0 0.0
    %808 = vmatprep.subr.mxu0 0.0
    %809 = vmatpush1.msra.mxu0 0.0
    %810 = vmatprep.subr.mxu0 0.0
    %811 = vmatpush1.msra.mxu0 0.0
    %812 = vmatprep.subr.mxu0 0.0
    %813 = vmatpush1.msra.mxu0 0.0
    %814 = vmatprep.subr.mxu0 0.0
    %815 = vmatpush1.msra.mxu0 0.0
    %816 = vmatprep.subr.mxu0 0.0
    %817 = vmatpush1.msra.mxu0 0.0
    %818 = vmatprep.subr.mxu0 0.0
    %819 = vmatpush1.msra.mxu0 0.0
    %820 = vmatprep.subr.mxu0 0.0
    %821 = vmatpush1.msra.mxu0 0.0
    %822 = vmatprep.subr.mxu0 0.0
    %823 = vmatpush1.msra.mxu0 0.0
    %824 = vmatprep.subr.mxu0 0.0
    %825 = vmatpush1.msra.mxu0 0.0
    %826 = vmatprep.subr.mxu0 0.0
    %827 = vmatpush1.msra.mxu0 0.0
    %828 = vmatprep.subr.mxu0 0.0
    %829 = vmatpush1.msra.mxu0 0.0
    %830 = vmatprep.subr.mxu0 0.0
    %831 = vmatpush1.msra.mxu0 0.0
    %832 = vmatprep.subr.mxu0 0.0
    %833 = vmatpush1.msra.mxu0 0.0
    %834 = vmatprep.subr.mxu0 0.0
    %835 = vmatpush1.msra.mxu0 0.0
    %836 = vmatprep.subr.mxu0 0.0
    %837 = vmatpush1.msra.mxu0 0.0
    %838 = vmatprep.subr.mxu0 0.0
    %839 = vmatpush1.msra.mxu0 0.0
    %840 = vmatprep.subr.mxu0 0.0
    %841 = vmatpush1.msra.mxu0 0.0
    %842 = vmatprep.subr.mxu0 0.0
    %843 = vmatpush1.msra.mxu0 0.0
    %844 = vmatprep.subr.mxu0 0.0
    %845 = vmatpush1.msra.mxu0 0.0
    %846 = vmatprep.subr.mxu0 0.0
    %847 = vmatpush1.msra.mxu0 0.0
    %848 = vmatprep.subr.mxu0 0.0
    %849 = vmatpush1.msra.mxu0 0.0
    %850 = vmatprep.subr.mxu0 0.0
    %851 = vmatpush1.msra.mxu0 0.0
    %852 = vmatprep.subr.mxu0 0.0
    %853 = vmatpush1.msra.mxu0 0.0
    %854 = vmatprep.subr.mxu0 0.0
    %855 = vmatpush1.msra.mxu0 0.0
    %856 = vmatprep.subr.mxu0 0.0
    %857 = vmatpush1.msra.mxu0 0.0
    %858 = vmatprep.subr.mxu0 0.0
    %859 = vmatpush1.msra.mxu0 0.0
    %860 = vmatprep.subr.mxu0 0.0
    %861 = vmatpush1.msra.mxu0 0.0
    %862 = vmatprep.mubr.f32.mxu0 0.0
    %863 = vmatmul.mubr.f32.gmra.mrb[0].mxu0 %v793
    %v864 = vpop.f32.mrb[0].mxu0
    %v865 = vadd.f32 %v788, %v864
    %v866 = vpop.f32.mrb[0].mxu0
    %v867 = vadd.f32 %v789, %v866
    %868 = vmatprep.mubr.f32.mxu0 0.0
    %869 = vmatmul.mubr.f32.gmra.mrb[0].mxu0 %v796
    %v870 = vpop.f32.mrb[0].mxu0
    %v871 = vadd.f32 %v790, %v870
    %v872 = vpop.f32.mrb[0].mxu0
    %v873 = vadd.f32 %v791, %v872
    %874 = vdwg.mxu0
    %v876 = vsel %vm704, %v698, 0
    %v879 = vsel %vm704, %v699, 0
    %881 = vmatprep.subr.mxu0 %v701
    %882 = vmatpush1.msra.mxu0 %v700
    %883 = vmatprep.subr.mxu0 0.0
    %884 = vmatpush1.msra.mxu0 0.0
    %885 = vmatprep.subr.mxu0 0.0
    %886 = vmatpush1.msra.mxu0 0.0
    %887 = vmatprep.subr.mxu0 0.0
    %888 = vmatpush1.msra.mxu0 0.0
    %889 = vmatprep.subr.mxu0 0.0
    %890 = vmatpush1.msra.mxu0 0.0
    %891 = vmatprep.subr.mxu0 0.0
    %892 = vmatpush1.msra.mxu0 0.0
    %893 = vmatprep.subr.mxu0 0.0
    %894 = vmatpush1.msra.mxu0 0.0
    %895 = vmatprep.subr.mxu0 0.0
    %896 = vmatpush1.msra.mxu0 0.0
    %897 = vmatprep.subr.mxu0 0.0
    %898 = vmatpush1.msra.mxu0 0.0
    %899 = vmatprep.subr.mxu0 0.0
    %900 = vmatpush1.msra.mxu0 0.0
    %901 = vmatprep.subr.mxu0 0.0
    %902 = vmatpush1.msra.mxu0 0.0
    %903 = vmatprep.subr.mxu0 0.0
    %904 = vmatpush1.msra.mxu0 0.0
    %905 = vmatprep.subr.mxu0 0.0
    %906 = vmatpush1.msra.mxu0 0.0
    %907 = vmatprep.subr.mxu0 0.0
    %908 = vmatpush1.msra.mxu0 0.0
    %909 = vmatprep.subr.mxu0 0.0
    %910 = vmatpush1.msra.mxu0 0.0
    %911 = vmatprep.subr.mxu0 0.0
    %912 = vmatpush1.msra.mxu0 0.0
    %913 = vmatprep.subr.mxu0 0.0
    %914 = vmatpush1.msra.mxu0 0.0
    %915 = vmatprep.subr.mxu0 0.0
    %916 = vmatpush1.msra.mxu0 0.0
    %917 = vmatprep.subr.mxu0 0.0
    %918 = vmatpush1.msra.mxu0 0.0
    %919 = vmatprep.subr.mxu0 0.0
    %920 = vmatpush1.msra.mxu0 0.0
    %921 = vmatprep.subr.mxu0 0.0
    %922 = vmatpush1.msra.mxu0 0.0
    %923 = vmatprep.subr.mxu0 0.0
    %924 = vmatpush1.msra.mxu0 0.0
    %925 = vmatprep.subr.mxu0 0.0
    %926 = vmatpush1.msra.mxu0 0.0
    %927 = vmatprep.subr.mxu0 0.0
    %928 = vmatpush1.msra.mxu0 0.0
    %929 = vmatprep.subr.mxu0 0.0
    %930 = vmatpush1.msra.mxu0 0.0
    %931 = vmatprep.subr.mxu0 0.0
    %932 = vmatpush1.msra.mxu0 0.0
    %933 = vmatprep.subr.mxu0 0.0
    %934 = vmatpush1.msra.mxu0 0.0
    %935 = vmatprep.subr.mxu0 0.0
    %936 = vmatpush1.msra.mxu0 0.0
    %937 = vmatprep.subr.mxu0 0.0
    %938 = vmatpush1.msra.mxu0 0.0
    %939 = vmatprep.subr.mxu0 0.0
    %940 = vmatpush1.msra.mxu0 0.0
    %941 = vmatprep.subr.mxu0 0.0
    %942 = vmatpush1.msra.mxu0 0.0
    %943 = vmatprep.subr.mxu0 0.0
    %944 = vmatpush1.msra.mxu0 0.0
    %945 = vmatprep.mubr.f32.mxu0 0.0
    %946 = vmatmul.mubr.f32.gmra.mrb[0].mxu0 %v876
    %v947 = vpop.f32.mrb[0].mxu0
    %v948 = vadd.f32 0.0, %v947
    %v949 = vpop.f32.mrb[0].mxu0
    %v950 = vadd.f32 0.0, %v949
    %951 = vmatprep.mubr.f32.mxu0 0.0
    %952 = vmatmul.mubr.f32.gmra.mrb[0].mxu0 %v879
    %v953 = vpop.f32.mrb[0].mxu0
    %v954 = vadd.f32 0.0, %v953
    %v955 = vpop.f32.mrb[0].mxu0
    %v956 = vadd.f32 0.0, %v955
    %957 = vdwg.mxu0
    %v958 = vmul.f32 %v948, %v467
    %v959 = vmul.f32 %v950, %v469
    %v960 = vmul.f32 %v954, %v471
    %v961 = vmul.f32 %v956, %v473
    %v962 = vadd.f32 %v865, %v958
    %v963 = vadd.f32 %v867, %v959
    %v964 = vadd.f32 %v871, %v960
    %v965 = vadd.f32 %v873, %v961
    %v966 = vpack.c.bf16 %v964, %v962
    %v967 = vpack.c.bf16 %v965, %v963
    %v968 = vld [vmem:[#allocation7] sm:$0xff]
    %v969 = vld [vmem:[#allocation7 + $0x8] sm:$0xff]
    %v970 = vld [vmem:[#allocation7 + $0x10] sm:$0xff]
    %v971 = vld [vmem:[#allocation7 + $0x18] sm:$0xff]
    %v972 = vld [vmem:[#allocation7 + $0x20] sm:$0xff]
    %v973 = vld [vmem:[#allocation7 + $0x28] sm:$0xff]
    %v974 = vld [vmem:[#allocation7 + $0x30] sm:$0xff]
    %v975 = vld [vmem:[#allocation7 + $0x38] sm:$0xff]
    %v976 = vld [vmem:[#allocation7 + $0x40] sm:$0xff]
    %v977 = vld [vmem:[#allocation7 + $0x48] sm:$0xff]
    %v978 = vld [vmem:[#allocation7 + $0x50] sm:$0xff]
    %v979 = vld [vmem:[#allocation7 + $0x58] sm:$0xff]
    %v980 = vld [vmem:[#allocation7 + $0x60] sm:$0xff]
    %v981 = vld [vmem:[#allocation7 + $0x68] sm:$0xff]
    %v982 = vld [vmem:[#allocation7 + $0x70] sm:$0xff]
    %v983 = vld [vmem:[#allocation7 + $0x78] sm:$0xff]
    %v984 = vld [vmem:[#allocation7 + $0x80] sm:$0xff]
    %v985 = vld [vmem:[#allocation7 + $0x88] sm:$0xff]
    %v986 = vld [vmem:[#allocation7 + $0x90] sm:$0xff]
    %v987 = vld [vmem:[#allocation7 + $0x98] sm:$0xff]
    %v988 = vld [vmem:[#allocation7 + $0xa0] sm:$0xff]
    %v989 = vld [vmem:[#allocation7 + $0xa8] sm:$0xff]
    %v990 = vld [vmem:[#allocation7 + $0xb0] sm:$0xff]
    %v991 = vld [vmem:[#allocation7 + $0xb8] sm:$0xff]
    %v992 = vld [vmem:[#allocation7 + $0xc0] sm:$0xff]
    %v993 = vld [vmem:[#allocation7 + $0xc8] sm:$0xff]
    %v994 = vld [vmem:[#allocation7 + $0xd0] sm:$0xff]
    %v995 = vld [vmem:[#allocation7 + $0xd8] sm:$0xff]
    %v996 = vld [vmem:[#allocation7 + $0xe0] sm:$0xff]
    %v997 = vld [vmem:[#allocation7 + $0xe8] sm:$0xff]
    %v998 = vld [vmem:[#allocation7 + $0xf0] sm:$0xff]
    %v999 = vld [vmem:[#allocation7 + $0xf8] sm:$0xff]
    %v1000 = vld [vmem:[%s10] sm:$0x3]
    %v1002 = vlaneseq
    %v1003 = vshrl.u32 %v1002, 7
    %v1004 = vsub.s32 0, %v1003
    %v1005 = vrot.slane %v1000, %v1004
    %v1006 = vlaneseq
    %v1007 = vshrl.u32 %v1006, 7
    %v1008 = vsub.s32 1, %v1007
    %v1009 = vrot.slane %v1000, %v1008
    %v1044 = vunpack.c.l.b16 %v968
    %v1045 = vunpack.c.h.b16 %v968
    %v1046 = vunpack.c.l.b16 %v969
    %v1047 = vunpack.c.h.b16 %v969
    %v1048 = vunpack.c.l.b16 %v970
    %v1049 = vunpack.c.h.b16 %v970
    %v1050 = vunpack.c.l.b16 %v971
    %v1051 = vunpack.c.h.b16 %v971
    %v1052 = vunpack.c.l.b16 %v972
    %v1053 = vunpack.c.h.b16 %v972
    %v1054 = vunpack.c.l.b16 %v973
    %v1055 = vunpack.c.h.b16 %v973
    %v1056 = vunpack.c.l.b16 %v974
    %v1057 = vunpack.c.h.b16 %v974
    %v1058 = vunpack.c.l.b16 %v975
    %v1059 = vunpack.c.h.b16 %v975
    %v1060 = vunpack.c.l.b16 %v976
    %v1061 = vunpack.c.h.b16 %v976
    %v1062 = vunpack.c.l.b16 %v977
    %v1063 = vunpack.c.h.b16 %v977
    %v1064 = vunpack.c.l.b16 %v978
    %v1065 = vunpack.c.h.b16 %v978
    %v1066 = vunpack.c.l.b16 %v979
    %v1067 = vunpack.c.h.b16 %v979
    %v1068 = vunpack.c.l.b16 %v980
    %v1069 = vunpack.c.h.b16 %v980
    %v1070 = vunpack.c.l.b16 %v981
    %v1071 = vunpack.c.h.b16 %v981
    %v1072 = vunpack.c.l.b16 %v982
    %v1073 = vunpack.c.h.b16 %v982
    %v1074 = vunpack.c.l.b16 %v983
    %v1075 = vunpack.c.h.b16 %v983
    %v1076 = vunpack.c.l.b16 %v984
    %v1077 = vunpack.c.h.b16 %v984
    %v1078 = vunpack.c.l.b16 %v985
    %v1079 = vunpack.c.h.b16 %v985
    %v1080 = vunpack.c.l.b16 %v986
    %v1081 = vunpack.c.h.b16 %v986
    %v1082 = vunpack.c.l.b16 %v987
    %v1083 = vunpack.c.h.b16 %v987
    %v1084 = vunpack.c.l.b16 %v988
    %v1085 = vunpack.c.h.b16 %v988
    %v1086 = vunpack.c.l.b16 %v989
    %v1087 = vunpack.c.h.b16 %v989
    %v1088 = vunpack.c.l.b16 %v990
    %v1089 = vunpack.c.h.b16 %v990
    %v1090 = vunpack.c.l.b16 %v991
    %v1091 = vunpack.c.h.b16 %v991
    %v1092 = vunpack.c.l.b16 %v992
    %v1093 = vunpack.c.h.b16 %v992
    %v1094 = vunpack.c.l.b16 %v993
    %v1095 = vunpack.c.h.b16 %v993
    %v1096 = vunpack.c.l.b16 %v994
    %v1097 = vunpack.c.h.b16 %v994
    %v1098 = vunpack.c.l.b16 %v995
    %v1099 = vunpack.c.h.b16 %v995
    %v1100 = vunpack.c.l.b16 %v996
    %v1101 = vunpack.c.h.b16 %v996
    %v1102 = vunpack.c.l.b16 %v997
    %v1103 = vunpack.c.h.b16 %v997
    %v1104 = vunpack.c.l.b16 %v998
    %v1105 = vunpack.c.h.b16 %v998
    %v1106 = vunpack.c.l.b16 %v999
    %v1107 = vunpack.c.h.b16 %v999
    %v1108 = vpack.c.b16 %v1046, %v1044
    %v1109 = vpack.c.b16 %v1047, %v1045
    %v1110 = vpack.c.b16 %v1050, %v1048
    %v1111 = vpack.c.b16 %v1051, %v1049
    %v1112 = vpack.c.b16 %v1054, %v1052
    %v1113 = vpack.c.b16 %v1055, %v1053
    %v1114 = vpack.c.b16 %v1058, %v1056
    %v1115 = vpack.c.b16 %v1059, %v1057
    %v1116 = vpack.c.b16 %v1062, %v1060
    %v1117 = vpack.c.b16 %v1063, %v1061
    %v1118 = vpack.c.b16 %v1066, %v1064
    %v1119 = vpack.c.b16 %v1067, %v1065
    %v1120 = vpack.c.b16 %v1070, %v1068
    %v1121 = vpack.c.b16 %v1071, %v1069
    %v1122 = vpack.c.b16 %v1074, %v1072
    %v1123 = vpack.c.b16 %v1075, %v1073
    %v1124 = vpack.c.b16 %v1078, %v1076
    %v1125 = vpack.c.b16 %v1079, %v1077
    %v1126 = vpack.c.b16 %v1082, %v1080
    %v1127 = vpack.c.b16 %v1083, %v1081
    %v1128 = vpack.c.b16 %v1086, %v1084
    %v1129 = vpack.c.b16 %v1087, %v1085
    %v1130 = vpack.c.b16 %v1090, %v1088
    %v1131 = vpack.c.b16 %v1091, %v1089
    %v1132 = vpack.c.b16 %v1094, %v1092
    %v1133 = vpack.c.b16 %v1095, %v1093
    %v1134 = vpack.c.b16 %v1098, %v1096
    %v1135 = vpack.c.b16 %v1099, %v1097
    %v1136 = vpack.c.b16 %v1102, %v1100
    %v1137 = vpack.c.b16 %v1103, %v1101
    %v1138 = vpack.c.b16 %v1106, %v1104
    %v1139 = vpack.c.b16 %v1107, %v1105
    %1172 = vmatprep.subr.bf16.mxu0 %v1109
    %1173 = vmatpush1.bf16.msra.mxu0 %v1108
    %1174 = vmatprep.subr.bf16.mxu0 %v1111
    %1175 = vmatpush1.bf16.msra.mxu0 %v1110
    %1176 = vmatprep.subr.bf16.mxu0 %v1113
    %1177 = vmatpush1.bf16.msra.mxu0 %v1112
    %1178 = vmatprep.subr.bf16.mxu0 %v1115
    %1179 = vmatpush1.bf16.msra.mxu0 %v1114
    %1180 = vmatprep.subr.bf16.mxu0 %v1117
    %1181 = vmatpush1.bf16.msra.mxu0 %v1116
    %1182 = vmatprep.subr.bf16.mxu0 %v1119
    %1183 = vmatpush1.bf16.msra.mxu0 %v1118
    %1184 = vmatprep.subr.bf16.mxu0 %v1121
    %1185 = vmatpush1.bf16.msra.mxu0 %v1120
    %1186 = vmatprep.subr.bf16.mxu0 %v1123
    %1187 = vmatpush1.bf16.msra.mxu0 %v1122
    %1188 = vmatprep.subr.bf16.mxu0 %v1125
    %1189 = vmatpush1.bf16.msra.mxu0 %v1124
    %1190 = vmatprep.subr.bf16.mxu0 %v1127
    %1191 = vmatpush1.bf16.msra.mxu0 %v1126
    %1192 = vmatprep.subr.bf16.mxu0 %v1129
    %1193 = vmatpush1.bf16.msra.mxu0 %v1128
    %1194 = vmatprep.subr.bf16.mxu0 %v1131
    %1195 = vmatpush1.bf16.msra.mxu0 %v1130
    %1196 = vmatprep.subr.bf16.mxu0 %v1133
    %1197 = vmatpush1.bf16.msra.mxu0 %v1132
    %1198 = vmatprep.subr.bf16.mxu0 %v1135
    %1199 = vmatpush1.bf16.msra.mxu0 %v1134
    %1200 = vmatprep.subr.bf16.mxu0 %v1137
    %1201 = vmatpush1.bf16.msra.mxu0 %v1136
    %1202 = vmatprep.subr.bf16.mxu0 %v1139
    %1203 = vmatpush1.bf16.msra.mxu0 %v1138
    %1204 = vmatprep.mubr.bf16.mxu0 %v967
    %1205 = vmatmul.mubr.bf16.gmra.mrb[0].mxu0 %v966
    %v1206 = vpop.f32.mrb[0].mxu0
    %v1207 = vadd.f32 %v1005, %v1206
    %v1208 = vpop.f32.mrb[0].mxu0
    %v1209 = vadd.f32 %v1009, %v1208
    %v1210 = vpop.f32.mrb[0].mxu0
    %v1211 = vadd.f32 %v1005, %v1210
    %v1212 = vpop.f32.mrb[0].mxu0
    %v1213 = vadd.f32 %v1009, %v1212
    %1214 = vdwg.mxu0
    %v1215 = vld [vmem:[%s1] sm:$0x3]
    %v1217 = vlaneseq
    %v1218 = vshrl.u32 %v1217, 7
    %v1219 = vsub.s32 0, %v1218
    %v1220 = vrot.slane %v1215, %v1219
    %v1221 = vlaneseq
    %v1222 = vshrl.u32 %v1221, 7
    %v1223 = vsub.s32 1, %v1222
    %v1224 = vrot.slane %v1215, %v1223
    %v1227 = vadd.f32 %v1220, %v1207
    %v1228 = vadd.f32 %v1224, %v1209
    %v1229 = vadd.f32 %v1220, %v1211
    %v1230 = vadd.f32 %v1224, %v1213
    %v1231 = vld [vmem:[#allocation8] sm:$0x3]
    %v1232 = vld [vmem:[#allocation10] sm:$0x3]
    %v1233 = vadd.f32 %v1227, %v1228
    %1234 = vadd.xlane.f32.xlu0 %v1233
    %v1235 = vpop.xlane.xlu0 %1234
    %v1236 = vadd.f32 %v1229, %v1230
    %1237 = vadd.xlane.f32.xlu0 %v1236
    %v1238 = vpop.xlane.xlu0 %1237
    %v1239 = vrcp.pop 256.0
    %v1240 = vmul.f32 %v1235, %v1239
    %v1241 = vmul.f32 %v1238, %v1239
    %v1242 = vsub.f32 %v1227, %v1240
    %v1243 = vsub.f32 %v1228, %v1240
    %v1244 = vsub.f32 %v1229, %v1241
    %v1245 = vsub.f32 %v1230, %v1241
    %v1246 = vmul.f32 %v1242, %v1242
    %v1247 = vmul.f32 %v1243, %v1243
    %v1248 = vmul.f32 %v1244, %v1244
    %v1249 = vmul.f32 %v1245, %v1245
    %v1250 = vadd.f32 %v1246, %v1247
    %1251 = vadd.xlane.f32.xlu0 %v1250
    %v1252 = vpop.xlane.xlu0 %1251
    %v1253 = vadd.f32 %v1248, %v1249
    %1254 = vadd.xlane.f32.xlu0 %v1253
    %v1255 = vpop.xlane.xlu0 %1254
    %v1256 = vmul.f32 %v1252, %v1239
    %v1257 = vmul.f32 %v1255, %v1239
    %v1258 = vadd.f32 %v1256, 1e-05
    %v1259 = vadd.f32 %v1257, 1e-05
    %v1260 = vrsqrt.pop %v1258
    %v1261 = vrsqrt.pop %v1259
    %v1262 = vmul.f32 %v1242, %v1260
    %v1263 = vmul.f32 %v1243, %v1260
    %v1264 = vmul.f32 %v1244, %v1261
    %v1265 = vmul.f32 %v1245, %v1261
    %v1267 = vlaneseq
    %v1268 = vshrl.u32 %v1267, 7
    %v1269 = vsub.s32 0, %v1268
    %v1270 = vrot.slane %v1231, %v1269
    %v1271 = vlaneseq
    %v1272 = vshrl.u32 %v1271, 7
    %v1273 = vsub.s32 1, %v1272
    %v1274 = vrot.slane %v1231, %v1273
    %v1277 = vmul.f32 %v1262, %v1270
    %v1278 = vmul.f32 %v1263, %v1274
    %v1279 = vmul.f32 %v1264, %v1270
    %v1280 = vmul.f32 %v1265, %v1274
    %v1282 = vlaneseq
    %v1283 = vshrl.u32 %v1282, 7
    %v1284 = vsub.s32 0, %v1283
    %v1285 = vrot.slane %v1232, %v1284
    %v1286 = vlaneseq
    %v1287 = vshrl.u32 %v1286, 7
    %v1288 = vsub.s32 1, %v1287
    %v1289 = vrot.slane %v1232, %v1288
    %v1292 = vadd.f32 %v1277, %v1285
    %v1293 = vadd.f32 %v1278, %v1289
    %v1294 = vadd.f32 %v1279, %v1285
    %v1295 = vadd.f32 %v1280, %v1289
    %v1296 = vpack.c.bf16 %v1294, %v1292
    %v1297 = vpack.c.bf16 %v1295, %v1293
    %v1298 = vld [vmem:[#allocation11] sm:$0xff]
    %v1299 = vld [vmem:[#allocation11 + $0x8] sm:$0xff]
    %v1300 = vld [vmem:[#allocation11 + $0x10] sm:$0xff]
    %v1301 = vld [vmem:[#allocation11 + $0x18] sm:$0xff]
    %v1302 = vld [vmem:[#allocation11 + $0x20] sm:$0xff]
    %v1303 = vld [vmem:[#allocation11 + $0x28] sm:$0xff]
    %v1304 = vld [vmem:[#allocation11 + $0x30] sm:$0xff]
    %v1305 = vld [vmem:[#allocation11 + $0x38] sm:$0xff]
    %v1306 = vld [vmem:[#allocation11 + $0x40] sm:$0xff]
    %v1307 = vld [vmem:[#allocation11 + $0x48] sm:$0xff]
    %v1308 = vld [vmem:[#allocation11 + $0x50] sm:$0xff]
    %v1309 = vld [vmem:[#allocation11 + $0x58] sm:$0xff]
    %v1310 = vld [vmem:[#allocation11 + $0x60] sm:$0xff]
    %v1311 = vld [vmem:[#allocation11 + $0x68] sm:$0xff]
    %v1312 = vld [vmem:[#allocation11 + $0x70] sm:$0xff]
    %v1313 = vld [vmem:[#allocation11 + $0x78] sm:$0xff]
    %v1314 = vld [vmem:[#allocation11 + $0x80] sm:$0xff]
    %v1315 = vld [vmem:[#allocation11 + $0x88] sm:$0xff]
    %v1316 = vld [vmem:[#allocation11 + $0x90] sm:$0xff]
    %v1317 = vld [vmem:[#allocation11 + $0x98] sm:$0xff]
    %v1318 = vld [vmem:[#allocation11 + $0xa0] sm:$0xff]
    %v1319 = vld [vmem:[#allocation11 + $0xa8] sm:$0xff]
    %v1320 = vld [vmem:[#allocation11 + $0xb0] sm:$0xff]
    %v1321 = vld [vmem:[#allocation11 + $0xb8] sm:$0xff]
    %v1322 = vld [vmem:[#allocation11 + $0xc0] sm:$0xff]
    %v1323 = vld [vmem:[#allocation11 + $0xc8] sm:$0xff]
    %v1324 = vld [vmem:[#allocation11 + $0xd0] sm:$0xff]
    %v1325 = vld [vmem:[#allocation11 + $0xd8] sm:$0xff]
    %v1326 = vld [vmem:[#allocation11 + $0xe0] sm:$0xff]
    %v1327 = vld [vmem:[#allocation11 + $0xe8] sm:$0xff]
    %v1328 = vld [vmem:[#allocation11 + $0xf0] sm:$0xff]
    %v1329 = vld [vmem:[#allocation11 + $0xf8] sm:$0xff]
    %v1330 = vld [vmem:[#allocation11 + $0x100] sm:$0xff]
    %v1331 = vld [vmem:[#allocation11 + $0x108] sm:$0xff]
    %v1332 = vld [vmem:[#allocation11 + $0x110] sm:$0xff]
    %v1333 = vld [vmem:[#allocation11 + $0x118] sm:$0xff]
    %v1334 = vld [vmem:[#allocation11 + $0x120] sm:$0xff]
    %v1335 = vld [vmem:[#allocation11 + $0x128] sm:$0xff]
    %v1336 = vld [vmem:[#allocation11 + $0x130] sm:$0xff]
    %v1337 = vld [vmem:[#allocation11 + $0x138] sm:$0xff]
    %v1338 = vld [vmem:[#allocation11 + $0x140] sm:$0xff]
    %v1339 = vld [vmem:[#allocation11 + $0x148] sm:$0xff]
    %v1340 = vld [vmem:[#allocation11 + $0x150] sm:$0xff]
    %v1341 = vld [vmem:[#allocation11 + $0x158] sm:$0xff]
    %v1342 = vld [vmem:[#allocation11 + $0x160] sm:$0xff]
    %v1343 = vld [vmem:[#allocation11 + $0x168] sm:$0xff]
    %v1344 = vld [vmem:[#allocation11 + $0x170] sm:$0xff]
    %v1345 = vld [vmem:[#allocation11 + $0x178] sm:$0xff]
    %v1346 = vld [vmem:[#allocation11 + $0x180] sm:$0xff]
    %v1347 = vld [vmem:[#allocation11 + $0x188] sm:$0xff]
    %v1348 = vld [vmem:[#allocation11 + $0x190] sm:$0xff]
    %v1349 = vld [vmem:[#allocation11 + $0x198] sm:$0xff]
    %v1350 = vld [vmem:[#allocation11 + $0x1a0] sm:$0xff]
    %v1351 = vld [vmem:[#allocation11 + $0x1a8] sm:$0xff]
    %v1352 = vld [vmem:[#allocation11 + $0x1b0] sm:$0xff]
    %v1353 = vld [vmem:[#allocation11 + $0x1b8] sm:$0xff]
    %v1354 = vld [vmem:[#allocation11 + $0x1c0] sm:$0xff]
    %v1355 = vld [vmem:[#allocation11 + $0x1c8] sm:$0xff]
    %v1356 = vld [vmem:[#allocation11 + $0x1d0] sm:$0xff]
    %v1357 = vld [vmem:[#allocation11 + $0x1d8] sm:$0xff]
    %v1358 = vld [vmem:[#allocation11 + $0x1e0] sm:$0xff]
    %v1359 = vld [vmem:[#allocation11 + $0x1e8] sm:$0xff]
    %v1360 = vld [vmem:[#allocation11 + $0x1f0] sm:$0xff]
    %v1361 = vld [vmem:[#allocation11 + $0x1f8] sm:$0xff]
    %v1362 = vld [vmem:[#allocation11 + $0x200] sm:$0xff]
    %v1363 = vld [vmem:[#allocation11 + $0x208] sm:$0xff]
    %v1364 = vld [vmem:[#allocation11 + $0x210] sm:$0xff]
    %v1365 = vld [vmem:[#allocation11 + $0x218] sm:$0xff]
    %v1366 = vld [vmem:[#allocation11 + $0x220] sm:$0xff]
    %v1367 = vld [vmem:[#allocation11 + $0x228] sm:$0xff]
    %v1368 = vld [vmem:[#allocation11 + $0x230] sm:$0xff]
    %v1369 = vld [vmem:[#allocation11 + $0x238] sm:$0xff]
    %v1370 = vld [vmem:[#allocation11 + $0x240] sm:$0xff]
    %v1371 = vld [vmem:[#allocation11 + $0x248] sm:$0xff]
    %v1372 = vld [vmem:[#allocation11 + $0x250] sm:$0xff]
    %v1373 = vld [vmem:[#allocation11 + $0x258] sm:$0xff]
    %v1374 = vld [vmem:[#allocation11 + $0x260] sm:$0xff]
    %v1375 = vld [vmem:[#allocation11 + $0x268] sm:$0xff]
    %v1376 = vld [vmem:[#allocation11 + $0x270] sm:$0xff]
    %v1377 = vld [vmem:[#allocation11 + $0x278] sm:$0xff]
    %v1378 = vld [vmem:[#allocation11 + $0x280] sm:$0xff]
    %v1379 = vld [vmem:[#allocation11 + $0x288] sm:$0xff]
    %v1380 = vld [vmem:[#allocation11 + $0x290] sm:$0xff]
    %v1381 = vld [vmem:[#allocation11 + $0x298] sm:$0xff]
    %v1382 = vld [vmem:[#allocation11 + $0x2a0] sm:$0xff]
    %v1383 = vld [vmem:[#allocation11 + $0x2a8] sm:$0xff]
    %v1384 = vld [vmem:[#allocation11 + $0x2b0] sm:$0xff]
    %v1385 = vld [vmem:[#allocation11 + $0x2b8] sm:$0xff]
    %v1386 = vld [vmem:[#allocation11 + $0x2c0] sm:$0xff]
    %v1387 = vld [vmem:[#allocation11 + $0x2c8] sm:$0xff]
    %v1388 = vld [vmem:[#allocation11 + $0x2d0] sm:$0xff]
    %v1389 = vld [vmem:[#allocation11 + $0x2d8] sm:$0xff]
    %v1390 = vld [vmem:[#allocation11 + $0x2e0] sm:$0xff]
    %v1391 = vld [vmem:[#allocation11 + $0x2e8] sm:$0xff]
    %v1392 = vld [vmem:[#allocation11 + $0x2f0] sm:$0xff]
    %v1393 = vld [vmem:[#allocation11 + $0x2f8] sm:$0xff]
    %v1394 = vld [vmem:[#allocation11 + $0x300] sm:$0xff]
    %v1395 = vld [vmem:[#allocation11 + $0x308] sm:$0xff]
    %v1396 = vld [vmem:[#allocation11 + $0x310] sm:$0xff]
    %v1397 = vld [vmem:[#allocation11 + $0x318] sm:$0xff]
    %v1398 = vld [vmem:[#allocation11 + $0x320] sm:$0xff]
    %v1399 = vld [vmem:[#allocation11 + $0x328] sm:$0xff]
    %v1400 = vld [vmem:[#allocation11 + $0x330] sm:$0xff]
    %v1401 = vld [vmem:[#allocation11 + $0x338] sm:$0xff]
    %v1402 = vld [vmem:[#allocation11 + $0x340] sm:$0xff]
    %v1403 = vld [vmem:[#allocation11 + $0x348] sm:$0xff]
    %v1404 = vld [vmem:[#allocation11 + $0x350] sm:$0xff]
    %v1405 = vld [vmem:[#allocation11 + $0x358] sm:$0xff]
    %v1406 = vld [vmem:[#allocation11 + $0x360] sm:$0xff]
    %v1407 = vld [vmem:[#allocation11 + $0x368] sm:$0xff]
    %v1408 = vld [vmem:[#allocation11 + $0x370] sm:$0xff]
    %v1409 = vld [vmem:[#allocation11 + $0x378] sm:$0xff]
    %v1410 = vld [vmem:[#allocation11 + $0x380] sm:$0xff]
    %v1411 = vld [vmem:[#allocation11 + $0x388] sm:$0xff]
    %v1412 = vld [vmem:[#allocation11 + $0x390] sm:$0xff]
    %v1413 = vld [vmem:[#allocation11 + $0x398] sm:$0xff]
    %v1414 = vld [vmem:[#allocation11 + $0x3a0] sm:$0xff]
    %v1415 = vld [vmem:[#allocation11 + $0x3a8] sm:$0xff]
    %v1416 = vld [vmem:[#allocation11 + $0x3b0] sm:$0xff]
    %v1417 = vld [vmem:[#allocation11 + $0x3b8] sm:$0xff]
    %v1418 = vld [vmem:[#allocation11 + $0x3c0] sm:$0xff]
    %v1419 = vld [vmem:[#allocation11 + $0x3c8] sm:$0xff]
    %v1420 = vld [vmem:[#allocation11 + $0x3d0] sm:$0xff]
    %v1421 = vld [vmem:[#allocation11 + $0x3d8] sm:$0xff]
    %v1422 = vld [vmem:[#allocation11 + $0x3e0] sm:$0xff]
    %v1423 = vld [vmem:[#allocation11 + $0x3e8] sm:$0xff]
    %v1424 = vld [vmem:[#allocation11 + $0x3f0] sm:$0xff]
    %v1425 = vld [vmem:[#allocation11 + $0x3f8] sm:$0xff]
    %v1426 = vld [vmem:[%s14] sm:$0xff]
    %v1428 = vlaneseq
    %v1429 = vshrl.u32 %v1428, 7
    %v1430 = vsub.s32 0, %v1429
    %v1431 = vrot.slane %v1426, %v1430
    %v1432 = vlaneseq
    %v1433 = vshrl.u32 %v1432, 7
    %v1434 = vsub.s32 1, %v1433
    %v1435 = vrot.slane %v1426, %v1434
    %v1436 = vlaneseq
    %v1437 = vshrl.u32 %v1436, 7
    %v1438 = vsub.s32 2, %v1437
    %v1439 = vrot.slane %v1426, %v1438
    %v1440 = vlaneseq
    %v1441 = vshrl.u32 %v1440, 7
    %v1442 = vsub.s32 3, %v1441
    %v1443 = vrot.slane %v1426, %v1442
    %v1444 = vlaneseq
    %v1445 = vshrl.u32 %v1444, 7
    %v1446 = vsub.s32 4, %v1445
    %v1447 = vrot.slane %v1426, %v1446
    %v1448 = vlaneseq
    %v1449 = vshrl.u32 %v1448, 7
    %v1450 = vsub.s32 5, %v1449
    %v1451 = vrot.slane %v1426, %v1450
    %v1452 = vlaneseq
    %v1453 = vshrl.u32 %v1452, 7
    %v1454 = vsub.s32 6, %v1453
    %v1455 = vrot.slane %v1426, %v1454
    %v1456 = vlaneseq
    %v1457 = vshrl.u32 %v1456, 7
    %v1458 = vsub.s32 7, %v1457
    %v1459 = vrot.slane %v1426, %v1458
    %v1596 = vunpack.c.l.b16 %v1298
    %v1597 = vunpack.c.h.b16 %v1298
    %v1598 = vunpack.c.l.b16 %v1299
    %v1599 = vunpack.c.h.b16 %v1299
    %v1600 = vunpack.c.l.b16 %v1300
    %v1601 = vunpack.c.h.b16 %v1300
    %v1602 = vunpack.c.l.b16 %v1301
    %v1603 = vunpack.c.h.b16 %v1301
    %v1604 = vunpack.c.l.b16 %v1302
    %v1605 = vunpack.c.h.b16 %v1302
    %v1606 = vunpack.c.l.b16 %v1303
    %v1607 = vunpack.c.h.b16 %v1303
    %v1608 = vunpack.c.l.b16 %v1304
    %v1609 = vunpack.c.h.b16 %v1304
    %v1610 = vunpack.c.l.b16 %v1305
    %v1611 = vunpack.c.h.b16 %v1305
    %v1612 = vunpack.c.l.b16 %v1306
    %v1613 = vunpack.c.h.b16 %v1306
    %v1614 = vunpack.c.l.b16 %v1307
    %v1615 = vunpack.c.h.b16 %v1307
    %v1616 = vunpack.c.l.b16 %v1308
    %v1617 = vunpack.c.h.b16 %v1308
    %v1618 = vunpack.c.l.b16 %v1309
    %v1619 = vunpack.c.h.b16 %v1309
    %v1620 = vunpack.c.l.b16 %v1310
    %v1621 = vunpack.c.h.b16 %v1310
    %v1622 = vunpack.c.l.b16 %v1311
    %v1623 = vunpack.c.h.b16 %v1311
    %v1624 = vunpack.c.l.b16 %v1312
    %v1625 = vunpack.c.h.b16 %v1312
    %v1626 = vunpack.c.l.b16 %v1313
    %v1627 = vunpack.c.h.b16 %v1313
    %v1628 = vunpack.c.l.b16 %v1314
    %v1629 = vunpack.c.h.b16 %v1314
    %v1630 = vunpack.c.l.b16 %v1315
    %v1631 = vunpack.c.h.b16 %v1315
    %v1632 = vunpack.c.l.b16 %v1316
    %v1633 = vunpack.c.h.b16 %v1316
    %v1634 = vunpack.c.l.b16 %v1317
    %v1635 = vunpack.c.h.b16 %v1317
    %v1636 = vunpack.c.l.b16 %v1318
    %v1637 = vunpack.c.h.b16 %v1318
    %v1638 = vunpack.c.l.b16 %v1319
    %v1639 = vunpack.c.h.b16 %v1319
    %v1640 = vunpack.c.l.b16 %v1320
    %v1641 = vunpack.c.h.b16 %v1320
    %v1642 = vunpack.c.l.b16 %v1321
    %v1643 = vunpack.c.h.b16 %v1321
    %v1644 = vunpack.c.l.b16 %v1322
    %v1645 = vunpack.c.h.b16 %v1322
    %v1646 = vunpack.c.l.b16 %v1323
    %v1647 = vunpack.c.h.b16 %v1323
    %v1648 = vunpack.c.l.b16 %v1324
    %v1649 = vunpack.c.h.b16 %v1324
    %v1650 = vunpack.c.l.b16 %v1325
    %v1651 = vunpack.c.h.b16 %v1325
    %v1652 = vunpack.c.l.b16 %v1326
    %v1653 = vunpack.c.h.b16 %v1326
    %v1654 = vunpack.c.l.b16 %v1327
    %v1655 = vunpack.c.h.b16 %v1327
    %v1656 = vunpack.c.l.b16 %v1328
    %v1657 = vunpack.c.h.b16 %v1328
    %v1658 = vunpack.c.l.b16 %v1329
    %v1659 = vunpack.c.h.b16 %v1329
    %v1660 = vunpack.c.l.b16 %v1330
    %v1661 = vunpack.c.h.b16 %v1330
    %v1662 = vunpack.c.l.b16 %v1331
    %v1663 = vunpack.c.h.b16 %v1331
    %v1664 = vunpack.c.l.b16 %v1332
    %v1665 = vunpack.c.h.b16 %v1332
    %v1666 = vunpack.c.l.b16 %v1333
    %v1667 = vunpack.c.h.b16 %v1333
    %v1668 = vunpack.c.l.b16 %v1334
    %v1669 = vunpack.c.h.b16 %v1334
    %v1670 = vunpack.c.l.b16 %v1335
    %v1671 = vunpack.c.h.b16 %v1335
    %v1672 = vunpack.c.l.b16 %v1336
    %v1673 = vunpack.c.h.b16 %v1336
    %v1674 = vunpack.c.l.b16 %v1337
    %v1675 = vunpack.c.h.b16 %v1337
    %v1676 = vunpack.c.l.b16 %v1338
    %v1677 = vunpack.c.h.b16 %v1338
    %v1678 = vunpack.c.l.b16 %v1339
    %v1679 = vunpack.c.h.b16 %v1339
    %v1680 = vunpack.c.l.b16 %v1340
    %v1681 = vunpack.c.h.b16 %v1340
    %v1682 = vunpack.c.l.b16 %v1341
    %v1683 = vunpack.c.h.b16 %v1341
    %v1684 = vunpack.c.l.b16 %v1342
    %v1685 = vunpack.c.h.b16 %v1342
    %v1686 = vunpack.c.l.b16 %v1343
    %v1687 = vunpack.c.h.b16 %v1343
    %v1688 = vunpack.c.l.b16 %v1344
    %v1689 = vunpack.c.h.b16 %v1344
    %v1690 = vunpack.c.l.b16 %v1345
    %v1691 = vunpack.c.h.b16 %v1345
    %v1692 = vunpack.c.l.b16 %v1346
    %v1693 = vunpack.c.h.b16 %v1346
    %v1694 = vunpack.c.l.b16 %v1347
    %v1695 = vunpack.c.h.b16 %v1347
    %v1696 = vunpack.c.l.b16 %v1348
    %v1697 = vunpack.c.h.b16 %v1348
    %v1698 = vunpack.c.l.b16 %v1349
    %v1699 = vunpack.c.h.b16 %v1349
    %v1700 = vunpack.c.l.b16 %v1350
    %v1701 = vunpack.c.h.b16 %v1350
    %v1702 = vunpack.c.l.b16 %v1351
    %v1703 = vunpack.c.h.b16 %v1351
    %v1704 = vunpack.c.l.b16 %v1352
    %v1705 = vunpack.c.h.b16 %v1352
    %v1706 = vunpack.c.l.b16 %v1353
    %v1707 = vunpack.c.h.b16 %v1353
    %v1708 = vunpack.c.l.b16 %v1354
    %v1709 = vunpack.c.h.b16 %v1354
    %v1710 = vunpack.c.l.b16 %v1355
    %v1711 = vunpack.c.h.b16 %v1355
    %v1712 = vunpack.c.l.b16 %v1356
    %v1713 = vunpack.c.h.b16 %v1356
    %v1714 = vunpack.c.l.b16 %v1357
    %v1715 = vunpack.c.h.b16 %v1357
    %v1716 = vunpack.c.l.b16 %v1358
    %v1717 = vunpack.c.h.b16 %v1358
    %v1718 = vunpack.c.l.b16 %v1359
    %v1719 = vunpack.c.h.b16 %v1359
    %v1720 = vunpack.c.l.b16 %v1360
    %v1721 = vunpack.c.h.b16 %v1360
    %v1722 = vunpack.c.l.b16 %v1361
    %v1723 = vunpack.c.h.b16 %v1361
    %v1724 = vunpack.c.l.b16 %v1362
    %v1725 = vunpack.c.h.b16 %v1362
    %v1726 = vunpack.c.l.b16 %v1363
    %v1727 = vunpack.c.h.b16 %v1363
    %v1728 = vunpack.c.l.b16 %v1364
    %v1729 = vunpack.c.h.b16 %v1364
    %v1730 = vunpack.c.l.b16 %v1365
    %v1731 = vunpack.c.h.b16 %v1365
    %v1732 = vunpack.c.l.b16 %v1366
    %v1733 = vunpack.c.h.b16 %v1366
    %v1734 = vunpack.c.l.b16 %v1367
    %v1735 = vunpack.c.h.b16 %v1367
    %v1736 = vunpack.c.l.b16 %v1368
    %v1737 = vunpack.c.h.b16 %v1368
    %v1738 = vunpack.c.l.b16 %v1369
    %v1739 = vunpack.c.h.b16 %v1369
    %v1740 = vunpack.c.l.b16 %v1370
    %v1741 = vunpack.c.h.b16 %v1370
    %v1742 = vunpack.c.l.b16 %v1371
    %v1743 = vunpack.c.h.b16 %v1371
    %v1744 = vunpack.c.l.b16 %v1372
    %v1745 = vunpack.c.h.b16 %v1372
    %v1746 = vunpack.c.l.b16 %v1373
    %v1747 = vunpack.c.h.b16 %v1373
    %v1748 = vunpack.c.l.b16 %v1374
    %v1749 = vunpack.c.h.b16 %v1374
    %v1750 = vunpack.c.l.b16 %v1375
    %v1751 = vunpack.c.h.b16 %v1375
    %v1752 = vunpack.c.l.b16 %v1376
    %v1753 = vunpack.c.h.b16 %v1376
    %v1754 = vunpack.c.l.b16 %v1377
    %v1755 = vunpack.c.h.b16 %v1377
    %v1756 = vunpack.c.l.b16 %v1378
    %v1757 = vunpack.c.h.b16 %v1378
    %v1758 = vunpack.c.l.b16 %v1379
    %v1759 = vunpack.c.h.b16 %v1379
    %v1760 = vunpack.c.l.b16 %v1380
    %v1761 = vunpack.c.h.b16 %v1380
    %v1762 = vunpack.c.l.b16 %v1381
    %v1763 = vunpack.c.h.b16 %v1381
    %v1764 = vunpack.c.l.b16 %v1382
    %v1765 = vunpack.c.h.b16 %v1382
    %v1766 = vunpack.c.l.b16 %v1383
    %v1767 = vunpack.c.h.b16 %v1383
    %v1768 = vunpack.c.l.b16 %v1384
    %v1769 = vunpack.c.h.b16 %v1384
    %v1770 = vunpack.c.l.b16 %v1385
    %v1771 = vunpack.c.h.b16 %v1385
    %v1772 = vunpack.c.l.b16 %v1386
    %v1773 = vunpack.c.h.b16 %v1386
    %v1774 = vunpack.c.l.b16 %v1387
    %v1775 = vunpack.c.h.b16 %v1387
    %v1776 = vunpack.c.l.b16 %v1388
    %v1777 = vunpack.c.h.b16 %v1388
    %v1778 = vunpack.c.l.b16 %v1389
    %v1779 = vunpack.c.h.b16 %v1389
    %v1780 = vunpack.c.l.b16 %v1390
    %v1781 = vunpack.c.h.b16 %v1390
    %v1782 = vunpack.c.l.b16 %v1391
    %v1783 = vunpack.c.h.b16 %v1391
    %v1784 = vunpack.c.l.b16 %v1392
    %v1785 = vunpack.c.h.b16 %v1392
    %v1786 = vunpack.c.l.b16 %v1393
    %v1787 = vunpack.c.h.b16 %v1393
    %v1788 = vunpack.c.l.b16 %v1394
    %v1789 = vunpack.c.h.b16 %v1394
    %v1790 = vunpack.c.l.b16 %v1395
    %v1791 = vunpack.c.h.b16 %v1395
    %v1792 = vunpack.c.l.b16 %v1396
    %v1793 = vunpack.c.h.b16 %v1396
    %v1794 = vunpack.c.l.b16 %v1397
    %v1795 = vunpack.c.h.b16 %v1397
    %v1796 = vunpack.c.l.b16 %v1398
    %v1797 = vunpack.c.h.b16 %v1398
    %v1798 = vunpack.c.l.b16 %v1399
    %v1799 = vunpack.c.h.b16 %v1399
    %v1800 = vunpack.c.l.b16 %v1400
    %v1801 = vunpack.c.h.b16 %v1400
    %v1802 = vunpack.c.l.b16 %v1401
    %v1803 = vunpack.c.h.b16 %v1401
    %v1804 = vunpack.c.l.b16 %v1402
    %v1805 = vunpack.c.h.b16 %v1402
    %v1806 = vunpack.c.l.b16 %v1403
    %v1807 = vunpack.c.h.b16 %v1403
    %v1808 = vunpack.c.l.b16 %v1404
    %v1809 = vunpack.c.h.b16 %v1404
    %v1810 = vunpack.c.l.b16 %v1405
    %v1811 = vunpack.c.h.b16 %v1405
    %v1812 = vunpack.c.l.b16 %v1406
    %v1813 = vunpack.c.h.b16 %v1406
    %v1814 = vunpack.c.l.b16 %v1407
    %v1815 = vunpack.c.h.b16 %v1407
    %v1816 = vunpack.c.l.b16 %v1408
    %v1817 = vunpack.c.h.b16 %v1408
    %v1818 = vunpack.c.l.b16 %v1409
    %v1819 = vunpack.c.h.b16 %v1409
    %v1820 = vunpack.c.l.b16 %v1410
    %v1821 = vunpack.c.h.b16 %v1410
    %v1822 = vunpack.c.l.b16 %v1411
    %v1823 = vunpack.c.h.b16 %v1411
    %v1824 = vunpack.c.l.b16 %v1412
    %v1825 = vunpack.c.h.b16 %v1412
    %v1826 = vunpack.c.l.b16 %v1413
    %v1827 = vunpack.c.h.b16 %v1413
    %v1828 = vunpack.c.l.b16 %v1414
    %v1829 = vunpack.c.h.b16 %v1414
    %v1830 = vunpack.c.l.b16 %v1415
    %v1831 = vunpack.c.h.b16 %v1415
    %v1832 = vunpack.c.l.b16 %v1416
    %v1833 = vunpack.c.h.b16 %v1416
    %v1834 = vunpack.c.l.b16 %v1417
    %v1835 = vunpack.c.h.b16 %v1417
    %v1836 = vunpack.c.l.b16 %v1418
    %v1837 = vunpack.c.h.b16 %v1418
    %v1838 = vunpack.c.l.b16 %v1419
    %v1839 = vunpack.c.h.b16 %v1419
    %v1840 = vunpack.c.l.b16 %v1420
    %v1841 = vunpack.c.h.b16 %v1420
    %v1842 = vunpack.c.l.b16 %v1421
    %v1843 = vunpack.c.h.b16 %v1421
    %v1844 = vunpack.c.l.b16 %v1422
    %v1845 = vunpack.c.h.b16 %v1422
    %v1846 = vunpack.c.l.b16 %v1423
    %v1847 = vunpack.c.h.b16 %v1423
    %v1848 = vunpack.c.l.b16 %v1424
    %v1849 = vunpack.c.h.b16 %v1424
    %v1850 = vunpack.c.l.b16 %v1425
    %v1851 = vunpack.c.h.b16 %v1425
    %v1852 = vpack.c.b16 %v1604, %v1596
    %v1853 = vpack.c.b16 %v1605, %v1597
    %v1854 = vpack.c.b16 %v1606, %v1598
    %v1855 = vpack.c.b16 %v1607, %v1599
    %v1856 = vpack.c.b16 %v1608, %v1600
    %v1857 = vpack.c.b16 %v1609, %v1601
    %v1858 = vpack.c.b16 %v1610, %v1602
    %v1859 = vpack.c.b16 %v1611, %v1603
    %v1860 = vpack.c.b16 %v1620, %v1612
    %v1861 = vpack.c.b16 %v1621, %v1613
    %v1862 = vpack.c.b16 %v1622, %v1614
    %v1863 = vpack.c.b16 %v1623, %v1615
    %v1864 = vpack.c.b16 %v1624, %v1616
    %v1865 = vpack.c.b16 %v1625, %v1617
    %v1866 = vpack.c.b16 %v1626, %v1618
    %v1867 = vpack.c.b16 %v1627, %v1619
    %v1868 = vpack.c.b16 %v1636, %v1628
    %v1869 = vpack.c.b16 %v1637, %v1629
    %v1870 = vpack.c.b16 %v1638, %v1630
    %v1871 = vpack.c.b16 %v1639, %v1631
    %v1872 = vpack.c.b16 %v1640, %v1632
    %v1873 = vpack.c.b16 %v1641, %v1633
    %v1874 = vpack.c.b16 %v1642, %v1634
    %v1875 = vpack.c.b16 %v1643, %v1635
    %v1876 = vpack.c.b16 %v1652, %v1644
    %v1877 = vpack.c.b16 %v1653, %v1645
    %v1878 = vpack.c.b16 %v1654, %v1646
    %v1879 = vpack.c.b16 %v1655, %v1647
    %v1880 = vpack.c.b16 %v1656, %v1648
    %v1881 = vpack.c.b16 %v1657, %v1649
    %v1882 = vpack.c.b16 %v1658, %v1650
    %v1883 = vpack.c.b16 %v1659, %v1651
    %v1884 = vpack.c.b16 %v1668, %v1660
    %v1885 = vpack.c.b16 %v1669, %v1661
    %v1886 = vpack.c.b16 %v1670, %v1662
    %v1887 = vpack.c.b16 %v1671, %v1663
    %v1888 = vpack.c.b16 %v1672, %v1664
    %v1889 = vpack.c.b16 %v1673, %v1665
    %v1890 = vpack.c.b16 %v1674, %v1666
    %v1891 = vpack.c.b16 %v1675, %v1667
    %v1892 = vpack.c.b16 %v1684, %v1676
    %v1893 = vpack.c.b16 %v1685, %v1677
    %v1894 = vpack.c.b16 %v1686, %v1678
    %v1895 = vpack.c.b16 %v1687, %v1679
    %v1896 = vpack.c.b16 %v1688, %v1680
    %v1897 = vpack.c.b16 %v1689, %v1681
    %v1898 = vpack.c.b16 %v1690, %v1682
    %v1899 = vpack.c.b16 %v1691, %v1683
    %v1900 = vpack.c.b16 %v1700, %v1692
    %v1901 = vpack.c.b16 %v1701, %v1693
    %v1902 = vpack.c.b16 %v1702, %v1694
    %v1903 = vpack.c.b16 %v1703, %v1695
    %v1904 = vpack.c.b16 %v1704, %v1696
    %v1905 = vpack.c.b16 %v1705, %v1697
    %v1906 = vpack.c.b16 %v1706, %v1698
    %v1907 = vpack.c.b16 %v1707, %v1699
    %v1908 = vpack.c.b16 %v1716, %v1708
    %v1909 = vpack.c.b16 %v1717, %v1709
    %v1910 = vpack.c.b16 %v1718, %v1710
    %v1911 = vpack.c.b16 %v1719, %v1711
    %v1912 = vpack.c.b16 %v1720, %v1712
    %v1913 = vpack.c.b16 %v1721, %v1713
    %v1914 = vpack.c.b16 %v1722, %v1714
    %v1915 = vpack.c.b16 %v1723, %v1715
    %v1916 = vpack.c.b16 %v1732, %v1724
    %v1917 = vpack.c.b16 %v1733, %v1725
    %v1918 = vpack.c.b16 %v1734, %v1726
    %v1919 = vpack.c.b16 %v1735, %v1727
    %v1920 = vpack.c.b16 %v1736, %v1728
    %v1921 = vpack.c.b16 %v1737, %v1729
    %v1922 = vpack.c.b16 %v1738, %v1730
    %v1923 = vpack.c.b16 %v1739, %v1731
    %v1924 = vpack.c.b16 %v1748, %v1740
    %v1925 = vpack.c.b16 %v1749, %v1741
    %v1926 = vpack.c.b16 %v1750, %v1742
    %v1927 = vpack.c.b16 %v1751, %v1743
    %v1928 = vpack.c.b16 %v1752, %v1744
    %v1929 = vpack.c.b16 %v1753, %v1745
    %v1930 = vpack.c.b16 %v1754, %v1746
    %v1931 = vpack.c.b16 %v1755, %v1747
    %v1932 = vpack.c.b16 %v1764, %v1756
    %v1933 = vpack.c.b16 %v1765, %v1757
    %v1934 = vpack.c.b16 %v1766, %v1758
    %v1935 = vpack.c.b16 %v1767, %v1759
    %v1936 = vpack.c.b16 %v1768, %v1760
    %v1937 = vpack.c.b16 %v1769, %v1761
    %v1938 = vpack.c.b16 %v1770, %v1762
    %v1939 = vpack.c.b16 %v1771, %v1763
    %v1940 = vpack.c.b16 %v1780, %v1772
    %v1941 = vpack.c.b16 %v1781, %v1773
    %v1942 = vpack.c.b16 %v1782, %v1774
    %v1943 = vpack.c.b16 %v1783, %v1775
    %v1944 = vpack.c.b16 %v1784, %v1776
    %v1945 = vpack.c.b16 %v1785, %v1777
    %v1946 = vpack.c.b16 %v1786, %v1778
    %v1947 = vpack.c.b16 %v1787, %v1779
    %v1948 = vpack.c.b16 %v1796, %v1788
    %v1949 = vpack.c.b16 %v1797, %v1789
    %v1950 = vpack.c.b16 %v1798, %v1790
    %v1951 = vpack.c.b16 %v1799, %v1791
    %v1952 = vpack.c.b16 %v1800, %v1792
    %v1953 = vpack.c.b16 %v1801, %v1793
    %v1954 = vpack.c.b16 %v1802, %v1794
    %v1955 = vpack.c.b16 %v1803, %v1795
    %v1956 = vpack.c.b16 %v1812, %v1804
    %v1957 = vpack.c.b16 %v1813, %v1805
    %v1958 = vpack.c.b16 %v1814, %v1806
    %v1959 = vpack.c.b16 %v1815, %v1807
    %v1960 = vpack.c.b16 %v1816, %v1808
    %v1961 = vpack.c.b16 %v1817, %v1809
    %v1962 = vpack.c.b16 %v1818, %v1810
    %v1963 = vpack.c.b16 %v1819, %v1811
    %v1964 = vpack.c.b16 %v1828, %v1820
    %v1965 = vpack.c.b16 %v1829, %v1821
    %v1966 = vpack.c.b16 %v1830, %v1822
    %v1967 = vpack.c.b16 %v1831, %v1823
    %v1968 = vpack.c.b16 %v1832, %v1824
    %v1969 = vpack.c.b16 %v1833, %v1825
    %v1970 = vpack.c.b16 %v1834, %v1826
    %v1971 = vpack.c.b16 %v1835, %v1827
    %v1972 = vpack.c.b16 %v1844, %v1836
    %v1973 = vpack.c.b16 %v1845, %v1837
    %v1974 = vpack.c.b16 %v1846, %v1838
    %v1975 = vpack.c.b16 %v1847, %v1839
    %v1976 = vpack.c.b16 %v1848, %v1840
    %v1977 = vpack.c.b16 %v1849, %v1841
    %v1978 = vpack.c.b16 %v1850, %v1842
    %v1979 = vpack.c.b16 %v1851, %v1843
    %2108 = vmatprep.subr.bf16.mxu0 %v1853
    %2109 = vmatpush1.bf16.msra.mxu0 %v1852
    %2110 = vmatprep.subr.bf16.mxu0 %v1861
    %2111 = vmatpush1.bf16.msra.mxu0 %v1860
    %2112 = vmatprep.subr.bf16.mxu0 %v1869
    %2113 = vmatpush1.bf16.msra.mxu0 %v1868
    %2114 = vmatprep.subr.bf16.mxu0 %v1877
    %2115 = vmatpush1.bf16.msra.mxu0 %v1876
    %2116 = vmatprep.subr.bf16.mxu0 %v1885
    %2117 = vmatpush1.bf16.msra.mxu0 %v1884
    %2118 = vmatprep.subr.bf16.mxu0 %v1893
    %2119 = vmatpush1.bf16.msra.mxu0 %v1892
    %2120 = vmatprep.subr.bf16.mxu0 %v1901
    %2121 = vmatpush1.bf16.msra.mxu0 %v1900
    %2122 = vmatprep.subr.bf16.mxu0 %v1909
    %2123 = vmatpush1.bf16.msra.mxu0 %v1908
    %2124 = vmatprep.subr.bf16.mxu0 %v1917
    %2125 = vmatpush1.bf16.msra.mxu0 %v1916
    %2126 = vmatprep.subr.bf16.mxu0 %v1925
    %2127 = vmatpush1.bf16.msra.mxu0 %v1924
    %2128 = vmatprep.subr.bf16.mxu0 %v1933
    %2129 = vmatpush1.bf16.msra.mxu0 %v1932
    %2130 = vmatprep.subr.bf16.mxu0 %v1941
    %2131 = vmatpush1.bf16.msra.mxu0 %v1940
    %2132 = vmatprep.subr.bf16.mxu0 %v1949
    %2133 = vmatpush1.bf16.msra.mxu0 %v1948
    %2134 = vmatprep.subr.bf16.mxu0 %v1957
    %2135 = vmatpush1.bf16.msra.mxu0 %v1956
    %2136 = vmatprep.subr.bf16.mxu0 %v1965
    %2137 = vmatpush1.bf16.msra.mxu0 %v1964
    %2138 = vmatprep.subr.bf16.mxu0 %v1973
    %2139 = vmatpush1.bf16.msra.mxu0 %v1972
    %2140 = vmatprep.mubr.bf16.mxu0 %v1297
    %2141 = vmatmul.mubr.bf16.gmra.mrb[0].mxu0 %v1296
    %v2142 = vpop.f32.mrb[0].mxu0
    %v2143 = vadd.f32 %v1431, %v2142
    %v2144 = vpop.f32.mrb[0].mxu0
    %v2145 = vadd.f32 %v1435, %v2144
    %v2146 = vpop.f32.mrb[0].mxu0
    %v2147 = vadd.f32 %v1431, %v2146
    %v2148 = vpop.f32.mrb[0].mxu0
    %v2149 = vadd.f32 %v1435, %v2148
    %2150 = vdwg.mxu0
    %2151 = vmatprep.subr.bf16.mxu0 %v1855
    %2152 = vmatpush1.bf16.msra.mxu0 %v1854
    %2153 = vmatprep.subr.bf16.mxu0 %v1863
    %2154 = vmatpush1.bf16.msra.mxu0 %v1862
    %2155 = vmatprep.subr.bf16.mxu0 %v1871
    %2156 = vmatpush1.bf16.msra.mxu0 %v1870
    %2157 = vmatprep.subr.bf16.mxu0 %v1879
    %2158 = vmatpush1.bf16.msra.mxu0 %v1878
    %2159 = vmatprep.subr.bf16.mxu0 %v1887
    %2160 = vmatpush1.bf16.msra.mxu0 %v1886
    %2161 = vmatprep.subr.bf16.mxu0 %v1895
    %2162 = vmatpush1.bf16.msra.mxu0 %v1894
    %2163 = vmatprep.subr.bf16.mxu0 %v1903
    %2164 = vmatpush1.bf16.msra.mxu0 %v1902
    %2165 = vmatprep.subr.bf16.mxu0 %v1911
    %2166 = vmatpush1.bf16.msra.mxu0 %v1910
    %2167 = vmatprep.subr.bf16.mxu0 %v1919
    %2168 = vmatpush1.bf16.msra.mxu0 %v1918
    %2169 = vmatprep.subr.bf16.mxu0 %v1927
    %2170 = vmatpush1.bf16.msra.mxu0 %v1926
    %2171 = vmatprep.subr.bf16.mxu0 %v1935
    %2172 = vmatpush1.bf16.msra.mxu0 %v1934
    %2173 = vmatprep.subr.bf16.mxu0 %v1943
    %2174 = vmatpush1.bf16.msra.mxu0 %v1942
    %2175 = vmatprep.subr.bf16.mxu0 %v1951
    %2176 = vmatpush1.bf16.msra.mxu0 %v1950
    %2177 = vmatprep.subr.bf16.mxu0 %v1959
    %2178 = vmatpush1.bf16.msra.mxu0 %v1958
    %2179 = vmatprep.subr.bf16.mxu0 %v1967
    %2180 = vmatpush1.bf16.msra.mxu0 %v1966
    %2181 = vmatprep.subr.bf16.mxu0 %v1975
    %2182 = vmatpush1.bf16.msra.mxu0 %v1974
    %2183 = vmatprep.mubr.bf16.mxu0 %v1297
    %2184 = vmatmul.mubr.bf16.gmra.mrb[0].mxu0 %v1296
    %v2185 = vpop.f32.mrb[0].mxu0
    %v2186 = vadd.f32 %v1439, %v2185
    %v2187 = vpop.f32.mrb[0].mxu0
    %v2188 = vadd.f32 %v1443, %v2187
    %v2189 = vpop.f32.mrb[0].mxu0
    %v2190 = vadd.f32 %v1439, %v2189
    %v2191 = vpop.f32.mrb[0].mxu0
    %v2192 = vadd.f32 %v1443, %v2191
    %2193 = vdwg.mxu0
    %2194 = vmatprep.subr.bf16.mxu0 %v1857
    %2195 = vmatpush1.bf16.msra.mxu0 %v1856
    %2196 = vmatprep.subr.bf16.mxu0 %v1865
    %2197 = vmatpush1.bf16.msra.mxu0 %v1864
    %2198 = vmatprep.subr.bf16.mxu0 %v1873
    %2199 = vmatpush1.bf16.msra.mxu0 %v1872
    %2200 = vmatprep.subr.bf16.mxu0 %v1881
    %2201 = vmatpush1.bf16.msra.mxu0 %v1880
    %2202 = vmatprep.subr.bf16.mxu0 %v1889
    %2203 = vmatpush1.bf16.msra.mxu0 %v1888
    %2204 = vmatprep.subr.bf16.mxu0 %v1897
    %2205 = vmatpush1.bf16.msra.mxu0 %v1896
    %2206 = vmatprep.subr.bf16.mxu0 %v1905
    %2207 = vmatpush1.bf16.msra.mxu0 %v1904
    %2208 = vmatprep.subr.bf16.mxu0 %v1913
    %2209 = vmatpush1.bf16.msra.mxu0 %v1912
    %2210 = vmatprep.subr.bf16.mxu0 %v1921
    %2211 = vmatpush1.bf16.msra.mxu0 %v1920
    %2212 = vmatprep.subr.bf16.mxu0 %v1929
    %2213 = vmatpush1.bf16.msra.mxu0 %v1928
    %2214 = vmatprep.subr.bf16.mxu0 %v1937
    %2215 = vmatpush1.bf16.msra.mxu0 %v1936
    %2216 = vmatprep.subr.bf16.mxu0 %v1945
    %2217 = vmatpush1.bf16.msra.mxu0 %v1944
    %2218 = vmatprep.subr.bf16.mxu0 %v1953
    %2219 = vmatpush1.bf16.msra.mxu0 %v1952
    %2220 = vmatprep.subr.bf16.mxu0 %v1961
    %2221 = vmatpush1.bf16.msra.mxu0 %v1960
    %2222 = vmatprep.subr.bf16.mxu0 %v1969
    %2223 = vmatpush1.bf16.msra.mxu0 %v1968
    %2224 = vmatprep.subr.bf16.mxu0 %v1977
    %2225 = vmatpush1.bf16.msra.mxu0 %v1976
    %2226 = vmatprep.mubr.bf16.mxu0 %v1297
    %2227 = vmatmul.mubr.bf16.gmra.mrb[0].mxu0 %v1296
    %v2228 = vpop.f32.mrb[0].mxu0
    %v2229 = vadd.f32 %v1447, %v2228
    %v2230 = vpop.f32.mrb[0].mxu0
    %v2231 = vadd.f32 %v1451, %v2230
    %v2232 = vpop.f32.mrb[0].mxu0
    %v2233 = vadd.f32 %v1447, %v2232
    %v2234 = vpop.f32.mrb[0].mxu0
    %v2235 = vadd.f32 %v1451, %v2234
    %2236 = vdwg.mxu0
    %2237 = vmatprep.subr.bf16.mxu0 %v1859
    %2238 = vmatpush1.bf16.msra.mxu0 %v1858
    %2239 = vmatprep.subr.bf16.mxu0 %v1867
    %2240 = vmatpush1.bf16.msra.mxu0 %v1866
    %2241 = vmatprep.subr.bf16.mxu0 %v1875
    %2242 = vmatpush1.bf16.msra.mxu0 %v1874
    %2243 = vmatprep.subr.bf16.mxu0 %v1883
    %2244 = vmatpush1.bf16.msra.mxu0 %v1882
    %2245 = vmatprep.subr.bf16.mxu0 %v1891
    %2246 = vmatpush1.bf16.msra.mxu0 %v1890
    %2247 = vmatprep.subr.bf16.mxu0 %v1899
    %2248 = vmatpush1.bf16.msra.mxu0 %v1898
    %2249 = vmatprep.subr.bf16.mxu0 %v1907
    %2250 = vmatpush1.bf16.msra.mxu0 %v1906
    %2251 = vmatprep.subr.bf16.mxu0 %v1915
    %2252 = vmatpush1.bf16.msra.mxu0 %v1914
    %2253 = vmatprep.subr.bf16.mxu0 %v1923
    %2254 = vmatpush1.bf16.msra.mxu0 %v1922
    %2255 = vmatprep.subr.bf16.mxu0 %v1931
    %2256 = vmatpush1.bf16.msra.mxu0 %v1930
    %2257 = vmatprep.subr.bf16.mxu0 %v1939
    %2258 = vmatpush1.bf16.msra.mxu0 %v1938
    %2259 = vmatprep.subr.bf16.mxu0 %v1947
    %2260 = vmatpush1.bf16.msra.mxu0 %v1946
    %2261 = vmatprep.subr.bf16.mxu0 %v1955
    %2262 = vmatpush1.bf16.msra.mxu0 %v1954
    %2263 = vmatprep.subr.bf16.mxu0 %v1963
    %2264 = vmatpush1.bf16.msra.mxu0 %v1962
    %2265 = vmatprep.subr.bf16.mxu0 %v1971
    %2266 = vmatpush1.bf16.msra.mxu0 %v1970
    %2267 = vmatprep.subr.bf16.mxu0 %v1979
    %2268 = vmatpush1.bf16.msra.mxu0 %v1978
    %2269 = vmatprep.mubr.bf16.mxu0 %v1297
    %2270 = vmatmul.mubr.bf16.gmra.mrb[0].mxu0 %v1296
    %v2271 = vpop.f32.mrb[0].mxu0
    %v2272 = vadd.f32 %v1455, %v2271
    %v2273 = vpop.f32.mrb[0].mxu0
    %v2274 = vadd.f32 %v1459, %v2273
    %v2275 = vpop.f32.mrb[0].mxu0
    %v2276 = vadd.f32 %v1455, %v2275
    %v2277 = vpop.f32.mrb[0].mxu0
    %v2278 = vadd.f32 %v1459, %v2277
    %2279 = vdwg.mxu0
    %v2280 = vmax.f32 %v2143, 0.0
    %v2281 = vmax.f32 %v2145, 0.0
    %v2282 = vmax.f32 %v2186, 0.0
    %v2283 = vmax.f32 %v2188, 0.0
    %v2284 = vmax.f32 %v2229, 0.0
    %v2285 = vmax.f32 %v2231, 0.0
    %v2286 = vmax.f32 %v2272, 0.0
    %v2287 = vmax.f32 %v2274, 0.0
    %v2288 = vmax.f32 %v2147, 0.0
    %v2289 = vmax.f32 %v2149, 0.0
    %v2290 = vmax.f32 %v2190, 0.0
    %v2291 = vmax.f32 %v2192, 0.0
    %v2292 = vmax.f32 %v2233, 0.0
    %v2293 = vmax.f32 %v2235, 0.0
    %v2294 = vmax.f32 %v2276, 0.0
    %v2295 = vmax.f32 %v2278, 0.0
    %v2296 = vpack.c.bf16 %v2288, %v2280
    %v2297 = vpack.c.bf16 %v2289, %v2281
    %v2298 = vpack.c.bf16 %v2290, %v2282
    %v2299 = vpack.c.bf16 %v2291, %v2283
    %v2300 = vpack.c.bf16 %v2292, %v2284
    %v2301 = vpack.c.bf16 %v2293, %v2285
    %v2302 = vpack.c.bf16 %v2294, %v2286
    %v2303 = vpack.c.bf16 %v2295, %v2287
    %v2304 = vld [vmem:[#allocation13] sm:$0xff]
    %v2305 = vld [vmem:[#allocation13 + $0x8] sm:$0xff]
    %v2306 = vld [vmem:[#allocation13 + $0x10] sm:$0xff]
    %v2307 = vld [vmem:[#allocation13 + $0x18] sm:$0xff]
    %v2308 = vld [vmem:[#allocation13 + $0x20] sm:$0xff]
    %v2309 = vld [vmem:[#allocation13 + $0x28] sm:$0xff]
    %v2310 = vld [vmem:[#allocation13 + $0x30] sm:$0xff]
    %v2311 = vld [vmem:[#allocation13 + $0x38] sm:$0xff]
    %v2312 = vld [vmem:[#allocation13 + $0x40] sm:$0xff]
    %v2313 = vld [vmem:[#allocation13 + $0x48] sm:$0xff]
    %v2314 = vld [vmem:[#allocation13 + $0x50] sm:$0xff]
    %v2315 = vld [vmem:[#allocation13 + $0x58] sm:$0xff]
    %v2316 = vld [vmem:[#allocation13 + $0x60] sm:$0xff]
    %v2317 = vld [vmem:[#allocation13 + $0x68] sm:$0xff]
    %v2318 = vld [vmem:[#allocation13 + $0x70] sm:$0xff]
    %v2319 = vld [vmem:[#allocation13 + $0x78] sm:$0xff]
    %v2320 = vld [vmem:[#allocation13 + $0x80] sm:$0xff]
    %v2321 = vld [vmem:[#allocation13 + $0x88] sm:$0xff]
    %v2322 = vld [vmem:[#allocation13 + $0x90] sm:$0xff]
    %v2323 = vld [vmem:[#allocation13 + $0x98] sm:$0xff]
    %v2324 = vld [vmem:[#allocation13 + $0xa0] sm:$0xff]
    %v2325 = vld [vmem:[#allocation13 + $0xa8] sm:$0xff]
    %v2326 = vld [vmem:[#allocation13 + $0xb0] sm:$0xff]
    %v2327 = vld [vmem:[#allocation13 + $0xb8] sm:$0xff]
    %v2328 = vld [vmem:[#allocation13 + $0xc0] sm:$0xff]
    %v2329 = vld [vmem:[#allocation13 + $0xc8] sm:$0xff]
    %v2330 = vld [vmem:[#allocation13 + $0xd0] sm:$0xff]
    %v2331 = vld [vmem:[#allocation13 + $0xd8] sm:$0xff]
    %v2332 = vld [vmem:[#allocation13 + $0xe0] sm:$0xff]
    %v2333 = vld [vmem:[#allocation13 + $0xe8] sm:$0xff]
    %v2334 = vld [vmem:[#allocation13 + $0xf0] sm:$0xff]
    %v2335 = vld [vmem:[#allocation13 + $0xf8] sm:$0xff]
    %v2336 = vld [vmem:[#allocation13 + $0x100] sm:$0xff]
    %v2337 = vld [vmem:[#allocation13 + $0x108] sm:$0xff]
    %v2338 = vld [vmem:[#allocation13 + $0x110] sm:$0xff]
    %v2339 = vld [vmem:[#allocation13 + $0x118] sm:$0xff]
    %v2340 = vld [vmem:[#allocation13 + $0x120] sm:$0xff]
    %v2341 = vld [vmem:[#allocation13 + $0x128] sm:$0xff]
    %v2342 = vld [vmem:[#allocation13 + $0x130] sm:$0xff]
    %v2343 = vld [vmem:[#allocation13 + $0x138] sm:$0xff]
    %v2344 = vld [vmem:[#allocation13 + $0x140] sm:$0xff]
    %v2345 = vld [vmem:[#allocation13 + $0x148] sm:$0xff]
    %v2346 = vld [vmem:[#allocation13 + $0x150] sm:$0xff]
    %v2347 = vld [vmem:[#allocation13 + $0x158] sm:$0xff]
    %v2348 = vld [vmem:[#allocation13 + $0x160] sm:$0xff]
    %v2349 = vld [vmem:[#allocation13 + $0x168] sm:$0xff]
    %v2350 = vld [vmem:[#allocation13 + $0x170] sm:$0xff]
    %v2351 = vld [vmem:[#allocation13 + $0x178] sm:$0xff]
    %v2352 = vld [vmem:[#allocation13 + $0x180] sm:$0xff]
    %v2353 = vld [vmem:[#allocation13 + $0x188] sm:$0xff]
    %v2354 = vld [vmem:[#allocation13 + $0x190] sm:$0xff]
    %v2355 = vld [vmem:[#allocation13 + $0x198] sm:$0xff]
    %v2356 = vld [vmem:[#allocation13 + $0x1a0] sm:$0xff]
    %v2357 = vld [vmem:[#allocation13 + $0x1a8] sm:$0xff]
    %v2358 = vld [vmem:[#allocation13 + $0x1b0] sm:$0xff]
    %v2359 = vld [vmem:[#allocation13 + $0x1b8] sm:$0xff]
    %v2360 = vld [vmem:[#allocation13 + $0x1c0] sm:$0xff]
    %v2361 = vld [vmem:[#allocation13 + $0x1c8] sm:$0xff]
    %v2362 = vld [vmem:[#allocation13 + $0x1d0] sm:$0xff]
    %v2363 = vld [vmem:[#allocation13 + $0x1d8] sm:$0xff]
    %v2364 = vld [vmem:[#allocation13 + $0x1e0] sm:$0xff]
    %v2365 = vld [vmem:[#allocation13 + $0x1e8] sm:$0xff]
    %v2366 = vld [vmem:[#allocation13 + $0x1f0] sm:$0xff]
    %v2367 = vld [vmem:[#allocation13 + $0x1f8] sm:$0xff]
    %v2368 = vld [vmem:[#allocation13 + $0x200] sm:$0xff]
    %v2369 = vld [vmem:[#allocation13 + $0x208] sm:$0xff]
    %v2370 = vld [vmem:[#allocation13 + $0x210] sm:$0xff]
    %v2371 = vld [vmem:[#allocation13 + $0x218] sm:$0xff]
    %v2372 = vld [vmem:[#allocation13 + $0x220] sm:$0xff]
    %v2373 = vld [vmem:[#allocation13 + $0x228] sm:$0xff]
    %v2374 = vld [vmem:[#allocation13 + $0x230] sm:$0xff]
    %v2375 = vld [vmem:[#allocation13 + $0x238] sm:$0xff]
    %v2376 = vld [vmem:[#allocation13 + $0x240] sm:$0xff]
    %v2377 = vld [vmem:[#allocation13 + $0x248] sm:$0xff]
    %v2378 = vld [vmem:[#allocation13 + $0x250] sm:$0xff]
    %v2379 = vld [vmem:[#allocation13 + $0x258] sm:$0xff]
    %v2380 = vld [vmem:[#allocation13 + $0x260] sm:$0xff]
    %v2381 = vld [vmem:[#allocation13 + $0x268] sm:$0xff]
    %v2382 = vld [vmem:[#allocation13 + $0x270] sm:$0xff]
    %v2383 = vld [vmem:[#allocation13 + $0x278] sm:$0xff]
    %v2384 = vld [vmem:[#allocation13 + $0x280] sm:$0xff]
    %v2385 = vld [vmem:[#allocation13 + $0x288] sm:$0xff]
    %v2386 = vld [vmem:[#allocation13 + $0x290] sm:$0xff]
    %v2387 = vld [vmem:[#allocation13 + $0x298] sm:$0xff]
    %v2388 = vld [vmem:[#allocation13 + $0x2a0] sm:$0xff]
    %v2389 = vld [vmem:[#allocation13 + $0x2a8] sm:$0xff]
    %v2390 = vld [vmem:[#allocation13 + $0x2b0] sm:$0xff]
    %v2391 = vld [vmem:[#allocation13 + $0x2b8] sm:$0xff]
    %v2392 = vld [vmem:[#allocation13 + $0x2c0] sm:$0xff]
    %v2393 = vld [vmem:[#allocation13 + $0x2c8] sm:$0xff]
    %v2394 = vld [vmem:[#allocation13 + $0x2d0] sm:$0xff]
    %v2395 = vld [vmem:[#allocation13 + $0x2d8] sm:$0xff]
    %v2396 = vld [vmem:[#allocation13 + $0x2e0] sm:$0xff]
    %v2397 = vld [vmem:[#allocation13 + $0x2e8] sm:$0xff]
    %v2398 = vld [vmem:[#allocation13 + $0x2f0] sm:$0xff]
    %v2399 = vld [vmem:[#allocation13 + $0x2f8] sm:$0xff]
    %v2400 = vld [vmem:[#allocation13 + $0x300] sm:$0xff]
    %v2401 = vld [vmem:[#allocation13 + $0x308] sm:$0xff]
    %v2402 = vld [vmem:[#allocation13 + $0x310] sm:$0xff]
    %v2403 = vld [vmem:[#allocation13 + $0x318] sm:$0xff]
    %v2404 = vld [vmem:[#allocation13 + $0x320] sm:$0xff]
    %v2405 = vld [vmem:[#allocation13 + $0x328] sm:$0xff]
    %v2406 = vld [vmem:[#allocation13 + $0x330] sm:$0xff]
    %v2407 = vld [vmem:[#allocation13 + $0x338] sm:$0xff]
    %v2408 = vld [vmem:[#allocation13 + $0x340] sm:$0xff]
    %v2409 = vld [vmem:[#allocation13 + $0x348] sm:$0xff]
    %v2410 = vld [vmem:[#allocation13 + $0x350] sm:$0xff]
    %v2411 = vld [vmem:[#allocation13 + $0x358] sm:$0xff]
    %v2412 = vld [vmem:[#allocation13 + $0x360] sm:$0xff]
    %v2413 = vld [vmem:[#allocation13 + $0x368] sm:$0xff]
    %v2414 = vld [vmem:[#allocation13 + $0x370] sm:$0xff]
    %v2415 = vld [vmem:[#allocation13 + $0x378] sm:$0xff]
    %v2416 = vld [vmem:[#allocation13 + $0x380] sm:$0xff]
    %v2417 = vld [vmem:[#allocation13 + $0x388] sm:$0xff]
    %v2418 = vld [vmem:[#allocation13 + $0x390] sm:$0xff]
    %v2419 = vld [vmem:[#allocation13 + $0x398] sm:$0xff]
    %v2420 = vld [vmem:[#allocation13 + $0x3a0] sm:$0xff]
    %v2421 = vld [vmem:[#allocation13 + $0x3a8] sm:$0xff]
    %v2422 = vld [vmem:[#allocation13 + $0x3b0] sm:$0xff]
    %v2423 = vld [vmem:[#allocation13 + $0x3b8] sm:$0xff]
    %v2424 = vld [vmem:[#allocation13 + $0x3c0] sm:$0xff]
    %v2425 = vld [vmem:[#allocation13 + $0x3c8] sm:$0xff]
    %v2426 = vld [vmem:[#allocation13 + $0x3d0] sm:$0xff]
    %v2427 = vld [vmem:[#allocation13 + $0x3d8] sm:$0xff]
    %v2428 = vld [vmem:[#allocation13 + $0x3e0] sm:$0xff]
    %v2429 = vld [vmem:[#allocation13 + $0x3e8] sm:$0xff]
    %v2430 = vld [vmem:[#allocation13 + $0x3f0] sm:$0xff]
    %v2431 = vld [vmem:[#allocation13 + $0x3f8] sm:$0xff]
    %v2432 = vld [vmem:[#allocation14] sm:$0x3]
    %v2434 = vlaneseq
    %v2435 = vshrl.u32 %v2434, 7
    %v2436 = vsub.s32 0, %v2435
    %v2437 = vrot.slane %v2432, %v2436
    %v2438 = vlaneseq
    %v2439 = vshrl.u32 %v2438, 7
    %v2440 = vsub.s32 1, %v2439
    %v2441 = vrot.slane %v2432, %v2440
    %v2572 = vunpack.c.l.b16 %v2304
    %v2573 = vunpack.c.h.b16 %v2304
    %v2574 = vunpack.c.l.b16 %v2305
    %v2575 = vunpack.c.h.b16 %v2305
    %v2576 = vunpack.c.l.b16 %v2306
    %v2577 = vunpack.c.h.b16 %v2306
    %v2578 = vunpack.c.l.b16 %v2307
    %v2579 = vunpack.c.h.b16 %v2307
    %v2580 = vunpack.c.l.b16 %v2308
    %v2581 = vunpack.c.h.b16 %v2308
    %v2582 = vunpack.c.l.b16 %v2309
    %v2583 = vunpack.c.h.b16 %v2309
    %v2584 = vunpack.c.l.b16 %v2310
    %v2585 = vunpack.c.h.b16 %v2310
    %v2586 = vunpack.c.l.b16 %v2311
    %v2587 = vunpack.c.h.b16 %v2311
    %v2588 = vunpack.c.l.b16 %v2312
    %v2589 = vunpack.c.h.b16 %v2312
    %v2590 = vunpack.c.l.b16 %v2313
    %v2591 = vunpack.c.h.b16 %v2313
    %v2592 = vunpack.c.l.b16 %v2314
    %v2593 = vunpack.c.h.b16 %v2314
    %v2594 = vunpack.c.l.b16 %v2315
    %v2595 = vunpack.c.h.b16 %v2315
    %v2596 = vunpack.c.l.b16 %v2316
    %v2597 = vunpack.c.h.b16 %v2316
    %v2598 = vunpack.c.l.b16 %v2317
    %v2599 = vunpack.c.h.b16 %v2317
    %v2600 = vunpack.c.l.b16 %v2318
    %v2601 = vunpack.c.h.b16 %v2318
    %v2602 = vunpack.c.l.b16 %v2319
    %v2603 = vunpack.c.h.b16 %v2319
    %v2604 = vunpack.c.l.b16 %v2320
    %v2605 = vunpack.c.h.b16 %v2320
    %v2606 = vunpack.c.l.b16 %v2321
    %v2607 = vunpack.c.h.b16 %v2321
    %v2608 = vunpack.c.l.b16 %v2322
    %v2609 = vunpack.c.h.b16 %v2322
    %v2610 = vunpack.c.l.b16 %v2323
    %v2611 = vunpack.c.h.b16 %v2323
    %v2612 = vunpack.c.l.b16 %v2324
    %v2613 = vunpack.c.h.b16 %v2324
    %v2614 = vunpack.c.l.b16 %v2325
    %v2615 = vunpack.c.h.b16 %v2325
    %v2616 = vunpack.c.l.b16 %v2326
    %v2617 = vunpack.c.h.b16 %v2326
    %v2618 = vunpack.c.l.b16 %v2327
    %v2619 = vunpack.c.h.b16 %v2327
    %v2620 = vunpack.c.l.b16 %v2328
    %v2621 = vunpack.c.h.b16 %v2328
    %v2622 = vunpack.c.l.b16 %v2329
    %v2623 = vunpack.c.h.b16 %v2329
    %v2624 = vunpack.c.l.b16 %v2330
    %v2625 = vunpack.c.h.b16 %v2330
    %v2626 = vunpack.c.l.b16 %v2331
    %v2627 = vunpack.c.h.b16 %v2331
    %v2628 = vunpack.c.l.b16 %v2332
    %v2629 = vunpack.c.h.b16 %v2332
    %v2630 = vunpack.c.l.b16 %v2333
    %v2631 = vunpack.c.h.b16 %v2333
    %v2632 = vunpack.c.l.b16 %v2334
    %v2633 = vunpack.c.h.b16 %v2334
    %v2634 = vunpack.c.l.b16 %v2335
    %v2635 = vunpack.c.h.b16 %v2335
    %v2636 = vunpack.c.l.b16 %v2336
    %v2637 = vunpack.c.h.b16 %v2336
    %v2638 = vunpack.c.l.b16 %v2337
    %v2639 = vunpack.c.h.b16 %v2337
    %v2640 = vunpack.c.l.b16 %v2338
    %v2641 = vunpack.c.h.b16 %v2338
    %v2642 = vunpack.c.l.b16 %v2339
    %v2643 = vunpack.c.h.b16 %v2339
    %v2644 = vunpack.c.l.b16 %v2340
    %v2645 = vunpack.c.h.b16 %v2340
    %v2646 = vunpack.c.l.b16 %v2341
    %v2647 = vunpack.c.h.b16 %v2341
    %v2648 = vunpack.c.l.b16 %v2342
    %v2649 = vunpack.c.h.b16 %v2342
    %v2650 = vunpack.c.l.b16 %v2343
    %v2651 = vunpack.c.h.b16 %v2343
    %v2652 = vunpack.c.l.b16 %v2344
    %v2653 = vunpack.c.h.b16 %v2344
    %v2654 = vunpack.c.l.b16 %v2345
    %v2655 = vunpack.c.h.b16 %v2345
    %v2656 = vunpack.c.l.b16 %v2346
    %v2657 = vunpack.c.h.b16 %v2346
    %v2658 = vunpack.c.l.b16 %v2347
    %v2659 = vunpack.c.h.b16 %v2347
    %v2660 = vunpack.c.l.b16 %v2348
    %v2661 = vunpack.c.h.b16 %v2348
    %v2662 = vunpack.c.l.b16 %v2349
    %v2663 = vunpack.c.h.b16 %v2349
    %v2664 = vunpack.c.l.b16 %v2350
    %v2665 = vunpack.c.h.b16 %v2350
    %v2666 = vunpack.c.l.b16 %v2351
    %v2667 = vunpack.c.h.b16 %v2351
    %v2668 = vunpack.c.l.b16 %v2352
    %v2669 = vunpack.c.h.b16 %v2352
    %v2670 = vunpack.c.l.b16 %v2353
    %v2671 = vunpack.c.h.b16 %v2353
    %v2672 = vunpack.c.l.b16 %v2354
    %v2673 = vunpack.c.h.b16 %v2354
    %v2674 = vunpack.c.l.b16 %v2355
    %v2675 = vunpack.c.h.b16 %v2355
    %v2676 = vunpack.c.l.b16 %v2356
    %v2677 = vunpack.c.h.b16 %v2356
    %v2678 = vunpack.c.l.b16 %v2357
    %v2679 = vunpack.c.h.b16 %v2357
    %v2680 = vunpack.c.l.b16 %v2358
    %v2681 = vunpack.c.h.b16 %v2358
    %v2682 = vunpack.c.l.b16 %v2359
    %v2683 = vunpack.c.h.b16 %v2359
    %v2684 = vunpack.c.l.b16 %v2360
    %v2685 = vunpack.c.h.b16 %v2360
    %v2686 = vunpack.c.l.b16 %v2361
    %v2687 = vunpack.c.h.b16 %v2361
    %v2688 = vunpack.c.l.b16 %v2362
    %v2689 = vunpack.c.h.b16 %v2362
    %v2690 = vunpack.c.l.b16 %v2363
    %v2691 = vunpack.c.h.b16 %v2363
    %v2692 = vunpack.c.l.b16 %v2364
    %v2693 = vunpack.c.h.b16 %v2364
    %v2694 = vunpack.c.l.b16 %v2365
    %v2695 = vunpack.c.h.b16 %v2365
    %v2696 = vunpack.c.l.b16 %v2366
    %v2697 = vunpack.c.h.b16 %v2366
    %v2698 = vunpack.c.l.b16 %v2367
    %v2699 = vunpack.c.h.b16 %v2367
    %v2700 = vunpack.c.l.b16 %v2368
    %v2701 = vunpack.c.h.b16 %v2368
    %v2702 = vunpack.c.l.b16 %v2369
    %v2703 = vunpack.c.h.b16 %v2369
    %v2704 = vunpack.c.l.b16 %v2370
    %v2705 = vunpack.c.h.b16 %v2370
    %v2706 = vunpack.c.l.b16 %v2371
    %v2707 = vunpack.c.h.b16 %v2371
    %v2708 = vunpack.c.l.b16 %v2372
    %v2709 = vunpack.c.h.b16 %v2372
    %v2710 = vunpack.c.l.b16 %v2373
    %v2711 = vunpack.c.h.b16 %v2373
    %v2712 = vunpack.c.l.b16 %v2374
    %v2713 = vunpack.c.h.b16 %v2374
    %v2714 = vunpack.c.l.b16 %v2375
    %v2715 = vunpack.c.h.b16 %v2375
    %v2716 = vunpack.c.l.b16 %v2376
    %v2717 = vunpack.c.h.b16 %v2376
    %v2718 = vunpack.c.l.b16 %v2377
    %v2719 = vunpack.c.h.b16 %v2377
    %v2720 = vunpack.c.l.b16 %v2378
    %v2721 = vunpack.c.h.b16 %v2378
    %v2722 = vunpack.c.l.b16 %v2379
    %v2723 = vunpack.c.h.b16 %v2379
    %v2724 = vunpack.c.l.b16 %v2380
    %v2725 = vunpack.c.h.b16 %v2380
    %v2726 = vunpack.c.l.b16 %v2381
    %v2727 = vunpack.c.h.b16 %v2381
    %v2728 = vunpack.c.l.b16 %v2382
    %v2729 = vunpack.c.h.b16 %v2382
    %v2730 = vunpack.c.l.b16 %v2383
    %v2731 = vunpack.c.h.b16 %v2383
    %v2732 = vunpack.c.l.b16 %v2384
    %v2733 = vunpack.c.h.b16 %v2384
    %v2734 = vunpack.c.l.b16 %v2385
    %v2735 = vunpack.c.h.b16 %v2385
    %v2736 = vunpack.c.l.b16 %v2386
    %v2737 = vunpack.c.h.b16 %v2386
    %v2738 = vunpack.c.l.b16 %v2387
    %v2739 = vunpack.c.h.b16 %v2387
    %v2740 = vunpack.c.l.b16 %v2388
    %v2741 = vunpack.c.h.b16 %v2388
    %v2742 = vunpack.c.l.b16 %v2389
    %v2743 = vunpack.c.h.b16 %v2389
    %v2744 = vunpack.c.l.b16 %v2390
    %v2745 = vunpack.c.h.b16 %v2390
    %v2746 = vunpack.c.l.b16 %v2391
    %v2747 = vunpack.c.h.b16 %v2391
    %v2748 = vunpack.c.l.b16 %v2392
    %v2749 = vunpack.c.h.b16 %v2392
    %v2750 = vunpack.c.l.b16 %v2393
    %v2751 = vunpack.c.h.b16 %v2393
    %v2752 = vunpack.c.l.b16 %v2394
    %v2753 = vunpack.c.h.b16 %v2394
    %v2754 = vunpack.c.l.b16 %v2395
    %v2755 = vunpack.c.h.b16 %v2395
    %v2756 = vunpack.c.l.b16 %v2396
    %v2757 = vunpack.c.h.b16 %v2396
    %v2758 = vunpack.c.l.b16 %v2397
    %v2759 = vunpack.c.h.b16 %v2397
    %v2760 = vunpack.c.l.b16 %v2398
    %v2761 = vunpack.c.h.b16 %v2398
    %v2762 = vunpack.c.l.b16 %v2399
    %v2763 = vunpack.c.h.b16 %v2399
    %v2764 = vunpack.c.l.b16 %v2400
    %v2765 = vunpack.c.h.b16 %v2400
    %v2766 = vunpack.c.l.b16 %v2401
    %v2767 = vunpack.c.h.b16 %v2401
    %v2768 = vunpack.c.l.b16 %v2402
    %v2769 = vunpack.c.h.b16 %v2402
    %v2770 = vunpack.c.l.b16 %v2403
    %v2771 = vunpack.c.h.b16 %v2403
    %v2772 = vunpack.c.l.b16 %v2404
    %v2773 = vunpack.c.h.b16 %v2404
    %v2774 = vunpack.c.l.b16 %v2405
    %v2775 = vunpack.c.h.b16 %v2405
    %v2776 = vunpack.c.l.b16 %v2406
    %v2777 = vunpack.c.h.b16 %v2406
    %v2778 = vunpack.c.l.b16 %v2407
    %v2779 = vunpack.c.h.b16 %v2407
    %v2780 = vunpack.c.l.b16 %v2408
    %v2781 = vunpack.c.h.b16 %v2408
    %v2782 = vunpack.c.l.b16 %v2409
    %v2783 = vunpack.c.h.b16 %v2409
    %v2784 = vunpack.c.l.b16 %v2410
    %v2785 = vunpack.c.h.b16 %v2410
    %v2786 = vunpack.c.l.b16 %v2411
    %v2787 = vunpack.c.h.b16 %v2411
    %v2788 = vunpack.c.l.b16 %v2412
    %v2789 = vunpack.c.h.b16 %v2412
    %v2790 = vunpack.c.l.b16 %v2413
    %v2791 = vunpack.c.h.b16 %v2413
    %v2792 = vunpack.c.l.b16 %v2414
    %v2793 = vunpack.c.h.b16 %v2414
    %v2794 = vunpack.c.l.b16 %v2415
    %v2795 = vunpack.c.h.b16 %v2415
    %v2796 = vunpack.c.l.b16 %v2416
    %v2797 = vunpack.c.h.b16 %v2416
    %v2798 = vunpack.c.l.b16 %v2417
    %v2799 = vunpack.c.h.b16 %v2417
    %v2800 = vunpack.c.l.b16 %v2418
    %v2801 = vunpack.c.h.b16 %v2418
    %v2802 = vunpack.c.l.b16 %v2419
    %v2803 = vunpack.c.h.b16 %v2419
    %v2804 = vunpack.c.l.b16 %v2420
    %v2805 = vunpack.c.h.b16 %v2420
    %v2806 = vunpack.c.l.b16 %v2421
    %v2807 = vunpack.c.h.b16 %v2421
    %v2808 = vunpack.c.l.b16 %v2422
    %v2809 = vunpack.c.h.b16 %v2422
    %v2810 = vunpack.c.l.b16 %v2423
    %v2811 = vunpack.c.h.b16 %v2423
    %v2812 = vunpack.c.l.b16 %v2424
    %v2813 = vunpack.c.h.b16 %v2424
    %v2814 = vunpack.c.l.b16 %v2425
    %v2815 = vunpack.c.h.b16 %v2425
    %v2816 = vunpack.c.l.b16 %v2426
    %v2817 = vunpack.c.h.b16 %v2426
    %v2818 = vunpack.c.l.b16 %v2427
    %v2819 = vunpack.c.h.b16 %v2427
    %v2820 = vunpack.c.l.b16 %v2428
    %v2821 = vunpack.c.h.b16 %v2428
    %v2822 = vunpack.c.l.b16 %v2429
    %v2823 = vunpack.c.h.b16 %v2429
    %v2824 = vunpack.c.l.b16 %v2430
    %v2825 = vunpack.c.h.b16 %v2430
    %v2826 = vunpack.c.l.b16 %v2431
    %v2827 = vunpack.c.h.b16 %v2431
    %v2828 = vpack.c.b16 %v2574, %v2572
    %v2829 = vpack.c.b16 %v2575, %v2573
    %v2830 = vpack.c.b16 %v2578, %v2576
    %v2831 = vpack.c.b16 %v2579, %v2577
    %v2832 = vpack.c.b16 %v2582, %v2580
    %v2833 = vpack.c.b16 %v2583, %v2581
    %v2834 = vpack.c.b16 %v2586, %v2584
    %v2835 = vpack.c.b16 %v2587, %v2585
    %v2836 = vpack.c.b16 %v2590, %v2588
    %v2837 = vpack.c.b16 %v2591, %v2589
    %v2838 = vpack.c.b16 %v2594, %v2592
    %v2839 = vpack.c.b16 %v2595, %v2593
    %v2840 = vpack.c.b16 %v2598, %v2596
    %v2841 = vpack.c.b16 %v2599, %v2597
    %v2842 = vpack.c.b16 %v2602, %v2600
    %v2843 = vpack.c.b16 %v2603, %v2601
    %v2844 = vpack.c.b16 %v2606, %v2604
    %v2845 = vpack.c.b16 %v2607, %v2605
    %v2846 = vpack.c.b16 %v2610, %v2608
    %v2847 = vpack.c.b16 %v2611, %v2609
    %v2848 = vpack.c.b16 %v2614, %v2612
    %v2849 = vpack.c.b16 %v2615, %v2613
    %v2850 = vpack.c.b16 %v2618, %v2616
    %v2851 = vpack.c.b16 %v2619, %v2617
    %v2852 = vpack.c.b16 %v2622, %v2620
    %v2853 = vpack.c.b16 %v2623, %v2621
    %v2854 = vpack.c.b16 %v2626, %v2624
    %v2855 = vpack.c.b16 %v2627, %v2625
    %v2856 = vpack.c.b16 %v2630, %v2628
    %v2857 = vpack.c.b16 %v2631, %v2629
    %v2858 = vpack.c.b16 %v2634, %v2632
    %v2859 = vpack.c.b16 %v2635, %v2633
    %v2860 = vpack.c.b16 %v2638, %v2636
    %v2861 = vpack.c.b16 %v2639, %v2637
    %v2862 = vpack.c.b16 %v2642, %v2640
    %v2863 = vpack.c.b16 %v2643, %v2641
    %v2864 = vpack.c.b16 %v2646, %v2644
    %v2865 = vpack.c.b16 %v2647, %v2645
    %v2866 = vpack.c.b16 %v2650, %v2648
    %v2867 = vpack.c.b16 %v2651, %v2649
    %v2868 = vpack.c.b16 %v2654, %v2652
    %v2869 = vpack.c.b16 %v2655, %v2653
    %v2870 = vpack.c.b16 %v2658, %v2656
    %v2871 = vpack.c.b16 %v2659, %v2657
    %v2872 = vpack.c.b16 %v2662, %v2660
    %v2873 = vpack.c.b16 %v2663, %v2661
    %v2874 = vpack.c.b16 %v2666, %v2664
    %v2875 = vpack.c.b16 %v2667, %v2665
    %v2876 = vpack.c.b16 %v2670, %v2668
    %v2877 = vpack.c.b16 %v2671, %v2669
    %v2878 = vpack.c.b16 %v2674, %v2672
    %v2879 = vpack.c.b16 %v2675, %v2673
    %v2880 = vpack.c.b16 %v2678, %v2676
    %v2881 = vpack.c.b16 %v2679, %v2677
    %v2882 = vpack.c.b16 %v2682, %v2680
    %v2883 = vpack.c.b16 %v2683, %v2681
    %v2884 = vpack.c.b16 %v2686, %v2684
    %v2885 = vpack.c.b16 %v2687, %v2685
    %v2886 = vpack.c.b16 %v2690, %v2688
    %v2887 = vpack.c.b16 %v2691, %v2689
    %v2888 = vpack.c.b16 %v2694, %v2692
    %v2889 = vpack.c.b16 %v2695, %v2693
    %v2890 = vpack.c.b16 %v2698, %v2696
    %v2891 = vpack.c.b16 %v2699, %v2697
    %v2892 = vpack.c.b16 %v2702, %v2700
    %v2893 = vpack.c.b16 %v2703, %v2701
    %v2894 = vpack.c.b16 %v2706, %v2704
    %v2895 = vpack.c.b16 %v2707, %v2705
    %v2896 = vpack.c.b16 %v2710, %v2708
    %v2897 = vpack.c.b16 %v2711, %v2709
    %v2898 = vpack.c.b16 %v2714, %v2712
    %v2899 = vpack.c.b16 %v2715, %v2713
    %v2900 = vpack.c.b16 %v2718, %v2716
    %v2901 = vpack.c.b16 %v2719, %v2717
    %v2902 = vpack.c.b16 %v2722, %v2720
    %v2903 = vpack.c.b16 %v2723, %v2721
    %v2904 = vpack.c.b16 %v2726, %v2724
    %v2905 = vpack.c.b16 %v2727, %v2725
    %v2906 = vpack.c.b16 %v2730, %v2728
    %v2907 = vpack.c.b16 %v2731, %v2729
    %v2908 = vpack.c.b16 %v2734, %v2732
    %v2909 = vpack.c.b16 %v2735, %v2733
    %v2910 = vpack.c.b16 %v2738, %v2736
    %v2911 = vpack.c.b16 %v2739, %v2737
    %v2912 = vpack.c.b16 %v2742, %v2740
    %v2913 = vpack.c.b16 %v2743, %v2741
    %v2914 = vpack.c.b16 %v2746, %v2744
    %v2915 = vpack.c.b16 %v2747, %v2745
    %v2916 = vpack.c.b16 %v2750, %v2748
    %v2917 = vpack.c.b16 %v2751, %v2749
    %v2918 = vpack.c.b16 %v2754, %v2752
    %v2919 = vpack.c.b16 %v2755, %v2753
    %v2920 = vpack.c.b16 %v2758, %v2756
    %v2921 = vpack.c.b16 %v2759, %v2757
    %v2922 = vpack.c.b16 %v2762, %v2760
    %v2923 = vpack.c.b16 %v2763, %v2761
    %v2924 = vpack.c.b16 %v2766, %v2764
    %v2925 = vpack.c.b16 %v2767, %v2765
    %v2926 = vpack.c.b16 %v2770, %v2768
    %v2927 = vpack.c.b16 %v2771, %v2769
    %v2928 = vpack.c.b16 %v2774, %v2772
    %v2929 = vpack.c.b16 %v2775, %v2773
    %v2930 = vpack.c.b16 %v2778, %v2776
    %v2931 = vpack.c.b16 %v2779, %v2777
    %v2932 = vpack.c.b16 %v2782, %v2780
    %v2933 = vpack.c.b16 %v2783, %v2781
    %v2934 = vpack.c.b16 %v2786, %v2784
    %v2935 = vpack.c.b16 %v2787, %v2785
    %v2936 = vpack.c.b16 %v2790, %v2788
    %v2937 = vpack.c.b16 %v2791, %v2789
    %v2938 = vpack.c.b16 %v2794, %v2792
    %v2939 = vpack.c.b16 %v2795, %v2793
    %v2940 = vpack.c.b16 %v2798, %v2796
    %v2941 = vpack.c.b16 %v2799, %v2797
    %v2942 = vpack.c.b16 %v2802, %v2800
    %v2943 = vpack.c.b16 %v2803, %v2801
    %v2944 = vpack.c.b16 %v2806, %v2804
    %v2945 = vpack.c.b16 %v2807, %v2805
    %v2946 = vpack.c.b16 %v2810, %v2808
    %v2947 = vpack.c.b16 %v2811, %v2809
    %v2948 = vpack.c.b16 %v2814, %v2812
    %v2949 = vpack.c.b16 %v2815, %v2813
    %v2950 = vpack.c.b16 %v2818, %v2816
    %v2951 = vpack.c.b16 %v2819, %v2817
    %v2952 = vpack.c.b16 %v2822, %v2820
    %v2953 = vpack.c.b16 %v2823, %v2821
    %v2954 = vpack.c.b16 %v2826, %v2824
    %v2955 = vpack.c.b16 %v2827, %v2825
    %3084 = vmatprep.subr.bf16.mxu0 %v2829
    %3085 = vmatpush1.bf16.msra.mxu0 %v2828
    %3086 = vmatprep.subr.bf16.mxu0 %v2831
    %3087 = vmatpush1.bf16.msra.mxu0 %v2830
    %3088 = vmatprep.subr.bf16.mxu0 %v2833
    %3089 = vmatpush1.bf16.msra.mxu0 %v2832
    %3090 = vmatprep.subr.bf16.mxu0 %v2835
    %3091 = vmatpush1.bf16.msra.mxu0 %v2834
    %3092 = vmatprep.subr.bf16.mxu0 %v2837
    %3093 = vmatpush1.bf16.msra.mxu0 %v2836
    %3094 = vmatprep.subr.bf16.mxu0 %v2839
    %3095 = vmatpush1.bf16.msra.mxu0 %v2838
    %3096 = vmatprep.subr.bf16.mxu0 %v2841
    %3097 = vmatpush1.bf16.msra.mxu0 %v2840
    %3098 = vmatprep.subr.bf16.mxu0 %v2843
    %3099 = vmatpush1.bf16.msra.mxu0 %v2842
    %3100 = vmatprep.subr.bf16.mxu0 %v2845
    %3101 = vmatpush1.bf16.msra.mxu0 %v2844
    %3102 = vmatprep.subr.bf16.mxu0 %v2847
    %3103 = vmatpush1.bf16.msra.mxu0 %v2846
    %3104 = vmatprep.subr.bf16.mxu0 %v2849
    %3105 = vmatpush1.bf16.msra.mxu0 %v2848
    %3106 = vmatprep.subr.bf16.mxu0 %v2851
    %3107 = vmatpush1.bf16.msra.mxu0 %v2850
    %3108 = vmatprep.subr.bf16.mxu0 %v2853
    %3109 = vmatpush1.bf16.msra.mxu0 %v2852
    %3110 = vmatprep.subr.bf16.mxu0 %v2855
    %3111 = vmatpush1.bf16.msra.mxu0 %v2854
    %3112 = vmatprep.subr.bf16.mxu0 %v2857
    %3113 = vmatpush1.bf16.msra.mxu0 %v2856
    %3114 = vmatprep.subr.bf16.mxu0 %v2859
    %3115 = vmatpush1.bf16.msra.mxu0 %v2858
    %3116 = vmatprep.mubr.bf16.mxu0 %v2297
    %3117 = vmatmul.mubr.bf16.gmra.mrb[0].mxu0 %v2296
    %v3118 = vpop.f32.mrb[0].mxu0
    %v3119 = vadd.f32 %v2437, %v3118
    %v3120 = vpop.f32.mrb[0].mxu0
    %v3121 = vadd.f32 %v2441, %v3120
    %v3122 = vpop.f32.mrb[0].mxu0
    %v3123 = vadd.f32 %v2437, %v3122
    %v3124 = vpop.f32.mrb[0].mxu0
    %v3125 = vadd.f32 %v2441, %v3124
    %3126 = vdwg.mxu0
    %3127 = vmatprep.subr.bf16.mxu0 %v2861
    %3128 = vmatpush1.bf16.msra.mxu0 %v2860
    %3129 = vmatprep.subr.bf16.mxu0 %v2863
    %3130 = vmatpush1.bf16.msra.mxu0 %v2862
    %3131 = vmatprep.subr.bf16.mxu0 %v2865
    %3132 = vmatpush1.bf16.msra.mxu0 %v2864
    %3133 = vmatprep.subr.bf16.mxu0 %v2867
    %3134 = vmatpush1.bf16.msra.mxu0 %v2866
    %3135 = vmatprep.subr.bf16.mxu0 %v2869
    %3136 = vmatpush1.bf16.msra.mxu0 %v2868
    %3137 = vmatprep.subr.bf16.mxu0 %v2871
    %3138 = vmatpush1.bf16.msra.mxu0 %v2870
    %3139 = vmatprep.subr.bf16.mxu0 %v2873
    %3140 = vmatpush1.bf16.msra.mxu0 %v2872
    %3141 = vmatprep.subr.bf16.mxu0 %v2875
    %3142 = vmatpush1.bf16.msra.mxu0 %v2874
    %3143 = vmatprep.subr.bf16.mxu0 %v2877
    %3144 = vmatpush1.bf16.msra.mxu0 %v2876
    %3145 = vmatprep.subr.bf16.mxu0 %v2879
    %3146 = vmatpush1.bf16.msra.mxu0 %v2878
    %3147 = vmatprep.subr.bf16.mxu0 %v2881
    %3148 = vmatpush1.bf16.msra.mxu0 %v2880
    %3149 = vmatprep.subr.bf16.mxu0 %v2883
    %3150 = vmatpush1.bf16.msra.mxu0 %v2882
    %3151 = vmatprep.subr.bf16.mxu0 %v2885
    %3152 = vmatpush1.bf16.msra.mxu0 %v2884
    %3153 = vmatprep.subr.bf16.mxu0 %v2887
    %3154 = vmatpush1.bf16.msra.mxu0 %v2886
    %3155 = vmatprep.subr.bf16.mxu0 %v2889
    %3156 = vmatpush1.bf16.msra.mxu0 %v2888
    %3157 = vmatprep.subr.bf16.mxu0 %v2891
    %3158 = vmatpush1.bf16.msra.mxu0 %v2890
    %3159 = vmatprep.mubr.bf16.mxu0 %v2299
    %3160 = vmatmul.mubr.bf16.gmra.mrb[0].mxu0 %v2298
    %v3161 = vpop.f32.mrb[0].mxu0
    %v3162 = vadd.f32 %v3119, %v3161
    %v3163 = vpop.f32.mrb[0].mxu0
    %v3164 = vadd.f32 %v3121, %v3163
    %v3165 = vpop.f32.mrb[0].mxu0
    %v3166 = vadd.f32 %v3123, %v3165
    %v3167 = vpop.f32.mrb[0].mxu0
    %v3168 = vadd.f32 %v3125, %v3167
    %3169 = vdwg.mxu0
    %3170 = vmatprep.subr.bf16.mxu0 %v2893
    %3171 = vmatpush1.bf16.msra.mxu0 %v2892
    %3172 = vmatprep.subr.bf16.mxu0 %v2895
    %3173 = vmatpush1.bf16.msra.mxu0 %v2894
    %3174 = vmatprep.subr.bf16.mxu0 %v2897
    %3175 = vmatpush1.bf16.msra.mxu0 %v2896
    %3176 = vmatprep.subr.bf16.mxu0 %v2899
    %3177 = vmatpush1.bf16.msra.mxu0 %v2898
    %3178 = vmatprep.subr.bf16.mxu0 %v2901
    %3179 = vmatpush1.bf16.msra.mxu0 %v2900
    %3180 = vmatprep.subr.bf16.mxu0 %v2903
    %3181 = vmatpush1.bf16.msra.mxu0 %v2902
    %3182 = vmatprep.subr.bf16.mxu0 %v2905
    %3183 = vmatpush1.bf16.msra.mxu0 %v2904
    %3184 = vmatprep.subr.bf16.mxu0 %v2907
    %3185 = vmatpush1.bf16.msra.mxu0 %v2906
    %3186 = vmatprep.subr.bf16.mxu0 %v2909
    %3187 = vmatpush1.bf16.msra.mxu0 %v2908
    %3188 = vmatprep.subr.bf16.mxu0 %v2911
    %3189 = vmatpush1.bf16.msra.mxu0 %v2910
    %3190 = vmatprep.subr.bf16.mxu0 %v2913
    %3191 = vmatpush1.bf16.msra.mxu0 %v2912
    %3192 = vmatprep.subr.bf16.mxu0 %v2915
    %3193 = vmatpush1.bf16.msra.mxu0 %v2914
    %3194 = vmatprep.subr.bf16.mxu0 %v2917
    %3195 = vmatpush1.bf16.msra.mxu0 %v2916
    %3196 = vmatprep.subr.bf16.mxu0 %v2919
    %3197 = vmatpush1.bf16.msra.mxu0 %v2918
    %3198 = vmatprep.subr.bf16.mxu0 %v2921
    %3199 = vmatpush1.bf16.msra.mxu0 %v2920
    %3200 = vmatprep.subr.bf16.mxu0 %v2923
    %3201 = vmatpush1.bf16.msra.mxu0 %v2922
    %3202 = vmatprep.mubr.bf16.mxu0 %v2301
    %3203 = vmatmul.mubr.bf16.gmra.mrb[0].mxu0 %v2300
    %v3204 = vpop.f32.mrb[0].mxu0
    %v3205 = vadd.f32 %v3162, %v3204
    %v3206 = vpop.f32.mrb[0].mxu0
    %v3207 = vadd.f32 %v3164, %v3206
    %v3208 = vpop.f32.mrb[0].mxu0
    %v3209 = vadd.f32 %v3166, %v3208
    %v3210 = vpop.f32.mrb[0].mxu0
    %v3211 = vadd.f32 %v3168, %v3210
    %3212 = vdwg.mxu0
    %3213 = vmatprep.subr.bf16.mxu0 %v2925
    %3214 = vmatpush1.bf16.msra.mxu0 %v2924
    %3215 = vmatprep.subr.bf16.mxu0 %v2927
    %3216 = vmatpush1.bf16.msra.mxu0 %v2926
    %3217 = vmatprep.subr.bf16.mxu0 %v2929
    %3218 = vmatpush1.bf16.msra.mxu0 %v2928
    %3219 = vmatprep.subr.bf16.mxu0 %v2931
    %3220 = vmatpush1.bf16.msra.mxu0 %v2930
    %3221 = vmatprep.subr.bf16.mxu0 %v2933
    %3222 = vmatpush1.bf16.msra.mxu0 %v2932
    %3223 = vmatprep.subr.bf16.mxu0 %v2935
    %3224 = vmatpush1.bf16.msra.mxu0 %v2934
    %3225 = vmatprep.subr.bf16.mxu0 %v2937
    %3226 = vmatpush1.bf16.msra.mxu0 %v2936
    %3227 = vmatprep.subr.bf16.mxu0 %v2939
    %3228 = vmatpush1.bf16.msra.mxu0 %v2938
    %3229 = vmatprep.subr.bf16.mxu0 %v2941
    %3230 = vmatpush1.bf16.msra.mxu0 %v2940
    %3231 = vmatprep.subr.bf16.mxu0 %v2943
    %3232 = vmatpush1.bf16.msra.mxu0 %v2942
    %3233 = vmatprep.subr.bf16.mxu0 %v2945
    %3234 = vmatpush1.bf16.msra.mxu0 %v2944
    %3235 = vmatprep.subr.bf16.mxu0 %v2947
    %3236 = vmatpush1.bf16.msra.mxu0 %v2946
    %3237 = vmatprep.subr.bf16.mxu0 %v2949
    %3238 = vmatpush1.bf16.msra.mxu0 %v2948
    %3239 = vmatprep.subr.bf16.mxu0 %v2951
    %3240 = vmatpush1.bf16.msra.mxu0 %v2950
    %3241 = vmatprep.subr.bf16.mxu0 %v2953
    %3242 = vmatpush1.bf16.msra.mxu0 %v2952
    %3243 = vmatprep.subr.bf16.mxu0 %v2955
    %3244 = vmatpush1.bf16.msra.mxu0 %v2954
    %3245 = vmatprep.mubr.bf16.mxu0 %v2303
    %3246 = vmatmul.mubr.bf16.gmra.mrb[0].mxu0 %v2302
    %v3247 = vpop.f32.mrb[0].mxu0
    %v3248 = vadd.f32 %v3205, %v3247
    %v3249 = vpop.f32.mrb[0].mxu0
    %v3250 = vadd.f32 %v3207, %v3249
    %v3251 = vpop.f32.mrb[0].mxu0
    %v3252 = vadd.f32 %v3209, %v3251
    %v3253 = vpop.f32.mrb[0].mxu0
    %v3254 = vadd.f32 %v3211, %v3253
    %3255 = vdwg.mxu0
    %v3256 = vadd.f32 %v1292, %v3248
    %v3257 = vadd.f32 %v1293, %v3250
    %v3258 = vadd.f32 %v1294, %v3252
    %v3259 = vadd.f32 %v1295, %v3254
    %v3260 = vld [vmem:[#allocation16] sm:$0x3]
    %v3261 = vld [vmem:[#allocation17] sm:$0x3]
    %v3262 = vadd.f32 %v3256, %v3257
    %3263 = vadd.xlane.f32.xlu0 %v3262
    %v3264 = vpop.xlane.xlu0 %3263
    %v3265 = vadd.f32 %v3258, %v3259
    %3266 = vadd.xlane.f32.xlu0 %v3265
    %v3267 = vpop.xlane.xlu0 %3266
    %v3268 = vmul.f32 %v3264, %v1239
    %v3269 = vmul.f32 %v3267, %v1239
    %v3270 = vsub.f32 %v3256, %v3268
    %v3271 = vsub.f32 %v3257, %v3268
    %v3272 = vsub.f32 %v3258, %v3269
    %v3273 = vsub.f32 %v3259, %v3269
    %v3274 = vmul.f32 %v3270, %v3270
    %v3275 = vmul.f32 %v3271, %v3271
    %v3276 = vmul.f32 %v3272, %v3272
    %v3277 = vmul.f32 %v3273, %v3273
    %v3278 = vadd.f32 %v3274, %v3275
    %3279 = vadd.xlane.f32.xlu0 %v3278
    %v3280 = vpop.xlane.xlu0 %3279
    %v3281 = vadd.f32 %v3276, %v3277
    %3282 = vadd.xlane.f32.xlu0 %v3281
    %v3283 = vpop.xlane.xlu0 %3282
    %v3284 = vmul.f32 %v3280, %v1239
    %v3285 = vmul.f32 %v3283, %v1239
    %v3286 = vadd.f32 %v3284, 1e-05
    %v3287 = vadd.f32 %v3285, 1e-05
    %v3288 = vrsqrt.pop %v3286
    %v3289 = vrsqrt.pop %v3287
    %v3290 = vmul.f32 %v3270, %v3288
    %v3291 = vmul.f32 %v3271, %v3288
    %v3292 = vmul.f32 %v3272, %v3289
    %v3293 = vmul.f32 %v3273, %v3289
    %v3295 = vlaneseq
    %v3296 = vshrl.u32 %v3295, 7
    %v3297 = vsub.s32 0, %v3296
    %v3298 = vrot.slane %v3260, %v3297
    %v3299 = vlaneseq
    %v3300 = vshrl.u32 %v3299, 7
    %v3301 = vsub.s32 1, %v3300
    %v3302 = vrot.slane %v3260, %v3301
    %v3305 = vmul.f32 %v3290, %v3298
    %v3306 = vmul.f32 %v3291, %v3302
    %v3307 = vmul.f32 %v3292, %v3298
    %v3308 = vmul.f32 %v3293, %v3302
    %v3310 = vlaneseq
    %v3311 = vshrl.u32 %v3310, 7
    %v3312 = vsub.s32 0, %v3311
    %v3313 = vrot.slane %v3261, %v3312
    %v3314 = vlaneseq
    %v3315 = vshrl.u32 %v3314, 7
    %v3316 = vsub.s32 1, %v3315
    %v3317 = vrot.slane %v3261, %v3316
    %v3320 = vadd.f32 %v3305, %v3313
    %v3321 = vadd.f32 %v3306, %v3317
    %v3322 = vadd.f32 %v3307, %v3313
    %v3323 = vadd.f32 %v3308, %v3317
    %v3324 = vpack.c.bf16 %v3322, %v3320
    %v3325 = vpack.c.bf16 %v3323, %v3321
    %v3326 = vld [vmem:[%s19] sm:$0xf]
    %v3327 = vld [vmem:[%s19 + $0x4] sm:$0xf]
    %v3328 = vld [vmem:[%s19 + $0x8] sm:$0xf]
    %v3329 = vld [vmem:[%s19 + $0xc] sm:$0xf]
    %v3330 = vld [vmem:[%s19 + $0x10] sm:$0xf]
    %v3331 = vld [vmem:[%s19 + $0x14] sm:$0xf]
    %v3332 = vld [vmem:[%s19 + $0x18] sm:$0xf]
    %v3333 = vld [vmem:[%s19 + $0x1c] sm:$0xf]
    %v3334 = vld [vmem:[%s19 + $0x20] sm:$0xf]
    %v3335 = vld [vmem:[%s19 + $0x24] sm:$0xf]
    %v3336 = vld [vmem:[%s19 + $0x28] sm:$0xf]
    %v3337 = vld [vmem:[%s19 + $0x2c] sm:$0xf]
    %v3338 = vld [vmem:[%s19 + $0x30] sm:$0xf]
    %v3339 = vld [vmem:[%s19 + $0x34] sm:$0xf]
    %v3340 = vld [vmem:[%s19 + $0x38] sm:$0xf]
    %v3341 = vld [vmem:[%s19 + $0x3c] sm:$0xf]
    %v3342 = vld [vmem:[%s19 + $0x40] sm:$0xf]
    %v3343 = vld [vmem:[%s19 + $0x44] sm:$0xf]
    %v3344 = vld [vmem:[%s19 + $0x48] sm:$0xf]
    %v3345 = vld [vmem:[%s19 + $0x4c] sm:$0xf]
    %v3346 = vld [vmem:[%s19 + $0x50] sm:$0xf]
    %v3347 = vld [vmem:[%s19 + $0x54] sm:$0xf]
    %v3348 = vld [vmem:[%s19 + $0x58] sm:$0xf]
    %v3349 = vld [vmem:[%s19 + $0x5c] sm:$0xf]
    %v3350 = vld [vmem:[%s19 + $0x60] sm:$0xf]
    %v3351 = vld [vmem:[%s19 + $0x64] sm:$0xf]
    %v3352 = vld [vmem:[%s19 + $0x68] sm:$0xf]
    %v3353 = vld [vmem:[%s19 + $0x6c] sm:$0xf]
    %v3354 = vld [vmem:[%s19 + $0x70] sm:$0xf]
    %v3355 = vld [vmem:[%s19 + $0x74] sm:$0xf]
    %v3356 = vld [vmem:[%s19 + $0x78] sm:$0xf]
    %v3357 = vld [vmem:[%s19 + $0x7c] sm:$0xf]
    %v3358 = vld [vmem:[%s20] sm:$0x1]
    %v3360 = vlaneseq
    %v3361 = vshrl.u32 %v3360, 7
    %v3362 = vsub.s32 0, %v3361
    %v3363 = vrot.slane %v3358, %v3362
    %v3397 = vunpack.c.l.b16 %v3326
    %v3398 = vunpack.c.l.b16 %v3327
    %v3399 = vunpack.c.l.b16 %v3328
    %v3400 = vunpack.c.l.b16 %v3329
    %v3401 = vunpack.c.l.b16 %v3330
    %v3402 = vunpack.c.l.b16 %v3331
    %v3403 = vunpack.c.l.b16 %v3332
    %v3404 = vunpack.c.l.b16 %v3333
    %v3405 = vunpack.c.l.b16 %v3334
    %v3406 = vunpack.c.l.b16 %v3335
    %v3407 = vunpack.c.l.b16 %v3336
    %v3408 = vunpack.c.l.b16 %v3337
    %v3409 = vunpack.c.l.b16 %v3338
    %v3410 = vunpack.c.l.b16 %v3339
    %v3411 = vunpack.c.l.b16 %v3340
    %v3412 = vunpack.c.l.b16 %v3341
    %v3413 = vunpack.c.l.b16 %v3342
    %v3414 = vunpack.c.l.b16 %v3343
    %v3415 = vunpack.c.l.b16 %v3344
    %v3416 = vunpack.c.l.b16 %v3345
    %v3417 = vunpack.c.l.b16 %v3346
    %v3418 = vunpack.c.l.b16 %v3347
    %v3419 = vunpack.c.l.b16 %v3348
    %v3420 = vunpack.c.l.b16 %v3349
    %v3421 = vunpack.c.l.b16 %v3350
    %v3422 = vunpack.c.l.b16 %v3351
    %v3423 = vunpack.c.l.b16 %v3352
    %v3424 = vunpack.c.l.b16 %v3353
    %v3425 = vunpack.c.l.b16 %v3354
    %v3426 = vunpack.c.l.b16 %v3355
    %v3427 = vunpack.c.l.b16 %v3356
    %v3428 = vunpack.c.l.b16 %v3357
    %v3429 = vpack.c.b16 %v3398, %v3397
    %v3430 = vpack.c.b16 %v3400, %v3399
    %v3431 = vpack.c.b16 %v3402, %v3401
    %v3432 = vpack.c.b16 %v3404, %v3403
    %v3433 = vpack.c.b16 %v3406, %v3405
    %v3434 = vpack.c.b16 %v3408, %v3407
    %v3435 = vpack.c.b16 %v3410, %v3409
    %v3436 = vpack.c.b16 %v3412, %v3411
    %v3437 = vpack.c.b16 %v3414, %v3413
    %v3438 = vpack.c.b16 %v3416, %v3415
    %v3439 = vpack.c.b16 %v3418, %v3417
    %v3440 = vpack.c.b16 %v3420, %v3419
    %v3441 = vpack.c.b16 %v3422, %v3421
    %v3442 = vpack.c.b16 %v3424, %v3423
    %v3443 = vpack.c.b16 %v3426, %v3425
    %v3444 = vpack.c.b16 %v3428, %v3427
    %3461 = vmatprep.subr.bf16.mxu0 0
    %3462 = vmatpush1.bf16.msra.mxu0 %v3429
    %3463 = vmatprep.subr.bf16.mxu0 0
    %3464 = vmatpush1.bf16.msra.mxu0 %v3430
    %3465 = vmatprep.subr.bf16.mxu0 0
    %3466 = vmatpush1.bf16.msra.mxu0 %v3431
    %3467 = vmatprep.subr.bf16.mxu0 0
    %3468 = vmatpush1.bf16.msra.mxu0 %v3432
    %3469 = vmatprep.subr.bf16.mxu0 0
    %3470 = vmatpush1.bf16.msra.mxu0 %v3433
    %3471 = vmatprep.subr.bf16.mxu0 0
    %3472 = vmatpush1.bf16.msra.mxu0 %v3434
    %3473 = vmatprep.subr.bf16.mxu0 0
    %3474 = vmatpush1.bf16.msra.mxu0 %v3435
    %3475 = vmatprep.subr.bf16.mxu0 0
    %3476 = vmatpush1.bf16.msra.mxu0 %v3436
    %3477 = vmatprep.subr.bf16.mxu0 0
    %3478 = vmatpush1.bf16.msra.mxu0 %v3437
    %3479 = vmatprep.subr.bf16.mxu0 0
    %3480 = vmatpush1.bf16.msra.mxu0 %v3438
    %3481 = vmatprep.subr.bf16.mxu0 0
    %3482 = vmatpush1.bf16.msra.mxu0 %v3439
    %3483 = vmatprep.subr.bf16.mxu0 0
    %3484 = vmatpush1.bf16.msra.mxu0 %v3440
    %3485 = vmatprep.subr.bf16.mxu0 0
    %3486 = vmatpush1.bf16.msra.mxu0 %v3441
    %3487 = vmatprep.subr.bf16.mxu0 0
    %3488 = vmatpush1.bf16.msra.mxu0 %v3442
    %3489 = vmatprep.subr.bf16.mxu0 0
    %3490 = vmatpush1.bf16.msra.mxu0 %v3443
    %3491 = vmatprep.subr.bf16.mxu0 0
    %3492 = vmatpush1.bf16.msra.mxu0 %v3444
    %3493 = vmatprep.mubr.bf16.mxu0 %v3325
    %3494 = vmatmul.mubr.bf16.gmra.mrb[0].mxu0 %v3324
    %v3495 = vpop.f32.mrb[0].mxu0
    %v3496 = vadd.f32 %v3363, %v3495
    %v3497 = vpop.f32.mrb[0].mxu0
    %v3498 = vpop.f32.mrb[0].mxu0
    %v3499 = vadd.f32 %v3363, %v3498
    %v3500 = vpop.f32.mrb[0].mxu0
    %3501 = vdwg.mxu0
    %3502 = vst [vmem:[#allocation19] sm:$0xff] %v3496
    %3503 = vst [vmem:[#allocation19 + $0x8] sm:$0xff] %v3499
    // Predicated region
    $region126: #{tpu_custom_call.1} parent=1 // pred_check
      _
    $region127: #{tpu_custom_call.1} parent=1 // pred_check_branch
      %3505 = sbr.rel (0) target = $region129
    $region128: #{tpu_custom_call.1} parent=1 // pred_region
      %s3507 = ssub.s32 256, 256
      %3508 = vsyncadd [#allocation4], %s3507
      %s3509 = sshll.u32 [#allocation19], 4
      %s3510 = int_to_ptr.vmem [resolvable:$true] %s3509
      %3515 = dma.vmem_to_hbm [thread:$0]  %s3510, 256, %s21, [#allocation4], 128, 128, 8
    $region129: #{tpu_custom_call.1} parent=1 // pred_fallthru
      _
    // Predicated region
    $region130: #{tpu_custom_call.1} parent=1 // pred_check
      _
    $region131: #{tpu_custom_call.1} parent=1 // pred_check_branch
      %3517 = sbr.rel (0) target = $region133
    $region132: #{tpu_custom_call.1} parent=1 // pred_region
      %3518 = dma.done [#allocation4], 256
    $region133: #{tpu_custom_call.1} parent=1 // pred_fallthru
      _
    %3519 = vsyncpa [#allocation3], 1
    %3520 = vsyncpa [#allocation6], 1
    %3521 = vsyncpa [#allocation9], 1
    %3522 = vsyncpa [#allocation12], 1
    %3523 = vsyncpa [#allocation15], 1
    %3524 = vsyncpa [#allocation18], 1
    %3525 = vsyncpa [#allocation4], 1

</llo_original>
